<compile_context>
chip_gen: v7x
topology: tpu7x:2x2x1
jax: 0.10.0
libtpu: 0.0.40
codegen_flags: <defaults>
</compile_context>

<pallas_src>
import jax
import jax.numpy as jnp
from jax.experimental import pallas as pl
from jax.experimental.pallas import tpu as pltpu


def _round_up(x, m):
    return ((x + m - 1) // m) * m


def bottleneck_kernel(x_ref, w1_ref, s1_ref, b1_ref,
                      w2_ref, s2_ref, b2_ref,
                      w3_ref, s3_ref, b3_ref,
                      o_ref, pad_ref):
    # x_ref  : (Bt, H, W, Cin)    bfloat16
    # w1_ref : (Cin, Pp)          bfloat16   (Pp = planes padded to mult. of 128)
    # w2_ref : (9*Pp, Pp)         bfloat16   (im2col-folded 3x3 kernel, HWIO order)
    # w3_ref : (Pp, Cout)         bfloat16
    # s*/b*  : (1, C)             float32    (folded BN scale / bias, zero-padded)
    # o_ref  : (Bt, H, W, Cout)   bfloat16
    # pad_ref: (Bt, H+2, Wp, Pp)  bfloat16   zero-halo scratch for the 3x3 conv
    Bt, H, W, Cin = x_ref.shape
    Pp = w1_ref.shape[1]
    Cout = w3_ref.shape[1]
    Wp = pad_ref.shape[2]
    M = Bt * H * W

    x_bf = x_ref[...].reshape(M, Cin)            # bf16: MXU input + residual source

    # ---- conv1 (1x1) + bn1 + relu : bf16 MXU inputs, f32 accumulate ----
    h1 = jnp.dot(x_bf, w1_ref[...], preferred_element_type=jnp.float32)
    h1 = jnp.maximum(h1 * s1_ref[...] + b1_ref[...], 0.0)        # (M, Pp) f32

    # ---- conv2 (3x3, stride 1, pad 1) + bn2 + relu : single im2col matmul ----
    # The interior is fully overwritten each step; the 1-wide halo rows/cols and
    # the alignment-padding columns (W+2 .. Wp-1) are re-zeroed, so every lane/
    # sublane the taps may touch is well defined.
    pad_ref[:, 0:1, :, :] = jnp.zeros((Bt, 1, Wp, Pp), pad_ref.dtype)
    pad_ref[:, H + 1:H + 2, :, :] = jnp.zeros((Bt, 1, Wp, Pp), pad_ref.dtype)
    pad_ref[:, :, 0:1, :] = jnp.zeros((Bt, H + 2, 1, Pp), pad_ref.dtype)
    pad_ref[:, :, W + 1:Wp, :] = jnp.zeros((Bt, H + 2, Wp - W - 1, Pp),
                                           pad_ref.dtype)
    pad_ref[:, 1:H + 1, 1:W + 1, :] = h1.astype(jnp.bfloat16).reshape(Bt, H, W, Pp)

    taps = []
    for dy in range(3):
        for dx in range(3):
            taps.append(pad_ref[:, dy:dy + H, dx:dx + W, :].reshape(M, Pp))
    patches = jnp.concatenate(taps, axis=-1)                     # (M, 9*Pp) bf16
    h2 = jnp.dot(patches, w2_ref[...], preferred_element_type=jnp.float32)
    h2 = jnp.maximum(h2 * s2_ref[...] + b2_ref[...], 0.0)        # (M, Pp) f32

    # ---- conv3 (1x1) + bn3 ----
    h3 = jnp.dot(h2.astype(jnp.bfloat16), w3_ref[...],
                 preferred_element_type=jnp.float32)
    h3 = h3 * s3_ref[...] + b3_ref[...]                          # (M, Cout) f32

    # ---- residual add (identity upcast to f32) + relu ----
    out = jnp.maximum(h3 + x_bf.astype(jnp.float32), 0.0)
    o_ref[...] = out.reshape(Bt, H, W, Cout).astype(o_ref.dtype)


def _estimate_vmem_bytes(bt, H, W, Cin, Pp, Cout, Wp):
    """Rough per-step VMEM footprint (bytes), intentionally conservative."""
    m = bt * H * W
    return (
        2 * bt * H * W * Cin * 2                       # double-buffered bf16 input blocks
        + 2 * bt * H * W * Cout * 2                    # double-buffered bf16 output blocks
        + bt * (H + 2) * Wp * Pp * 2                   # bf16 pad scratch
        + 2 * (Cin * Pp + 9 * Pp * Pp + Pp * Cout) * 2  # bf16 weights (double-buffered)
        + m * (4 * Cin + 30 * Pp + 10 * Cout)          # rough live temporaries
    )


def _pick_block_batch(N, H, W, Cin, Pp, Cout, budget_bytes, min_grid_steps=4):
    """Largest divisor of N that fits the VMEM budget while keeping the grid
    at >= min_grid_steps steps (>= 2 as a fallback) so DMA pipelining and
    megacore sharding stay effective."""
    Wp = _round_up(W + 2, 8)
    divisors = [d for d in range(1, N + 1) if N % d == 0]
    fits = [d for d in divisors
            if _estimate_vmem_bytes(d, H, W, Cin, Pp, Cout, Wp) <= budget_bytes]
    if not fits:
        return 1
    for steps in (max(min_grid_steps, 1), 2, 1):
        cand = [d for d in fits if N // d >= steps]
        if cand:
            return max(cand)
    return min(fits)


def _vmem_defaults():
    """Generation-aware VMEM budget / limit."""
    cap = None
    try:
        info = pltpu.get_tpu_info()
        cap = getattr(info, "vmem_capacity_bytes", None)
    except Exception:
        cap = None
    if not cap:
        cap = 64 * 1024 * 1024          # conservative (v7x per-core VMEM)
    limit = min(int(cap * 0.75), 100 * 1024 * 1024)
    budget = int(limit * 0.70)
    return budget, limit


def bottleneck_forward(x_nchw, w1_oihw, w2_oihw, w3_oihw, bn1, bn2, bn3,
                       *, block_batch=None,
                       vmem_budget_bytes=None,
                       vmem_limit_bytes=None,
                       min_grid_steps=4):
    """Bottleneck forward. Weights in PyTorch OIHW, BN params (gamma, beta, mean, var).

    Returns NCHW bfloat16 (BN / residual math is done in f32 inside the kernel)."""
    eps = 1e-5

    N, Cin, H, W = x_nchw.shape
    P = w1_oihw.shape[0]                      # planes
    Cout = w3_oihw.shape[0]                   # planes * expansion
    assert Cin == Cout, "residual add requires inplanes == planes * expansion"
    Pp = _round_up(P, 128)                    # lane-dense intermediate width

    def fold(bn, width):
        g, b, m, v = bn
        s = (g / jnp.sqrt(v + eps)).astype(jnp.float32)
        t = (b - m * s).astype(jnp.float32)
        if width > s.shape[0]:
            s = jnp.pad(s, (0, width - s.shape[0]))
            t = jnp.pad(t, (0, width - t.shape[0]))
        return s[None, :], t[None, :]

    s1, b1 = fold(bn1, Pp)
    s2, b2 = fold(bn2, Pp)
    s3, b3 = fold(bn3, Cout)

    # OIHW -> matmul-friendly layouts; weights cast to bf16, planes dim padded
    # to Pp (padded channels produce exact zeros through bn+relu, so results
    # are unchanged).
    w1 = jnp.transpose(w1_oihw[:, :, 0, 0], (1, 0))                       # (Cin, P)
    w1 = jnp.pad(w1, ((0, 0), (0, Pp - P))).astype(jnp.bfloat16)          # (Cin, Pp)
    # (O, I, kh, kw) -> (kh, kw, I, O) -> (9*Pp, Pp); row order (dy, dx, cin)
    # matches the tap concatenation order in the kernel.
    w2 = jnp.transpose(w2_oihw, (2, 3, 1, 0))                             # (3,3,P,P)
    w2 = jnp.pad(w2, ((0, 0), (0, 0), (0, Pp - P), (0, Pp - P)))
    w2 = w2.reshape(9 * Pp, Pp).astype(jnp.bfloat16)
    w3 = jnp.transpose(w3_oihw[:, :, 0, 0], (1, 0))                       # (P, Cout)
    w3 = jnp.pad(w3, ((0, Pp - P), (0, 0))).astype(jnp.bfloat16)          # (Pp, Cout)

    if vmem_budget_bytes is None or vmem_limit_bytes is None:
        auto_budget, auto_limit = _vmem_defaults()
        vmem_budget_bytes = vmem_budget_bytes or auto_budget
        vmem_limit_bytes = vmem_limit_bytes or auto_limit

    if block_batch is None:
        Bt = _pick_block_batch(N, H, W, Cin, Pp, Cout, vmem_budget_bytes,
                               min_grid_steps=min_grid_steps)
    else:
        Bt = max(d for d in range(1, min(block_batch, N) + 1) if N % d == 0)
    Wp = _round_up(W + 2, 8)

    # NCHW f32 -> NHWC bf16 (the cast fuses into the transpose's write pass).
    x = jnp.transpose(x_nchw, (0, 2, 3, 1)).astype(jnp.bfloat16)

    flops = 2 * N * H * W * (Cin * Pp + 9 * Pp * Pp + Pp * Cout)
    bytes_accessed = (N * H * W * (Cin + Cout) * 2
                      + (Cin * Pp + 9 * Pp * Pp + Pp * Cout) * 2
                      + (4 * Pp + 2 * Cout) * 4)

    out = pl.pallas_call(
        bottleneck_kernel,
        out_shape=jax.ShapeDtypeStruct((N, H, W, Cout), jnp.bfloat16),
        grid_spec=pltpu.PrefetchScalarGridSpec(
            num_scalar_prefetch=0,
            grid=(N // Bt,),
            in_specs=[
                pl.BlockSpec((Bt, H, W, Cin), lambda n: (n, 0, 0, 0)),
                pl.BlockSpec((Cin, Pp), lambda n: (0, 0)),
                pl.BlockSpec((1, Pp), lambda n: (0, 0)),
                pl.BlockSpec((1, Pp), lambda n: (0, 0)),
                pl.BlockSpec((9 * Pp, Pp), lambda n: (0, 0)),
                pl.BlockSpec((1, Pp), lambda n: (0, 0)),
                pl.BlockSpec((1, Pp), lambda n: (0, 0)),
                pl.BlockSpec((Pp, Cout), lambda n: (0, 0)),
                pl.BlockSpec((1, Cout), lambda n: (0, 0)),
                pl.BlockSpec((1, Cout), lambda n: (0, 0)),
            ],
            out_specs=pl.BlockSpec((Bt, H, W, Cout), lambda n: (n, 0, 0, 0)),
            scratch_shapes=[pltpu.VMEM((Bt, H + 2, Wp, Pp), jnp.bfloat16)],
        ),
        compiler_params=pltpu.CompilerParams(
            dimension_semantics=("parallel",),
            vmem_limit_bytes=vmem_limit_bytes,
        ),
        cost_estimate=pl.CostEstimate(
            flops=int(flops), transcendentals=0,
            bytes_accessed=int(bytes_accessed)),
    )(x, w1, s1, b1, w2, s2, b2, w3, s3, b3)

    return jnp.transpose(out, (0, 3, 1, 2))          # back to NCHW (bf16)


def reference_forward(x, w1, w2, w3, bn1, bn2, bn3):
    """Pure-JAX f32 reference matching PyTorch eval-mode semantics (NCHW)."""
    eps = 1e-5

    def bn(y, p):
        g, b, m, v = p
        g, b, m, v = (t[None, :, None, None] for t in (g, b, m, v))
        return (y - m) / jnp.sqrt(v + eps) * g + b

    def conv(y, w, pad):
        return jax.lax.conv_general_dilated(
            y, w, (1, 1), pad, dimension_numbers=('NCHW', 'OIHW', 'NCHW'))

    out = jax.nn.relu(bn(conv(x, w1, 'VALID'), bn1))
    out = jax.nn.relu(bn(conv(out, w2, ((1, 1), (1, 1))), bn2))
    out = bn(conv(out, w3, 'VALID'), bn3)
    return jax.nn.relu(out + x)


if __name__ == "__main__":
    key = jax.random.PRNGKey(0)
    N, planes, H, W = 8, 4, 8, 8
    inplanes = planes * 4          # downsample=None => inplanes == planes * expansion

    keys = jax.random.split(key, 8)
    x = jax.random.normal(keys[0], (N, inplanes, H, W), jnp.float32)
    w1 = jax.random.normal(keys[1], (planes, inplanes, 1, 1), jnp.float32) * 0.1
    w2 = jax.random.normal(keys[2], (planes, planes, 3, 3), jnp.float32) * 0.1
    w3 = jax.random.normal(keys[3], (planes * 4, planes, 1, 1), jnp.float32) * 0.1

    def bn_params(k, c):
        k1, k2, k3, k4 = jax.random.split(k, 4)
        gamma = jax.random.uniform(k1, (c,), jnp.float32, 0.5, 1.5)
        beta = jax.random.normal(k2, (c,), jnp.float32) * 0.1
        mean = jax.random.normal(k3, (c,), jnp.float32) * 0.1
        var = jax.random.uniform(k4, (c,), jnp.float32, 0.5, 1.5)
        return gamma, beta, mean, var

    bn1 = bn_params(keys[4], planes)
    bn2 = bn_params(keys[5], planes)
    bn3 = bn_params(keys[6], planes * 4)

    out = bottleneck_forward(x, w1, w2, w3, bn1, bn2, bn3)
    out = jax.block_until_ready(out)

    ref = reference_forward(x, w1, w2, w3, bn1, bn2, bn3)
    assert out.shape == ref.shape == (N, planes * 4, H, W)
    # Tolerance accounts for bf16 activations / MXU inputs (f32 accumulation;
    # BN and the residual add in f32), compared against a pure-f32 reference.
    if not jnp.allclose(out.astype(jnp.float32), ref, atol=5e-2, rtol=5e-2):
        raise SystemExit("MISMATCH: pallas kernel deviates from reference")
    print("KERNEL_OK")
</pallas_src>

<mosaic_0001>
module attributes {stable_mosaic.version = 11 : i64} {
  func.func @bottleneck_kernel(%arg0: i32, %arg1: memref<2x8x8x16xbf16, #tpu.memory_space<vmem>>, %arg2: memref<16x128xbf16, #tpu.memory_space<vmem>>, %arg3: memref<1x128xf32, #tpu.memory_space<vmem>>, %arg4: memref<1x128xf32, #tpu.memory_space<vmem>>, %arg5: memref<1152x128xbf16, #tpu.memory_space<vmem>>, %arg6: memref<1x128xf32, #tpu.memory_space<vmem>>, %arg7: memref<1x128xf32, #tpu.memory_space<vmem>>, %arg8: memref<128x16xbf16, #tpu.memory_space<vmem>>, %arg9: memref<1x16xf32, #tpu.memory_space<vmem>>, %arg10: memref<1x16xf32, #tpu.memory_space<vmem>>, %arg11: memref<2x8x8x16xbf16, #tpu.memory_space<vmem>>, %arg12: memref<2x10x16x128xbf16, #tpu.memory_space<vmem>>) attributes {dimension_semantics = [#tpu.dimension_semantics<parallel>], iteration_bounds = array<i64: 4>, scalar_prefetch = 0 : i64, scratch_operands = 1 : i64, tpu.core_type = #tpu.core_type<tc>, window_params = [{transform_indices = @transform_0, window_bounds = array<i64: 2, 8, 8, 16>}, {pipeline_mode = #tpu.pipeline_mode<synchronous>, transform_indices = @transform_1, window_bounds = array<i64: 16, 128>}, {pipeline_mode = #tpu.pipeline_mode<synchronous>, transform_indices = @transform_2, window_bounds = array<i64: 1, 128>}, {pipeline_mode = #tpu.pipeline_mode<synchronous>, transform_indices = @transform_3, window_bounds = array<i64: 1, 128>}, {pipeline_mode = #tpu.pipeline_mode<synchronous>, transform_indices = @transform_4, window_bounds = array<i64: 1152, 128>}, {pipeline_mode = #tpu.pipeline_mode<synchronous>, transform_indices = @transform_5, window_bounds = array<i64: 1, 128>}, {pipeline_mode = #tpu.pipeline_mode<synchronous>, transform_indices = @transform_6, window_bounds = array<i64: 1, 128>}, {pipeline_mode = #tpu.pipeline_mode<synchronous>, transform_indices = @transform_7, window_bounds = array<i64: 128, 16>}, {pipeline_mode = #tpu.pipeline_mode<synchronous>, transform_indices = @transform_8, window_bounds = array<i64: 1, 16>}, {pipeline_mode = #tpu.pipeline_mode<synchronous>, transform_indices = @transform_9, window_bounds = array<i64: 1, 16>}, {transform_indices = @transform_10, window_bounds = array<i64: 2, 8, 8, 16>}]} {
    %c0 = arith.constant 0 : index
    %c0_0 = arith.constant 0 : index
    %c0_1 = arith.constant 0 : index
    %c0_2 = arith.constant 0 : index
    %0 = vector.load %arg1[%c0, %c0_0, %c0_1, %c0_2] : memref<2x8x8x16xbf16, #tpu.memory_space<vmem>>, vector<2x8x8x16xbf16>
    %1 = vector.shape_cast %0 : vector<2x8x8x16xbf16> to vector<128x16xbf16>
    %c0_3 = arith.constant 0 : index
    %c0_4 = arith.constant 0 : index
    %2 = vector.load %arg2[%c0_3, %c0_4] : memref<16x128xbf16, #tpu.memory_space<vmem>>, vector<16x128xbf16>
    %cst = arith.constant dense<0.000000e+00> : vector<128x128xf32>
    %3 = tpu.matmul %1, %2, %cst {dimension_numbers = #tpu.dot_dimension_numbers<[1], [0], [0], [1], [0, 0, 1, 1], [], []>} : vector<128x16xbf16>, vector<16x128xbf16>, vector<128x128xf32> -> vector<128x128xf32>
    %c0_5 = arith.constant 0 : index
    %c0_6 = arith.constant 0 : index
    %4 = vector.load %arg3[%c0_5, %c0_6] : memref<1x128xf32, #tpu.memory_space<vmem>>, vector<1x128xf32>
    %5 = vector.broadcast %4 : vector<1x128xf32> to vector<128x128xf32>
    %6 = arith.mulf %3, %5 : vector<128x128xf32>
    %c0_7 = arith.constant 0 : index
    %c0_8 = arith.constant 0 : index
    %7 = vector.load %arg4[%c0_7, %c0_8] : memref<1x128xf32, #tpu.memory_space<vmem>>, vector<1x128xf32>
    %8 = vector.broadcast %7 : vector<1x128xf32> to vector<128x128xf32>
    %9 = arith.addf %6, %8 : vector<128x128xf32>
    %cst_9 = arith.constant 0.000000e+00 : f32
    %10 = vector.broadcast %cst_9 : f32 to vector<128x128xf32>
    %11 = arith.maximumf %9, %10 : vector<128x128xf32>
    %cst_10 = arith.constant 0.000000e+00 : bf16
    %12 = vector.broadcast %cst_10 : bf16 to vector<2x1x16x128xbf16>
    %c0_11 = arith.constant 0 : index
    %c0_12 = arith.constant 0 : index
    %c0_13 = arith.constant 0 : index
    %c0_14 = arith.constant 0 : index
    %13 = vector.load %arg12[%c0_11, %c0_12, %c0_13, %c0_14] : memref<2x10x16x128xbf16, #tpu.memory_space<vmem>>, vector<2x1x16x128xbf16>
    tpu.vector_store %arg12[%c0_11, %c0_12, %c0_13, %c0_14], %12 {strides = array<i32>} : memref<2x10x16x128xbf16, #tpu.memory_space<vmem>>, vector<2x1x16x128xbf16>,
    %cst_15 = arith.constant 0.000000e+00 : bf16
    %14 = vector.broadcast %cst_15 : bf16 to vector<2x1x16x128xbf16>
    %c0_16 = arith.constant 0 : index
    %c9 = arith.constant 9 : index
    %c0_17 = arith.constant 0 : index
    %c0_18 = arith.constant 0 : index
    %15 = vector.load %arg12[%c0_16, %c9, %c0_17, %c0_18] : memref<2x10x16x128xbf16, #tpu.memory_space<vmem>>, vector<2x1x16x128xbf16>
    tpu.vector_store %arg12[%c0_16, %c9, %c0_17, %c0_18], %14 {strides = array<i32>} : memref<2x10x16x128xbf16, #tpu.memory_space<vmem>>, vector<2x1x16x128xbf16>,
    %cst_19 = arith.constant 0.000000e+00 : bf16
    %16 = vector.broadcast %cst_19 : bf16 to vector<2x10x1x128xbf16>
    %c0_20 = arith.constant 0 : index
    %c0_21 = arith.constant 0 : index
    %c0_22 = arith.constant 0 : index
    %c0_23 = arith.constant 0 : index
    %17 = vector.load %arg12[%c0_20, %c0_21, %c0_22, %c0_23] : memref<2x10x16x128xbf16, #tpu.memory_space<vmem>>, vector<2x10x1x128xbf16>
    tpu.vector_store %arg12[%c0_20, %c0_21, %c0_22, %c0_23], %16 {strides = array<i32>} : memref<2x10x16x128xbf16, #tpu.memory_space<vmem>>, vector<2x10x1x128xbf16>,
    %cst_24 = arith.constant 0.000000e+00 : bf16
    %18 = vector.broadcast %cst_24 : bf16 to vector<2x10x7x128xbf16>
    %c0_25 = arith.constant 0 : index
    %c0_26 = arith.constant 0 : index
    %c9_27 = arith.constant 9 : index
    %c0_28 = arith.constant 0 : index
    %19 = vector.load %arg12[%c0_25, %c0_26, %c9_27, %c0_28] : memref<2x10x16x128xbf16, #tpu.memory_space<vmem>>, vector<2x10x7x128xbf16>
    tpu.vector_store %arg12[%c0_25, %c0_26, %c9_27, %c0_28], %18 {strides = array<i32>} : memref<2x10x16x128xbf16, #tpu.memory_space<vmem>>, vector<2x10x7x128xbf16>,
    %20 = arith.truncf %11 : vector<128x128xf32> to vector<128x128xbf16>
    %21 = vector.shape_cast %20 : vector<128x128xbf16> to vector<2x8x8x128xbf16>
    %c0_29 = arith.constant 0 : index
    %c1 = arith.constant 1 : index
    %c1_30 = arith.constant 1 : index
    %c0_31 = arith.constant 0 : index
    %22 = vector.load %arg12[%c0_29, %c1, %c1_30, %c0_31] : memref<2x10x16x128xbf16, #tpu.memory_space<vmem>>, vector<2x8x8x128xbf16>
    tpu.vector_store %arg12[%c0_29, %c1, %c1_30, %c0_31], %21 {strides = array<i32>} : memref<2x10x16x128xbf16, #tpu.memory_space<vmem>>, vector<2x8x8x128xbf16>,
    %c0_32 = arith.constant 0 : index
    %c0_33 = arith.constant 0 : index
    %c0_34 = arith.constant 0 : index
    %c0_35 = arith.constant 0 : index
    %23 = vector.load %arg12[%c0_32, %c0_33, %c0_34, %c0_35] : memref<2x10x16x128xbf16, #tpu.memory_space<vmem>>, vector<2x8x8x128xbf16>
    %24 = vector.shape_cast %23 : vector<2x8x8x128xbf16> to vector<128x128xbf16>
    %c0_36 = arith.constant 0 : index
    %c0_37 = arith.constant 0 : index
    %c1_38 = arith.constant 1 : index
    %c0_39 = arith.constant 0 : index
    %25 = vector.load %arg12[%c0_36, %c0_37, %c1_38, %c0_39] : memref<2x10x16x128xbf16, #tpu.memory_space<vmem>>, vector<2x8x8x128xbf16>
    %26 = vector.shape_cast %25 : vector<2x8x8x128xbf16> to vector<128x128xbf16>
    %c0_40 = arith.constant 0 : index
    %c0_41 = arith.constant 0 : index
    %c2 = arith.constant 2 : index
    %c0_42 = arith.constant 0 : index
    %27 = vector.load %arg12[%c0_40, %c0_41, %c2, %c0_42] : memref<2x10x16x128xbf16, #tpu.memory_space<vmem>>, vector<2x8x8x128xbf16>
    %28 = vector.shape_cast %27 : vector<2x8x8x128xbf16> to vector<128x128xbf16>
    %c0_43 = arith.constant 0 : index
    %c1_44 = arith.constant 1 : index
    %c0_45 = arith.constant 0 : index
    %c0_46 = arith.constant 0 : index
    %29 = vector.load %arg12[%c0_43, %c1_44, %c0_45, %c0_46] : memref<2x10x16x128xbf16, #tpu.memory_space<vmem>>, vector<2x8x8x128xbf16>
    %30 = vector.shape_cast %29 : vector<2x8x8x128xbf16> to vector<128x128xbf16>
    %c0_47 = arith.constant 0 : index
    %c1_48 = arith.constant 1 : index
    %c1_49 = arith.constant 1 : index
    %c0_50 = arith.constant 0 : index
    %31 = vector.load %arg12[%c0_47, %c1_48, %c1_49, %c0_50] : memref<2x10x16x128xbf16, #tpu.memory_space<vmem>>, vector<2x8x8x128xbf16>
    %32 = vector.shape_cast %31 : vector<2x8x8x128xbf16> to vector<128x128xbf16>
    %c0_51 = arith.constant 0 : index
    %c1_52 = arith.constant 1 : index
    %c2_53 = arith.constant 2 : index
    %c0_54 = arith.constant 0 : index
    %33 = vector.load %arg12[%c0_51, %c1_52, %c2_53, %c0_54] : memref<2x10x16x128xbf16, #tpu.memory_space<vmem>>, vector<2x8x8x128xbf16>
    %34 = vector.shape_cast %33 : vector<2x8x8x128xbf16> to vector<128x128xbf16>
    %c0_55 = arith.constant 0 : index
    %c2_56 = arith.constant 2 : index
    %c0_57 = arith.constant 0 : index
    %c0_58 = arith.constant 0 : index
    %35 = vector.load %arg12[%c0_55, %c2_56, %c0_57, %c0_58] : memref<2x10x16x128xbf16, #tpu.memory_space<vmem>>, vector<2x8x8x128xbf16>
    %36 = vector.shape_cast %35 : vector<2x8x8x128xbf16> to vector<128x128xbf16>
    %c0_59 = arith.constant 0 : index
    %c2_60 = arith.constant 2 : index
    %c1_61 = arith.constant 1 : index
    %c0_62 = arith.constant 0 : index
    %37 = vector.load %arg12[%c0_59, %c2_60, %c1_61, %c0_62] : memref<2x10x16x128xbf16, #tpu.memory_space<vmem>>, vector<2x8x8x128xbf16>
    %38 = vector.shape_cast %37 : vector<2x8x8x128xbf16> to vector<128x128xbf16>
    %c0_63 = arith.constant 0 : index
    %c2_64 = arith.constant 2 : index
    %c2_65 = arith.constant 2 : index
    %c0_66 = arith.constant 0 : index
    %39 = vector.load %arg12[%c0_63, %c2_64, %c2_65, %c0_66] : memref<2x10x16x128xbf16, #tpu.memory_space<vmem>>, vector<2x8x8x128xbf16>
    %40 = vector.shape_cast %39 : vector<2x8x8x128xbf16> to vector<128x128xbf16>
    %41 = tpu.concatenate %24, %26, %28, %30, %32, %34, %36, %38, %40 in 1 : vector<128x128xbf16>, vector<128x128xbf16>, vector<128x128xbf16>, vector<128x128xbf16>, vector<128x128xbf16>, vector<128x128xbf16>, vector<128x128xbf16>, vector<128x128xbf16>, vector<128x128xbf16> -> vector<128x1152xbf16>
    %c0_67 = arith.constant 0 : index
    %c0_68 = arith.constant 0 : index
    %42 = vector.load %arg5[%c0_67, %c0_68] : memref<1152x128xbf16, #tpu.memory_space<vmem>>, vector<1152x128xbf16>
    %cst_69 = arith.constant dense<0.000000e+00> : vector<128x128xf32>
    %43 = tpu.matmul %41, %42, %cst_69 {dimension_numbers = #tpu.dot_dimension_numbers<[1], [0], [0], [1], [0, 0, 1, 1], [], []>} : vector<128x1152xbf16>, vector<1152x128xbf16>, vector<128x128xf32> -> vector<128x128xf32>
    %c0_70 = arith.constant 0 : index
    %c0_71 = arith.constant 0 : index
    %44 = vector.load %arg6[%c0_70, %c0_71] : memref<1x128xf32, #tpu.memory_space<vmem>>, vector<1x128xf32>
    %45 = vector.broadcast %44 : vector<1x128xf32> to vector<128x128xf32>
    %46 = arith.mulf %43, %45 : vector<128x128xf32>
    %c0_72 = arith.constant 0 : index
    %c0_73 = arith.constant 0 : index
    %47 = vector.load %arg7[%c0_72, %c0_73] : memref<1x128xf32, #tpu.memory_space<vmem>>, vector<1x128xf32>
    %48 = vector.broadcast %47 : vector<1x128xf32> to vector<128x128xf32>
    %49 = arith.addf %46, %48 : vector<128x128xf32>
    %cst_74 = arith.constant 0.000000e+00 : f32
    %50 = vector.broadcast %cst_74 : f32 to vector<128x128xf32>
    %51 = arith.maximumf %49, %50 : vector<128x128xf32>
    %52 = arith.truncf %51 : vector<128x128xf32> to vector<128x128xbf16>
    %c0_75 = arith.constant 0 : index
    %c0_76 = arith.constant 0 : index
    %53 = vector.load %arg8[%c0_75, %c0_76] : memref<128x16xbf16, #tpu.memory_space<vmem>>, vector<128x16xbf16>
    %cst_77 = arith.constant dense<0.000000e+00> : vector<128x16xf32>
    %54 = tpu.matmul %52, %53, %cst_77 {dimension_numbers = #tpu.dot_dimension_numbers<[1], [0], [0], [1], [0, 0, 1, 1], [], []>} : vector<128x128xbf16>, vector<128x16xbf16>, vector<128x16xf32> -> vector<128x16xf32>
    %c0_78 = arith.constant 0 : index
    %c0_79 = arith.constant 0 : index
    %55 = vector.load %arg9[%c0_78, %c0_79] : memref<1x16xf32, #tpu.memory_space<vmem>>, vector<1x16xf32>
    %56 = vector.broadcast %55 : vector<1x16xf32> to vector<128x16xf32>
    %57 = arith.mulf %54, %56 : vector<128x16xf32>
    %c0_80 = arith.constant 0 : index
    %c0_81 = arith.constant 0 : index
    %58 = vector.load %arg10[%c0_80, %c0_81] : memref<1x16xf32, #tpu.memory_space<vmem>>, vector<1x16xf32>
    %59 = vector.broadcast %58 : vector<1x16xf32> to vector<128x16xf32>
    %60 = arith.addf %57, %59 : vector<128x16xf32>
    %61 = arith.extf %1 : vector<128x16xbf16> to vector<128x16xf32>
    %62 = arith.addf %60, %61 : vector<128x16xf32>
    %cst_82 = arith.constant 0.000000e+00 : f32
    %63 = vector.broadcast %cst_82 : f32 to vector<128x16xf32>
    %64 = arith.maximumf %62, %63 : vector<128x16xf32>
    %65 = vector.shape_cast %64 : vector<128x16xf32> to vector<2x8x8x16xf32>
    %66 = arith.truncf %65 : vector<2x8x8x16xf32> to vector<2x8x8x16xbf16>
    %c0_83 = arith.constant 0 : index
    %c0_84 = arith.constant 0 : index
    %c0_85 = arith.constant 0 : index
    %c0_86 = arith.constant 0 : index
    %67 = vector.load %arg11[%c0_83, %c0_84, %c0_85, %c0_86] : memref<2x8x8x16xbf16, #tpu.memory_space<vmem>>, vector<2x8x8x16xbf16>
    tpu.vector_store %arg11[%c0_83, %c0_84, %c0_85, %c0_86], %66 {strides = array<i32>} : memref<2x8x8x16xbf16, #tpu.memory_space<vmem>>, vector<2x8x8x16xbf16>,
    return
  }
  func.func @transform_0(%arg0: i32) -> (i32, i32, i32, i32) {
    %c0_i32 = arith.constant 0 : i32
    %c0_i32_0 = arith.constant 0 : i32
    %c0_i32_1 = arith.constant 0 : i32
    %c0_i32_2 = arith.constant 0 : i32
    return %arg0, %c0_i32, %c0_i32_0, %c0_i32_1 : i32, i32, i32, i32
  }
  func.func @transform_1(%arg0: i32) -> (i32, i32) {
    %c0_i32 = arith.constant 0 : i32
    %c0_i32_0 = arith.constant 0 : i32
    %c0_i32_1 = arith.constant 0 : i32
    return %c0_i32, %c0_i32_0 : i32, i32
  }
  func.func @transform_2(%arg0: i32) -> (i32, i32) {
    %c0_i32 = arith.constant 0 : i32
    %c0_i32_0 = arith.constant 0 : i32
    %c0_i32_1 = arith.constant 0 : i32
    return %c0_i32, %c0_i32_0 : i32, i32
  }
  func.func @transform_3(%arg0: i32) -> (i32, i32) {
    %c0_i32 = arith.constant 0 : i32
    %c0_i32_0 = arith.constant 0 : i32
    %c0_i32_1 = arith.constant 0 : i32
    return %c0_i32, %c0_i32_0 : i32, i32
  }
  func.func @transform_4(%arg0: i32) -> (i32, i32) {
    %c0_i32 = arith.constant 0 : i32
    %c0_i32_0 = arith.constant 0 : i32
    %c0_i32_1 = arith.constant 0 : i32
    return %c0_i32, %c0_i32_0 : i32, i32
  }
  func.func @transform_5(%arg0: i32) -> (i32, i32) {
    %c0_i32 = arith.constant 0 : i32
    %c0_i32_0 = arith.constant 0 : i32
    %c0_i32_1 = arith.constant 0 : i32
    return %c0_i32, %c0_i32_0 : i32, i32
  }
  func.func @transform_6(%arg0: i32) -> (i32, i32) {
    %c0_i32 = arith.constant 0 : i32
    %c0_i32_0 = arith.constant 0 : i32
    %c0_i32_1 = arith.constant 0 : i32
    return %c0_i32, %c0_i32_0 : i32, i32
  }
  func.func @transform_7(%arg0: i32) -> (i32, i32) {
    %c0_i32 = arith.constant 0 : i32
    %c0_i32_0 = arith.constant 0 : i32
    %c0_i32_1 = arith.constant 0 : i32
    return %c0_i32, %c0_i32_0 : i32, i32
  }
  func.func @transform_8(%arg0: i32) -> (i32, i32) {
    %c0_i32 = arith.constant 0 : i32
    %c0_i32_0 = arith.constant 0 : i32
    %c0_i32_1 = arith.constant 0 : i32
    return %c0_i32, %c0_i32_0 : i32, i32
  }
  func.func @transform_9(%arg0: i32) -> (i32, i32) {
    %c0_i32 = arith.constant 0 : i32
    %c0_i32_0 = arith.constant 0 : i32
    %c0_i32_1 = arith.constant 0 : i32
    return %c0_i32, %c0_i32_0 : i32, i32
  }
  func.func @transform_10(%arg0: i32) -> (i32, i32, i32, i32) {
    %c0_i32 = arith.constant 0 : i32
    %c0_i32_0 = arith.constant 0 : i32
    %c0_i32_1 = arith.constant 0 : i32
    %c0_i32_2 = arith.constant 0 : i32
    return %arg0, %c0_i32, %c0_i32_0, %c0_i32_1 : i32, i32, i32, i32
  }
}

</mosaic_0001>

<llo_original>
// kernel: tpu_custom_call.1
$region0: #{tpu_custom_call.1}
  #allocation0 [shape = 'u32[]', space=smem, size = 0x4, offset = 0x4, fixed_abs, tag = 'smem constant byte address 0x4 - core index']
  #allocation1 [shape = 'u32[144,128]{1,0:T(1,128)}', space=vmem, size = 0x12000, scoped, tag = 'internal scratch']
  #allocation2 [shape = 'bf16[2,10,16,128]{3,2,1,0:T(16,128)(2,1)}', space=vmem, size = 0x14000, scoped, tag = 'scratch operand']
  %s0 = inlined_call_operand.hbm [shape: bf16[8,8,8,16], index: 0, kind: input, shape index: {}]
  %s1 = inlined_call_operand.vmem [shape: bf16[16,128], index: 1, kind: input, shape index: {}]
  %s2 = inlined_call_operand.vmem [shape: f32[1,128], index: 2, kind: input, shape index: {}]
  %s3 = inlined_call_operand.vmem [shape: f32[1,128], index: 3, kind: input, shape index: {}]
  %s4 = inlined_call_operand.hbm [shape: bf16[1152,128], index: 4, kind: input, shape index: {}]
  %s5 = inlined_call_operand.vmem [shape: f32[1,128], index: 5, kind: input, shape index: {}]
  %s6 = inlined_call_operand.vmem [shape: f32[1,128], index: 6, kind: input, shape index: {}]
  %s7 = inlined_call_operand.vmem [shape: bf16[128,16], index: 7, kind: input, shape index: {}]
  %s8 = inlined_call_operand.vmem [shape: f32[1,16], index: 8, kind: input, shape index: {}]
  %s9 = inlined_call_operand.vmem [shape: f32[1,16], index: 9, kind: input, shape index: {}]
  %s10 = inlined_call_operand.hbm [shape: bf16[8,8,8,16], index: 10, kind: output, shape index: {}]
  %s11 = sld [smem:[#allocation0]]
  $region81: #{tpu_custom_call.1} parent=0
    _
  %s13 = ssub.s32 1, %s11
  %s14 = scalar_select 0, %s13, %s11
  $region1: #{tpu_custom_call.1} parent=0
    #allocation3 [shape = 'u8[65536]{0}', space=vmem, size = 0x10000, scoped, tag = 'input window, operand 0']
    #allocation4 [shape = 's32[2]{0}', space=sflag, size = 0x8, scoped, tag = 'scoped memory for tpu_custom_call.1']
    #allocation5 [shape = 's32[2]{0}', space=sflag, size = 0x8, scoped, tag = 'scoped memory for tpu_custom_call.1']
    #allocation6 [shape = 'u8[294912]{0}', space=vmem, size = 0x48000, scoped, tag = 'input window, operand 4, single buffered']
    #allocation7 [shape = 's32[1]{0}', space=sflag, size = 0x4, scoped, tag = 'scoped memory for tpu_custom_call.1']
    #allocation8 [shape = 'u8[65536]{0}', space=vmem, size = 0x10000, scoped, tag = 'output window, operand 0']
    %15 = vsyncpa [#allocation4], 0
    %s16 = scalar_lea.sflag [#allocation4], 1
    %17 = vsyncpa %s16, 0
    %18 = vsyncpa [#allocation7], 0
    %19 = vsyncpa [#allocation5], 0
    %s20 = scalar_lea.sflag [#allocation5], 1
    %21 = vsyncpa %s20, 0
    loop: start=0, step=1, limit=6
    $region2: #{tpu_custom_call.1} parent=1 // loop_pre_header
      _
    $region3: #{tpu_custom_call.1} parent=1 // loop_header
      %s23 = sphi 0, %s27
      %p24 = scmp.ge.s32.totalorder %s23, 6
      %s33 = sphi 0, %s35
      %s36 = sphi 0, %s33
      %s37 = sphi 0, %s36
      %s53 = sphi 0, %s37
      %s57 = sphi 0, %s57
      %s59 = sphi 0, %s57
      %s60 = sphi 0, %s59
      %s74 = sphi 0, %s60
      %s78 = sphi 0, %s78
      %s80 = sphi 0, %s78
      %s81 = sphi 0, %s80
      %s95 = sphi 0, %s81
      %s99 = sphi 0, %s99
      %s101 = sphi 0, %s99
      %s102 = sphi 0, %s101
      %s116 = sphi 0, %s102
      %s120 = sphi 0, %s120
      %s122 = sphi 0, %s120
      %s123 = sphi 0, %s122
      %s137 = sphi 0, %s123
      %s141 = sphi 0, %s141
      %s143 = sphi 0, %s141
      %s144 = sphi 0, %s143
      %s158 = sphi 0, %s144
      %s162 = sphi 0, %s162
      %s164 = sphi 0, %s162
      %s165 = sphi 0, %s164
      %s179 = sphi 0, %s165
      %s183 = sphi 0, %s183
      %s185 = sphi 0, %s183
      %s186 = sphi 0, %s185
      %s200 = sphi 0, %s186
      %s204 = sphi 0, %s204
      %s206 = sphi 0, %s204
      %s207 = sphi 0, %s206
      %s221 = sphi 0, %s207
      %s225 = sphi 0, %s225
      %s227 = sphi 0, %s225
      %s228 = sphi 0, %s227
      %s242 = sphi 0, %s228
      %s248 = sphi 0, %s250
      %s251 = sphi 0, %s248
      %s252 = sphi 0, %s251
      %s268 = sphi 0, %s252
    $region4: #{tpu_custom_call.1} parent=1 // loop_header_branch
      %26 = sbr.rel (%p24) target = $region8
    $region5: #{tpu_custom_call.1} parent=1 // loop_body
      %s28 = ssub.s32 %s23, 1
      %s29 = ssub.s32 %s23, 2
      %s30 = sadd.s32 %s23, 1
      %s31 = ssub.s32 %s23, %s30
      %p32 = scmp.eq.s32.totalorder %s31, 0
      %s34 = sadd.s32 %s33, 1
      %s35 = scalar_select %p32, %s33, %s34
      %p38 = pneg %p32
      %p39 = scmp.eq.s32.totalorder %s23, 3
      %p40 = por %p38, %p39
      %p41 = scmp.ne.s32.totalorder %s33, %s36
      %p42 = scmp.eq.s32.totalorder %s23, 0
      %p43 = por %p41, %p42
      %p44 = scmp.ne.s32.totalorder %s33, %s36
      %p45 = scmp.eq.s32.totalorder %s28, 3
      %p46 = por %p44, %p45
      %p47 = scmp.ne.s32.totalorder %s36, %s37
      %p48 = scmp.eq.s32.totalorder %s28, 0
      %p49 = por %p47, %p48
      %p50 = scmp.ne.s32.totalorder %s36, %s37
      %p51 = scmp.eq.s32.totalorder %s29, 3
      %p52 = por %p50, %p51
      %p54 = scmp.ne.s32.totalorder %s37, %s53
      %p55 = scmp.eq.s32.totalorder %s29, 0
      %p56 = por %p54, %p55
      %s58 = sadd.s32 %s57, 1
      %p61 = scmp.eq.s32.totalorder %s23, 3
      %p62 = scmp.ne.s32.totalorder %s57, %s59
      %p63 = scmp.eq.s32.totalorder %s23, 0
      %p64 = por %p62, %p63
      %p65 = scmp.ne.s32.totalorder %s57, %s59
      %p66 = scmp.eq.s32.totalorder %s28, 3
      %p67 = por %p65, %p66
      %p68 = scmp.ne.s32.totalorder %s59, %s60
      %p69 = scmp.eq.s32.totalorder %s28, 0
      %p70 = por %p68, %p69
      %p71 = scmp.ne.s32.totalorder %s59, %s60
      %p72 = scmp.eq.s32.totalorder %s29, 3
      %p73 = por %p71, %p72
      %p75 = scmp.ne.s32.totalorder %s60, %s74
      %p76 = scmp.eq.s32.totalorder %s29, 0
      %p77 = por %p75, %p76
      %s79 = sadd.s32 %s78, 1
      %p82 = scmp.eq.s32.totalorder %s23, 3
      %p83 = scmp.ne.s32.totalorder %s78, %s80
      %p84 = scmp.eq.s32.totalorder %s23, 0
      %p85 = por %p83, %p84
      %p86 = scmp.ne.s32.totalorder %s78, %s80
      %p87 = scmp.eq.s32.totalorder %s28, 3
      %p88 = por %p86, %p87
      %p89 = scmp.ne.s32.totalorder %s80, %s81
      %p90 = scmp.eq.s32.totalorder %s28, 0
      %p91 = por %p89, %p90
      %p92 = scmp.ne.s32.totalorder %s80, %s81
      %p93 = scmp.eq.s32.totalorder %s29, 3
      %p94 = por %p92, %p93
      %p96 = scmp.ne.s32.totalorder %s81, %s95
      %p97 = scmp.eq.s32.totalorder %s29, 0
      %p98 = por %p96, %p97
      %s100 = sadd.s32 %s99, 1
      %p103 = scmp.eq.s32.totalorder %s23, 3
      %p104 = scmp.ne.s32.totalorder %s99, %s101
      %p105 = scmp.eq.s32.totalorder %s23, 0
      %p106 = por %p104, %p105
      %p107 = scmp.ne.s32.totalorder %s99, %s101
      %p108 = scmp.eq.s32.totalorder %s28, 3
      %p109 = por %p107, %p108
      %p110 = scmp.ne.s32.totalorder %s101, %s102
      %p111 = scmp.eq.s32.totalorder %s28, 0
      %p112 = por %p110, %p111
      %p113 = scmp.ne.s32.totalorder %s101, %s102
      %p114 = scmp.eq.s32.totalorder %s29, 3
      %p115 = por %p113, %p114
      %p117 = scmp.ne.s32.totalorder %s102, %s116
      %p118 = scmp.eq.s32.totalorder %s29, 0
      %p119 = por %p117, %p118
      %s121 = sadd.s32 %s120, 1
      %p124 = scmp.eq.s32.totalorder %s23, 3
      %p125 = scmp.ne.s32.totalorder %s120, %s122
      %p126 = scmp.eq.s32.totalorder %s23, 0
      %p127 = por %p125, %p126
      %p128 = scmp.ne.s32.totalorder %s120, %s122
      %p129 = scmp.eq.s32.totalorder %s28, 3
      %p130 = por %p128, %p129
      %p131 = scmp.ne.s32.totalorder %s122, %s123
      %p132 = scmp.eq.s32.totalorder %s28, 0
      %p133 = por %p131, %p132
      %p134 = scmp.ne.s32.totalorder %s122, %s123
      %p135 = scmp.eq.s32.totalorder %s29, 3
      %p136 = por %p134, %p135
      %p138 = scmp.ne.s32.totalorder %s123, %s137
      %p139 = scmp.eq.s32.totalorder %s29, 0
      %p140 = por %p138, %p139
      %s142 = sadd.s32 %s141, 1
      %p145 = scmp.eq.s32.totalorder %s23, 3
      %p146 = scmp.ne.s32.totalorder %s141, %s143
      %p147 = scmp.eq.s32.totalorder %s23, 0
      %p148 = por %p146, %p147
      %p149 = scmp.ne.s32.totalorder %s141, %s143
      %p150 = scmp.eq.s32.totalorder %s28, 3
      %p151 = por %p149, %p150
      %p152 = scmp.ne.s32.totalorder %s143, %s144
      %p153 = scmp.eq.s32.totalorder %s28, 0
      %p154 = por %p152, %p153
      %p155 = scmp.ne.s32.totalorder %s143, %s144
      %p156 = scmp.eq.s32.totalorder %s29, 3
      %p157 = por %p155, %p156
      %p159 = scmp.ne.s32.totalorder %s144, %s158
      %p160 = scmp.eq.s32.totalorder %s29, 0
      %p161 = por %p159, %p160
      %s163 = sadd.s32 %s162, 1
      %p166 = scmp.eq.s32.totalorder %s23, 3
      %p167 = scmp.ne.s32.totalorder %s162, %s164
      %p168 = scmp.eq.s32.totalorder %s23, 0
      %p169 = por %p167, %p168
      %p170 = scmp.ne.s32.totalorder %s162, %s164
      %p171 = scmp.eq.s32.totalorder %s28, 3
      %p172 = por %p170, %p171
      %p173 = scmp.ne.s32.totalorder %s164, %s165
      %p174 = scmp.eq.s32.totalorder %s28, 0
      %p175 = por %p173, %p174
      %p176 = scmp.ne.s32.totalorder %s164, %s165
      %p177 = scmp.eq.s32.totalorder %s29, 3
      %p178 = por %p176, %p177
      %p180 = scmp.ne.s32.totalorder %s165, %s179
      %p181 = scmp.eq.s32.totalorder %s29, 0
      %p182 = por %p180, %p181
      %s184 = sadd.s32 %s183, 1
      %p187 = scmp.eq.s32.totalorder %s23, 3
      %p188 = scmp.ne.s32.totalorder %s183, %s185
      %p189 = scmp.eq.s32.totalorder %s23, 0
      %p190 = por %p188, %p189
      %p191 = scmp.ne.s32.totalorder %s183, %s185
      %p192 = scmp.eq.s32.totalorder %s28, 3
      %p193 = por %p191, %p192
      %p194 = scmp.ne.s32.totalorder %s185, %s186
      %p195 = scmp.eq.s32.totalorder %s28, 0
      %p196 = por %p194, %p195
      %p197 = scmp.ne.s32.totalorder %s185, %s186
      %p198 = scmp.eq.s32.totalorder %s29, 3
      %p199 = por %p197, %p198
      %p201 = scmp.ne.s32.totalorder %s186, %s200
      %p202 = scmp.eq.s32.totalorder %s29, 0
      %p203 = por %p201, %p202
      %s205 = sadd.s32 %s204, 1
      %p208 = scmp.eq.s32.totalorder %s23, 3
      %p209 = scmp.ne.s32.totalorder %s204, %s206
      %p210 = scmp.eq.s32.totalorder %s23, 0
      %p211 = por %p209, %p210
      %p212 = scmp.ne.s32.totalorder %s204, %s206
      %p213 = scmp.eq.s32.totalorder %s28, 3
      %p214 = por %p212, %p213
      %p215 = scmp.ne.s32.totalorder %s206, %s207
      %p216 = scmp.eq.s32.totalorder %s28, 0
      %p217 = por %p215, %p216
      %p218 = scmp.ne.s32.totalorder %s206, %s207
      %p219 = scmp.eq.s32.totalorder %s29, 3
      %p220 = por %p218, %p219
      %p222 = scmp.ne.s32.totalorder %s207, %s221
      %p223 = scmp.eq.s32.totalorder %s29, 0
      %p224 = por %p222, %p223
      %s226 = sadd.s32 %s225, 1
      %p229 = scmp.eq.s32.totalorder %s23, 3
      %p230 = scmp.ne.s32.totalorder %s225, %s227
      %p231 = scmp.eq.s32.totalorder %s23, 0
      %p232 = por %p230, %p231
      %p233 = scmp.ne.s32.totalorder %s225, %s227
      %p234 = scmp.eq.s32.totalorder %s28, 3
      %p235 = por %p233, %p234
      %p236 = scmp.ne.s32.totalorder %s227, %s228
      %p237 = scmp.eq.s32.totalorder %s28, 0
      %p238 = por %p236, %p237
      %p239 = scmp.ne.s32.totalorder %s227, %s228
      %p240 = scmp.eq.s32.totalorder %s29, 3
      %p241 = por %p239, %p240
      %p243 = scmp.ne.s32.totalorder %s228, %s242
      %p244 = scmp.eq.s32.totalorder %s29, 0
      %p245 = por %p243, %p244
      %s246 = ssub.s32 %s23, %s30
      %p247 = scmp.eq.s32.totalorder %s246, 0
      %s249 = sadd.s32 %s248, 1
      %s250 = scalar_select %p247, %s248, %s249
      %p253 = pneg %p247
      %p254 = scmp.eq.s32.totalorder %s23, 3
      %p255 = por %p253, %p254
      %p256 = scmp.ne.s32.totalorder %s248, %s251
      %p257 = scmp.eq.s32.totalorder %s23, 0
      %p258 = por %p256, %p257
      %p259 = scmp.ne.s32.totalorder %s248, %s251
      %p260 = scmp.eq.s32.totalorder %s28, 3
      %p261 = por %p259, %p260
      %p262 = scmp.ne.s32.totalorder %s251, %s252
      %p263 = scmp.eq.s32.totalorder %s28, 0
      %p264 = por %p262, %p263
      %p265 = scmp.ne.s32.totalorder %s251, %s252
      %p266 = scmp.eq.s32.totalorder %s29, 3
      %p267 = por %p265, %p266
      %p269 = scmp.ne.s32.totalorder %s252, %s268
      %p270 = scmp.eq.s32.totalorder %s29, 0
      %p271 = por %p269, %p270
      %p272 = scmp.le.s32.totalorder 1, %s23
      %p273 = scmp.lt.s32.totalorder %s23, 5
      %p274 = pnand %p272, %p273
      %p275 = pneg %p274
      // Predicated region
      $region9: #{tpu_custom_call.1} parent=5 // pred_check
        _
      $region10: #{tpu_custom_call.1} parent=5 // pred_check_branch
        %277 = sbr.rel (%p274) target = $region12
      $region11: #{tpu_custom_call.1} parent=5 // pred_region
        %s278 = ssub.s32 %s23, 1
        // Predicated region
        $region13: #{tpu_custom_call.1} parent=11 // pred_check
          %p279 = pneg %p70
        $region14: #{tpu_custom_call.1} parent=11 // pred_check_branch
          %281 = sbr.rel (%p279) target = $region16
        $region15: #{tpu_custom_call.1} parent=11 // pred_region
          _
        $region16: #{tpu_custom_call.1} parent=11 // pred_fallthru
          _
        // Predicated region
        $region17: #{tpu_custom_call.1} parent=11 // pred_check
          %p282 = pneg %p91
        $region18: #{tpu_custom_call.1} parent=11 // pred_check_branch
          %284 = sbr.rel (%p282) target = $region20
        $region19: #{tpu_custom_call.1} parent=11 // pred_region
          _
        $region20: #{tpu_custom_call.1} parent=11 // pred_fallthru
          _
        // Predicated region
        $region21: #{tpu_custom_call.1} parent=11 // pred_check
          %p285 = pneg %p112
        $region22: #{tpu_custom_call.1} parent=11 // pred_check_branch
          %287 = sbr.rel (%p285) target = $region24
        $region23: #{tpu_custom_call.1} parent=11 // pred_region
          _
        $region24: #{tpu_custom_call.1} parent=11 // pred_fallthru
          _
        // Predicated region
        $region25: #{tpu_custom_call.1} parent=11 // pred_check
          %p288 = pneg %p133
        $region26: #{tpu_custom_call.1} parent=11 // pred_check_branch
          %290 = sbr.rel (%p288) target = $region28
        $region27: #{tpu_custom_call.1} parent=11 // pred_region
          %s292 = ssub.s32 9216, 9216
          %293 = vsyncadd [#allocation7], %s292
          %s294 = sshll.u32 [#allocation6], 4
          %s295 = int_to_ptr.vmem [resolvable:$true] %s294
          %300 = dma.hbm_to_vmem [thread:$0]  %s4, 9216, %s295, [#allocation7], 64, 64, 4
        $region28: #{tpu_custom_call.1} parent=11 // pred_fallthru
          _
        // Predicated region
        $region29: #{tpu_custom_call.1} parent=11 // pred_check
          %p301 = pneg %p154
        $region30: #{tpu_custom_call.1} parent=11 // pred_check_branch
          %303 = sbr.rel (%p301) target = $region32
        $region31: #{tpu_custom_call.1} parent=11 // pred_region
          _
        $region32: #{tpu_custom_call.1} parent=11 // pred_fallthru
          _
        // Predicated region
        $region33: #{tpu_custom_call.1} parent=11 // pred_check
          %p304 = pneg %p175
        $region34: #{tpu_custom_call.1} parent=11 // pred_check_branch
          %306 = sbr.rel (%p304) target = $region36
        $region35: #{tpu_custom_call.1} parent=11 // pred_region
          _
        $region36: #{tpu_custom_call.1} parent=11 // pred_fallthru
          _
        // Predicated region
        $region37: #{tpu_custom_call.1} parent=11 // pred_check
          %p307 = pneg %p196
        $region38: #{tpu_custom_call.1} parent=11 // pred_check_branch
          %309 = sbr.rel (%p307) target = $region40
        $region39: #{tpu_custom_call.1} parent=11 // pred_region
          _
        $region40: #{tpu_custom_call.1} parent=11 // pred_fallthru
          _
        // Predicated region
        $region41: #{tpu_custom_call.1} parent=11 // pred_check
          %p310 = pneg %p217
        $region42: #{tpu_custom_call.1} parent=11 // pred_check_branch
          %312 = sbr.rel (%p310) target = $region44
        $region43: #{tpu_custom_call.1} parent=11 // pred_region
          _
        $region44: #{tpu_custom_call.1} parent=11 // pred_fallthru
          _
        // Predicated region
        $region45: #{tpu_custom_call.1} parent=11 // pred_check
          %p313 = pneg %p238
        $region46: #{tpu_custom_call.1} parent=11 // pred_check_branch
          %315 = sbr.rel (%p313) target = $region48
        $region47: #{tpu_custom_call.1} parent=11 // pred_region
          _
        $region48: #{tpu_custom_call.1} parent=11 // pred_fallthru
          _
      $region12: #{tpu_custom_call.1} parent=5 // pred_fallthru
        _
      %p316 = scmp.lt.s32.totalorder %s23, 4
      // Predicated region
      $region49: #{tpu_custom_call.1} parent=5 // pred_check
        %p317 = pneg %p316
      $region50: #{tpu_custom_call.1} parent=5 // pred_check_branch
        %319 = sbr.rel (%p317) target = $region52
      $region51: #{tpu_custom_call.1} parent=5 // pred_region
        // Predicated region
        $region53: #{tpu_custom_call.1} parent=51 // pred_check
          %p320 = pneg %p43
        $region54: #{tpu_custom_call.1} parent=51 // pred_check_branch
          %322 = sbr.rel (%p320) target = $region56
        $region55: #{tpu_custom_call.1} parent=51 // pred_region
          %s323 = sand.u32 %s33, 1
          %s324 = scalar_lea.sflag [#allocation4], %s323
          %s325 = sand.u32 %s33, 1
          %s326 = smul.addr %s325, 64
          %s327 = scalar_lea.vmem [#allocation3], %s326
          %s328 = smul.u32 2, %s23
          %s330 = ssub.s32 1024, 1024
          %331 = vsyncadd %s324, %s330
          %s332 = smul.addr %s328, 8
          %s333 = smul.addr %s332, 64
          %s334 = scalar_lea.hbm %s0, %s333
          %s335 = sshll.u32 %s327, 4
          %s336 = int_to_ptr.vmem [resolvable:$true] %s335
          %341 = dma.hbm_to_vmem [thread:$0]  %s334, 1024, %s336, %s324, 64, 64, 4
        $region56: #{tpu_custom_call.1} parent=51 // pred_fallthru
          _
      $region52: #{tpu_custom_call.1} parent=5 // pred_fallthru
        _
      %p342 = scmp.le.s32.totalorder 1, %s23
      %p343 = scmp.lt.s32.totalorder %s23, 5
      %p344 = pnand %p342, %p343
      %p345 = pneg %p344
      // Predicated region
      $region57: #{tpu_custom_call.1} parent=5 // pred_check
        _
      $region58: #{tpu_custom_call.1} parent=5 // pred_check_branch
        %347 = sbr.rel (%p344) target = $region60
      $region59: #{tpu_custom_call.1} parent=5 // pred_region
        %s348 = ssub.s32 %s23, 1
        %s349 = sand.u32 %s36, 1
        %s350 = scalar_lea.sflag [#allocation4], %s349
        %s351 = sand.u32 %s36, 1
        %s352 = smul.addr %s351, 64
        %s353 = scalar_lea.vmem [#allocation3], %s352
        // Predicated region
        $region61: #{tpu_custom_call.1} parent=59 // pred_check
          %p354 = pneg %p49
        $region62: #{tpu_custom_call.1} parent=59 // pred_check_branch
          %356 = sbr.rel (%p354) target = $region64
        $region63: #{tpu_custom_call.1} parent=59 // pred_region
          %357 = dma.done %s350, 1024
        $region64: #{tpu_custom_call.1} parent=59 // pred_fallthru
          _
        // Predicated region
        $region65: #{tpu_custom_call.1} parent=59 // pred_check
          %p358 = pneg %p133
        $region66: #{tpu_custom_call.1} parent=59 // pred_check_branch
          %360 = sbr.rel (%p358) target = $region68
        $region67: #{tpu_custom_call.1} parent=59 // pred_region
          %361 = dma.done [#allocation7], 9216
        $region68: #{tpu_custom_call.1} parent=59 // pred_fallthru
          _
        %s362 = sand.u32 %s36, 1
        %s363 = scalar_lea.sflag [#allocation4], %s362
        %s364 = sand.u32 %s36, 1
        %s365 = smul.addr %s364, 64
        %s366 = scalar_lea.vmem [#allocation3], %s365
        %p367 = pneg %p49
        %p368 = pneg %p46
        %p369 = pneg %p70
        %p370 = pneg %p67
        %p371 = pneg %p91
        %p372 = pneg %p88
        %p373 = pneg %p112
        %p374 = pneg %p109
        %p375 = pneg %p133
        %p376 = pneg %p130
        %p377 = pneg %p154
        %p378 = pneg %p151
        %p379 = pneg %p175
        %p380 = pneg %p172
        %p381 = pneg %p196
        %p382 = pneg %p193
        %p383 = pneg %p217
        %p384 = pneg %p214
        %p385 = pneg %p238
        %p386 = pneg %p235
        %p387 = pneg %p264
        %p388 = pneg %p261
        %s389 = sand.u32 %s251, 1
        %s390 = scalar_lea.sflag [#allocation5], %s389
        %s391 = sand.u32 %s251, 1
        %s392 = smul.addr %s391, 64
        %s393 = scalar_lea.vmem [#allocation8], %s392
        %s394 = smul.u32 2, %s28
        %s395 = smul.u32 2, %s28
        %v397 = vld [vmem:[%s353] sm:$0xf]
        %v398 = vld [vmem:[%s353 + $0x4] sm:$0xf]
        %v399 = vld [vmem:[%s353 + $0x8] sm:$0xf]
        %v400 = vld [vmem:[%s353 + $0xc] sm:$0xf]
        %v401 = vld [vmem:[%s353 + $0x10] sm:$0xf]
        %v402 = vld [vmem:[%s353 + $0x14] sm:$0xf]
        %v403 = vld [vmem:[%s353 + $0x18] sm:$0xf]
        %v404 = vld [vmem:[%s353 + $0x1c] sm:$0xf]
        %v405 = vld [vmem:[%s353 + $0x20] sm:$0xf]
        %v406 = vld [vmem:[%s353 + $0x24] sm:$0xf]
        %v407 = vld [vmem:[%s353 + $0x28] sm:$0xf]
        %v408 = vld [vmem:[%s353 + $0x2c] sm:$0xf]
        %v409 = vld [vmem:[%s353 + $0x30] sm:$0xf]
        %v410 = vld [vmem:[%s353 + $0x34] sm:$0xf]
        %v411 = vld [vmem:[%s353 + $0x38] sm:$0xf]
        %v412 = vld [vmem:[%s353 + $0x3c] sm:$0xf]
        %v413 = vld [vmem:[%s1] sm:$0xf]
        %v414 = vld [vmem:[%s1 + $0x4] sm:$0xf]
        %v431 = vunpack.c.l.b16 %v397
        %v432 = vunpack.c.l.b16 %v398
        %v433 = vunpack.c.l.b16 %v399
        %v434 = vunpack.c.l.b16 %v400
        %v435 = vunpack.c.l.b16 %v401
        %v436 = vunpack.c.l.b16 %v402
        %v437 = vunpack.c.l.b16 %v403
        %v438 = vunpack.c.l.b16 %v404
        %v439 = vunpack.c.l.b16 %v405
        %v440 = vunpack.c.l.b16 %v406
        %v441 = vunpack.c.l.b16 %v407
        %v442 = vunpack.c.l.b16 %v408
        %v443 = vunpack.c.l.b16 %v409
        %v444 = vunpack.c.l.b16 %v410
        %v445 = vunpack.c.l.b16 %v411
        %v446 = vunpack.c.l.b16 %v412
        %v447 = vpack.c.b16 %v432, %v431
        %v448 = vpack.c.b16 %v434, %v433
        %v449 = vpack.c.b16 %v436, %v435
        %v450 = vpack.c.b16 %v438, %v437
        %v451 = vpack.c.b16 %v440, %v439
        %v452 = vpack.c.b16 %v442, %v441
        %v453 = vpack.c.b16 %v444, %v443
        %v454 = vpack.c.b16 %v446, %v445
        %v457 = vunpack.c.l.b16 %v413
        %v458 = vunpack.c.l.b16 %v414
        %v459 = vpack.c.b16 %v458, %v457
        %vm461 = vcmask 130048
        %v463 = vsel %vm461, %v447, 0
        %v466 = vsel %vm461, %v448, 0
        %v469 = vsel %vm461, %v449, 0
        %v472 = vsel %vm461, %v450, 0
        %v475 = vsel %vm461, %v451, 0
        %v478 = vsel %vm461, %v452, 0
        %v481 = vsel %vm461, %v453, 0
        %v484 = vsel %vm461, %v454, 0
        %486 = vmatprep.subr.bf16.mxu0 0
        %487 = vmatpush1.bf16.msra.mxu0 %v459
        %488 = vmatprep.subr.bf16.mxu0 0
        %489 = vmatpush1.bf16.msra.mxu0 0
        %490 = vmatprep.subr.bf16.mxu0 0
        %491 = vmatpush1.bf16.msra.mxu0 0
        %492 = vmatprep.subr.bf16.mxu0 0
        %493 = vmatpush1.bf16.msra.mxu0 0
        %494 = vmatprep.subr.bf16.mxu0 0
        %495 = vmatpush1.bf16.msra.mxu0 0
        %496 = vmatprep.subr.bf16.mxu0 0
        %497 = vmatpush1.bf16.msra.mxu0 0
        %498 = vmatprep.subr.bf16.mxu0 0
        %499 = vmatpush1.bf16.msra.mxu0 0
        %500 = vmatprep.subr.bf16.mxu0 0
        %501 = vmatpush1.bf16.msra.mxu0 0
        %502 = vmatprep.subr.bf16.mxu0 0
        %503 = vmatpush1.bf16.msra.mxu0 0
        %504 = vmatprep.subr.bf16.mxu0 0
        %505 = vmatpush1.bf16.msra.mxu0 0
        %506 = vmatprep.subr.bf16.mxu0 0
        %507 = vmatpush1.bf16.msra.mxu0 0
        %508 = vmatprep.subr.bf16.mxu0 0
        %509 = vmatpush1.bf16.msra.mxu0 0
        %510 = vmatprep.subr.bf16.mxu0 0
        %511 = vmatpush1.bf16.msra.mxu0 0
        %512 = vmatprep.subr.bf16.mxu0 0
        %513 = vmatpush1.bf16.msra.mxu0 0
        %514 = vmatprep.subr.bf16.mxu0 0
        %515 = vmatpush1.bf16.msra.mxu0 0
        %516 = vmatprep.subr.bf16.mxu0 0
        %517 = vmatpush1.bf16.msra.mxu0 0
        %518 = vmatprep.mubr.bf16.mxu0 0
        %519 = vmatmul.mubr.bf16.gmra.mrb[0].mxu0 %v463
        %v520 = vpop.f32.mrb[0].mxu0
        %v521 = vadd.f32 0.0, %v520
        %v522 = vpop.f32.mrb[0].mxu0
        %v523 = vpop.f32.mrb[0].mxu0
        %v524 = vadd.f32 0.0, %v523
        %v525 = vpop.f32.mrb[0].mxu0
        %526 = vmatprep.mubr.bf16.mxu0 0
        %527 = vmatmul.mubr.bf16.gmra.mrb[0].mxu0 %v466
        %v528 = vpop.f32.mrb[0].mxu0
        %v529 = vadd.f32 0.0, %v528
        %v530 = vpop.f32.mrb[0].mxu0
        %v531 = vpop.f32.mrb[0].mxu0
        %v532 = vadd.f32 0.0, %v531
        %v533 = vpop.f32.mrb[0].mxu0
        %534 = vmatprep.mubr.bf16.mxu0 0
        %535 = vmatmul.mubr.bf16.gmra.mrb[0].mxu0 %v469
        %v536 = vpop.f32.mrb[0].mxu0
        %v537 = vadd.f32 0.0, %v536
        %v538 = vpop.f32.mrb[0].mxu0
        %v539 = vpop.f32.mrb[0].mxu0
        %v540 = vadd.f32 0.0, %v539
        %v541 = vpop.f32.mrb[0].mxu0
        %542 = vmatprep.mubr.bf16.mxu0 0
        %543 = vmatmul.mubr.bf16.gmra.mrb[0].mxu0 %v472
        %v544 = vpop.f32.mrb[0].mxu0
        %v545 = vadd.f32 0.0, %v544
        %v546 = vpop.f32.mrb[0].mxu0
        %v547 = vpop.f32.mrb[0].mxu0
        %v548 = vadd.f32 0.0, %v547
        %v549 = vpop.f32.mrb[0].mxu0
        %550 = vmatprep.mubr.bf16.mxu0 0
        %551 = vmatmul.mubr.bf16.gmra.mrb[0].mxu0 %v475
        %v552 = vpop.f32.mrb[0].mxu0
        %v553 = vadd.f32 0.0, %v552
        %v554 = vpop.f32.mrb[0].mxu0
        %v555 = vpop.f32.mrb[0].mxu0
        %v556 = vadd.f32 0.0, %v555
        %v557 = vpop.f32.mrb[0].mxu0
        %558 = vmatprep.mubr.bf16.mxu0 0
        %559 = vmatmul.mubr.bf16.gmra.mrb[0].mxu0 %v478
        %v560 = vpop.f32.mrb[0].mxu0
        %v561 = vadd.f32 0.0, %v560
        %v562 = vpop.f32.mrb[0].mxu0
        %v563 = vpop.f32.mrb[0].mxu0
        %v564 = vadd.f32 0.0, %v563
        %v565 = vpop.f32.mrb[0].mxu0
        %566 = vmatprep.mubr.bf16.mxu0 0
        %567 = vmatmul.mubr.bf16.gmra.mrb[0].mxu0 %v481
        %v568 = vpop.f32.mrb[0].mxu0
        %v569 = vadd.f32 0.0, %v568
        %v570 = vpop.f32.mrb[0].mxu0
        %v571 = vpop.f32.mrb[0].mxu0
        %v572 = vadd.f32 0.0, %v571
        %v573 = vpop.f32.mrb[0].mxu0
        %574 = vmatprep.mubr.bf16.mxu0 0
        %575 = vmatmul.mubr.bf16.gmra.mrb[0].mxu0 %v484
        %v576 = vpop.f32.mrb[0].mxu0
        %v577 = vadd.f32 0.0, %v576
        %v578 = vpop.f32.mrb[0].mxu0
        %v579 = vpop.f32.mrb[0].mxu0
        %v580 = vadd.f32 0.0, %v579
        %v581 = vpop.f32.mrb[0].mxu0
        %582 = vdwg.mxu0
        %v583 = vld [vmem:[%s2] sm:$0x1]
        %v585 = vlaneseq
        %v586 = vshrl.u32 %v585, 7
        %v587 = vsub.s32 0, %v586
        %v588 = vrot.slane %v583, %v587
        %v590 = vmul.f32 %v521, %v588
        %v591 = vmul.f32 %v524, %v588
        %v592 = vmul.f32 %v529, %v588
        %v593 = vmul.f32 %v532, %v588
        %v594 = vmul.f32 %v537, %v588
        %v595 = vmul.f32 %v540, %v588
        %v596 = vmul.f32 %v545, %v588
        %v597 = vmul.f32 %v548, %v588
        %v598 = vmul.f32 %v553, %v588
        %v599 = vmul.f32 %v556, %v588
        %v600 = vmul.f32 %v561, %v588
        %v601 = vmul.f32 %v564, %v588
        %v602 = vmul.f32 %v569, %v588
        %v603 = vmul.f32 %v572, %v588
        %v604 = vmul.f32 %v577, %v588
        %v605 = vmul.f32 %v580, %v588
        %v606 = vld [vmem:[%s3] sm:$0x1]
        %v608 = vlaneseq
        %v609 = vshrl.u32 %v608, 7
        %v610 = vsub.s32 0, %v609
        %v611 = vrot.slane %v606, %v610
        %v613 = vadd.f32 %v590, %v611
        %v614 = vadd.f32 %v591, %v611
        %v615 = vadd.f32 %v592, %v611
        %v616 = vadd.f32 %v593, %v611
        %v617 = vadd.f32 %v594, %v611
        %v618 = vadd.f32 %v595, %v611
        %v619 = vadd.f32 %v596, %v611
        %v620 = vadd.f32 %v597, %v611
        %v621 = vadd.f32 %v598, %v611
        %v622 = vadd.f32 %v599, %v611
        %v623 = vadd.f32 %v600, %v611
        %v624 = vadd.f32 %v601, %v611
        %v625 = vadd.f32 %v602, %v611
        %v626 = vadd.f32 %v603, %v611
        %v627 = vadd.f32 %v604, %v611
        %v628 = vadd.f32 %v605, %v611
        %v629 = vmax.f32 %v613, 0.0
        %v630 = vmax.f32 %v614, 0.0
        %v631 = vmax.f32 %v615, 0.0
        %v632 = vmax.f32 %v616, 0.0
        %v633 = vmax.f32 %v617, 0.0
        %v634 = vmax.f32 %v618, 0.0
        %v635 = vmax.f32 %v619, 0.0
        %v636 = vmax.f32 %v620, 0.0
        %v637 = vmax.f32 %v621, 0.0
        %v638 = vmax.f32 %v622, 0.0
        %v639 = vmax.f32 %v623, 0.0
        %v640 = vmax.f32 %v624, 0.0
        %v641 = vmax.f32 %v625, 0.0
        %v642 = vmax.f32 %v626, 0.0
        %v643 = vmax.f32 %v627, 0.0
        %v644 = vmax.f32 %v628, 0.0
        %645 = vst [vmem:[#allocation2] sm:$0xff] 0
        %646 = vst [vmem:[#allocation2 + $0x50] sm:$0xff] 0
        %s647 = scalar_lea.vmem [#allocation2], 72
        %648 = vst [vmem:[%s647] sm:$0xff] 0
        %649 = vst [vmem:[%s647 + $0x50] sm:$0xff] 0
        %vm650 = vcmask 1040384
        %vm651 = vsmask.f32 256
        %vm652 = vmand %vm650, %vm651
        %v653 = vld [vmem:[#allocation2] sm:$0x1]
        %v654 = vsel %vm652, 0, %v653
        %655 = vst [vmem:[#allocation2] sm:$0x1] %v654
        %v656 = vld [vmem:[#allocation2 + $0x8] sm:$0x1]
        %v657 = vsel %vm652, 0, %v656
        %658 = vst [vmem:[#allocation2 + $0x8] sm:$0x1] %v657
        %v659 = vld [vmem:[#allocation2 + $0x10] sm:$0x1]
        %v660 = vsel %vm652, 0, %v659
        %661 = vst [vmem:[#allocation2 + $0x10] sm:$0x1] %v660
        %v662 = vld [vmem:[#allocation2 + $0x18] sm:$0x1]
        %v663 = vsel %vm652, 0, %v662
        %664 = vst [vmem:[#allocation2 + $0x18] sm:$0x1] %v663
        %v665 = vld [vmem:[#allocation2 + $0x20] sm:$0x1]
        %v666 = vsel %vm652, 0, %v665
        %667 = vst [vmem:[#allocation2 + $0x20] sm:$0x1] %v666
        %v668 = vld [vmem:[#allocation2 + $0x28] sm:$0x1]
        %v669 = vsel %vm652, 0, %v668
        %670 = vst [vmem:[#allocation2 + $0x28] sm:$0x1] %v669
        %v671 = vld [vmem:[#allocation2 + $0x30] sm:$0x1]
        %v672 = vsel %vm652, 0, %v671
        %673 = vst [vmem:[#allocation2 + $0x30] sm:$0x1] %v672
        %v674 = vld [vmem:[#allocation2 + $0x38] sm:$0x1]
        %v675 = vsel %vm652, 0, %v674
        %676 = vst [vmem:[#allocation2 + $0x38] sm:$0x1] %v675
        %v677 = vld [vmem:[#allocation2 + $0x40] sm:$0x1]
        %v678 = vsel %vm652, 0, %v677
        %679 = vst [vmem:[#allocation2 + $0x40] sm:$0x1] %v678
        %v680 = vld [vmem:[#allocation2 + $0x48] sm:$0x1]
        %v681 = vsel %vm652, 0, %v680
        %682 = vst [vmem:[#allocation2 + $0x48] sm:$0x1] %v681
        %v683 = vld [vmem:[#allocation2 + $0x50] sm:$0x1]
        %v684 = vsel %vm652, 0, %v683
        %685 = vst [vmem:[#allocation2 + $0x50] sm:$0x1] %v684
        %v686 = vld [vmem:[#allocation2 + $0x58] sm:$0x1]
        %v687 = vsel %vm652, 0, %v686
        %688 = vst [vmem:[#allocation2 + $0x58] sm:$0x1] %v687
        %v689 = vld [vmem:[#allocation2 + $0x60] sm:$0x1]
        %v690 = vsel %vm652, 0, %v689
        %691 = vst [vmem:[#allocation2 + $0x60] sm:$0x1] %v690
        %v692 = vld [vmem:[#allocation2 + $0x68] sm:$0x1]
        %v693 = vsel %vm652, 0, %v692
        %694 = vst [vmem:[#allocation2 + $0x68] sm:$0x1] %v693
        %v695 = vld [vmem:[#allocation2 + $0x70] sm:$0x1]
        %v696 = vsel %vm652, 0, %v695
        %697 = vst [vmem:[#allocation2 + $0x70] sm:$0x1] %v696
        %v698 = vld [vmem:[#allocation2 + $0x78] sm:$0x1]
        %v699 = vsel %vm652, 0, %v698
        %700 = vst [vmem:[#allocation2 + $0x78] sm:$0x1] %v699
        %v701 = vld [vmem:[#allocation2 + $0x80] sm:$0x1]
        %v702 = vsel %vm652, 0, %v701
        %703 = vst [vmem:[#allocation2 + $0x80] sm:$0x1] %v702
        %v704 = vld [vmem:[#allocation2 + $0x88] sm:$0x1]
        %v705 = vsel %vm652, 0, %v704
        %706 = vst [vmem:[#allocation2 + $0x88] sm:$0x1] %v705
        %v707 = vld [vmem:[#allocation2 + $0x90] sm:$0x1]
        %v708 = vsel %vm652, 0, %v707
        %709 = vst [vmem:[#allocation2 + $0x90] sm:$0x1] %v708
        %v710 = vld [vmem:[#allocation2 + $0x98] sm:$0x1]
        %v711 = vsel %vm652, 0, %v710
        %712 = vst [vmem:[#allocation2 + $0x98] sm:$0x1] %v711
        %vm713 = vcmask 1047556
        %vm714 = vsmask.f32 7954
        %vm715 = vmand %vm713, %vm714
        %v716 = vld [vmem:[#allocation2] sm:$0xf0]
        %v717 = vsel %vm715, 0, %v716
        %718 = vst [vmem:[#allocation2] sm:$0xf0] %v717
        %v719 = vld [vmem:[#allocation2 + $0x8] sm:$0xf0]
        %v720 = vsel %vm715, 0, %v719
        %721 = vst [vmem:[#allocation2 + $0x8] sm:$0xf0] %v720
        %v722 = vld [vmem:[#allocation2 + $0x10] sm:$0xf0]
        %v723 = vsel %vm715, 0, %v722
        %724 = vst [vmem:[#allocation2 + $0x10] sm:$0xf0] %v723
        %v725 = vld [vmem:[#allocation2 + $0x18] sm:$0xf0]
        %v726 = vsel %vm715, 0, %v725
        %727 = vst [vmem:[#allocation2 + $0x18] sm:$0xf0] %v726
        %v728 = vld [vmem:[#allocation2 + $0x20] sm:$0xf0]
        %v729 = vsel %vm715, 0, %v728
        %730 = vst [vmem:[#allocation2 + $0x20] sm:$0xf0] %v729
        %v731 = vld [vmem:[#allocation2 + $0x28] sm:$0xf0]
        %v732 = vsel %vm715, 0, %v731
        %733 = vst [vmem:[#allocation2 + $0x28] sm:$0xf0] %v732
        %v734 = vld [vmem:[#allocation2 + $0x30] sm:$0xf0]
        %v735 = vsel %vm715, 0, %v734
        %736 = vst [vmem:[#allocation2 + $0x30] sm:$0xf0] %v735
        %v737 = vld [vmem:[#allocation2 + $0x38] sm:$0xf0]
        %v738 = vsel %vm715, 0, %v737
        %739 = vst [vmem:[#allocation2 + $0x38] sm:$0xf0] %v738
        %v740 = vld [vmem:[#allocation2 + $0x40] sm:$0xf0]
        %v741 = vsel %vm715, 0, %v740
        %742 = vst [vmem:[#allocation2 + $0x40] sm:$0xf0] %v741
        %v743 = vld [vmem:[#allocation2 + $0x48] sm:$0xf0]
        %v744 = vsel %vm715, 0, %v743
        %745 = vst [vmem:[#allocation2 + $0x48] sm:$0xf0] %v744
        %v746 = vld [vmem:[#allocation2 + $0x50] sm:$0xf0]
        %v747 = vsel %vm715, 0, %v746
        %748 = vst [vmem:[#allocation2 + $0x50] sm:$0xf0] %v747
        %v749 = vld [vmem:[#allocation2 + $0x58] sm:$0xf0]
        %v750 = vsel %vm715, 0, %v749
        %751 = vst [vmem:[#allocation2 + $0x58] sm:$0xf0] %v750
        %v752 = vld [vmem:[#allocation2 + $0x60] sm:$0xf0]
        %v753 = vsel %vm715, 0, %v752
        %754 = vst [vmem:[#allocation2 + $0x60] sm:$0xf0] %v753
        %v755 = vld [vmem:[#allocation2 + $0x68] sm:$0xf0]
        %v756 = vsel %vm715, 0, %v755
        %757 = vst [vmem:[#allocation2 + $0x68] sm:$0xf0] %v756
        %v758 = vld [vmem:[#allocation2 + $0x70] sm:$0xf0]
        %v759 = vsel %vm715, 0, %v758
        %760 = vst [vmem:[#allocation2 + $0x70] sm:$0xf0] %v759
        %v761 = vld [vmem:[#allocation2 + $0x78] sm:$0xf0]
        %v762 = vsel %vm715, 0, %v761
        %763 = vst [vmem:[#allocation2 + $0x78] sm:$0xf0] %v762
        %v764 = vld [vmem:[#allocation2 + $0x80] sm:$0xf0]
        %v765 = vsel %vm715, 0, %v764
        %766 = vst [vmem:[#allocation2 + $0x80] sm:$0xf0] %v765
        %v767 = vld [vmem:[#allocation2 + $0x88] sm:$0xf0]
        %v768 = vsel %vm715, 0, %v767
        %769 = vst [vmem:[#allocation2 + $0x88] sm:$0xf0] %v768
        %v770 = vld [vmem:[#allocation2 + $0x90] sm:$0xf0]
        %v771 = vsel %vm715, 0, %v770
        %772 = vst [vmem:[#allocation2 + $0x90] sm:$0xf0] %v771
        %v773 = vld [vmem:[#allocation2 + $0x98] sm:$0xf0]
        %v774 = vsel %vm715, 0, %v773
        %775 = vst [vmem:[#allocation2 + $0x98] sm:$0xf0] %v774
        %v776 = vpack.c.bf16 %v630, %v629
        %v777 = vpack.c.bf16 %v632, %v631
        %v778 = vpack.c.bf16 %v634, %v633
        %v779 = vpack.c.bf16 %v636, %v635
        %v780 = vpack.c.bf16 %v638, %v637
        %v781 = vpack.c.bf16 %v640, %v639
        %v782 = vpack.c.bf16 %v642, %v641
        %v783 = vpack.c.bf16 %v644, %v643
        %v792 = vunpack.c.l.b16 %v776
        %v793 = vunpack.c.h.b16 %v776
        %v794 = vunpack.c.l.b16 %v777
        %v795 = vunpack.c.h.b16 %v777
        %v796 = vunpack.c.l.b16 %v778
        %v797 = vunpack.c.h.b16 %v778
        %v798 = vunpack.c.l.b16 %v779
        %v799 = vunpack.c.h.b16 %v779
        %v800 = vunpack.c.l.b16 %v780
        %v801 = vunpack.c.h.b16 %v780
        %v802 = vunpack.c.l.b16 %v781
        %v803 = vunpack.c.h.b16 %v781
        %v804 = vunpack.c.l.b16 %v782
        %v805 = vunpack.c.h.b16 %v782
        %v806 = vunpack.c.l.b16 %v783
        %v807 = vunpack.c.h.b16 %v783
        %v808 = vpack.c.b16 %v792, %v792
        %v809 = vpack.c.b16 %v793, %v793
        %v810 = vpack.c.b16 %v794, %v794
        %v811 = vpack.c.b16 %v795, %v795
        %v812 = vpack.c.b16 %v796, %v796
        %v813 = vpack.c.b16 %v797, %v797
        %v814 = vpack.c.b16 %v798, %v798
        %v815 = vpack.c.b16 %v799, %v799
        %v816 = vpack.c.b16 %v800, %v800
        %v817 = vpack.c.b16 %v801, %v801
        %v818 = vpack.c.b16 %v802, %v802
        %v819 = vpack.c.b16 %v803, %v803
        %v820 = vpack.c.b16 %v804, %v804
        %v821 = vpack.c.b16 %v805, %v805
        %v822 = vpack.c.b16 %v806, %v806
        %v823 = vpack.c.b16 %v807, %v807
        %v825 = vshrl.u32 %v808, 16
        %v827 = vrot.slane %v825, 7
        %v828 = vshll.u32 %v808, 16
        %v830 = vor.u32 %v827, %v828
        %v832 = vshrl.u32 %v809, 16
        %v834 = vrot.slane %v832, 7
        %v835 = vshll.u32 %v809, 16
        %v837 = vor.u32 %v834, %v835
        %v839 = vshrl.u32 %v810, 16
        %v841 = vrot.slane %v839, 7
        %v842 = vshll.u32 %v810, 16
        %v844 = vor.u32 %v841, %v842
        %v846 = vshrl.u32 %v811, 16
        %v848 = vrot.slane %v846, 7
        %v849 = vshll.u32 %v811, 16
        %v851 = vor.u32 %v848, %v849
        %v853 = vshrl.u32 %v812, 16
        %v855 = vrot.slane %v853, 7
        %v856 = vshll.u32 %v812, 16
        %v858 = vor.u32 %v855, %v856
        %v860 = vshrl.u32 %v813, 16
        %v862 = vrot.slane %v860, 7
        %v863 = vshll.u32 %v813, 16
        %v865 = vor.u32 %v862, %v863
        %v867 = vshrl.u32 %v814, 16
        %v869 = vrot.slane %v867, 7
        %v870 = vshll.u32 %v814, 16
        %v872 = vor.u32 %v869, %v870
        %v874 = vshrl.u32 %v815, 16
        %v876 = vrot.slane %v874, 7
        %v877 = vshll.u32 %v815, 16
        %v879 = vor.u32 %v876, %v877
        %v881 = vshrl.u32 %v816, 16
        %v883 = vrot.slane %v881, 7
        %v884 = vshll.u32 %v816, 16
        %v886 = vor.u32 %v883, %v884
        %v888 = vshrl.u32 %v817, 16
        %v890 = vrot.slane %v888, 7
        %v891 = vshll.u32 %v817, 16
        %v893 = vor.u32 %v890, %v891
        %v895 = vshrl.u32 %v818, 16
        %v897 = vrot.slane %v895, 7
        %v898 = vshll.u32 %v818, 16
        %v900 = vor.u32 %v897, %v898
        %v902 = vshrl.u32 %v819, 16
        %v904 = vrot.slane %v902, 7
        %v905 = vshll.u32 %v819, 16
        %v907 = vor.u32 %v904, %v905
        %v909 = vshrl.u32 %v820, 16
        %v911 = vrot.slane %v909, 7
        %v912 = vshll.u32 %v820, 16
        %v914 = vor.u32 %v911, %v912
        %v916 = vshrl.u32 %v821, 16
        %v918 = vrot.slane %v916, 7
        %v919 = vshll.u32 %v821, 16
        %v921 = vor.u32 %v918, %v919
        %v923 = vshrl.u32 %v822, 16
        %v925 = vrot.slane %v923, 7
        %v926 = vshll.u32 %v822, 16
        %v928 = vor.u32 %v925, %v926
        %v930 = vshrl.u32 %v823, 16
        %v932 = vrot.slane %v930, 7
        %v933 = vshll.u32 %v823, 16
        %v935 = vor.u32 %v932, %v933
        %s952 = scalar_lea.vmem [#allocation2], 8
        %vm953 = vcmask 1044480
        %vm954 = vsmask.f32 4354
        %vm955 = vmand %vm953, %vm954
        %v956 = vld [vmem:[%s952] sm:$0x1f]
        %v957 = vsel %vm955, %v830, %v956
        %958 = vst [vmem:[%s952] sm:$0x1f] %v957
        %v959 = vld [vmem:[%s952 + $0x8] sm:$0x1f]
        %v960 = vsel %vm955, %v837, %v959
        %961 = vst [vmem:[%s952 + $0x8] sm:$0x1f] %v960
        %v962 = vld [vmem:[%s952 + $0x10] sm:$0x1f]
        %v963 = vsel %vm955, %v844, %v962
        %964 = vst [vmem:[%s952 + $0x10] sm:$0x1f] %v963
        %v965 = vld [vmem:[%s952 + $0x18] sm:$0x1f]
        %v966 = vsel %vm955, %v851, %v965
        %967 = vst [vmem:[%s952 + $0x18] sm:$0x1f] %v966
        %v968 = vld [vmem:[%s952 + $0x20] sm:$0x1f]
        %v969 = vsel %vm955, %v858, %v968
        %970 = vst [vmem:[%s952 + $0x20] sm:$0x1f] %v969
        %v971 = vld [vmem:[%s952 + $0x28] sm:$0x1f]
        %v972 = vsel %vm955, %v865, %v971
        %973 = vst [vmem:[%s952 + $0x28] sm:$0x1f] %v972
        %v974 = vld [vmem:[%s952 + $0x30] sm:$0x1f]
        %v975 = vsel %vm955, %v872, %v974
        %976 = vst [vmem:[%s952 + $0x30] sm:$0x1f] %v975
        %v977 = vld [vmem:[%s952 + $0x38] sm:$0x1f]
        %v978 = vsel %vm955, %v879, %v977
        %979 = vst [vmem:[%s952 + $0x38] sm:$0x1f] %v978
        %v980 = vld [vmem:[%s952 + $0x50] sm:$0x1f]
        %v981 = vsel %vm955, %v886, %v980
        %982 = vst [vmem:[%s952 + $0x50] sm:$0x1f] %v981
        %v983 = vld [vmem:[%s952 + $0x58] sm:$0x1f]
        %v984 = vsel %vm955, %v893, %v983
        %985 = vst [vmem:[%s952 + $0x58] sm:$0x1f] %v984
        %v986 = vld [vmem:[%s952 + $0x60] sm:$0x1f]
        %v987 = vsel %vm955, %v900, %v986
        %988 = vst [vmem:[%s952 + $0x60] sm:$0x1f] %v987
        %v989 = vld [vmem:[%s952 + $0x68] sm:$0x1f]
        %v990 = vsel %vm955, %v907, %v989
        %991 = vst [vmem:[%s952 + $0x68] sm:$0x1f] %v990
        %v992 = vld [vmem:[%s952 + $0x70] sm:$0x1f]
        %v993 = vsel %vm955, %v914, %v992
        %994 = vst [vmem:[%s952 + $0x70] sm:$0x1f] %v993
        %v995 = vld [vmem:[%s952 + $0x78] sm:$0x1f]
        %v996 = vsel %vm955, %v921, %v995
        %997 = vst [vmem:[%s952 + $0x78] sm:$0x1f] %v996
        %v998 = vld [vmem:[%s952 + $0x80] sm:$0x1f]
        %v999 = vsel %vm955, %v928, %v998
        %1000 = vst [vmem:[%s952 + $0x80] sm:$0x1f] %v999
        %v1001 = vld [vmem:[%s952 + $0x88] sm:$0x1f]
        %v1002 = vsel %vm955, %v935, %v1001
        %1003 = vst [vmem:[%s952 + $0x88] sm:$0x1f] %v1002
        %v1004 = vld [vmem:[#allocation2] sm:$0xf]
        %v1005 = vld [vmem:[#allocation2 + $0x8] sm:$0xf]
        %v1006 = vld [vmem:[#allocation2 + $0x10] sm:$0xf]
        %v1007 = vld [vmem:[#allocation2 + $0x18] sm:$0xf]
        %v1008 = vld [vmem:[#allocation2 + $0x20] sm:$0xf]
        %v1009 = vld [vmem:[#allocation2 + $0x28] sm:$0xf]
        %v1010 = vld [vmem:[#allocation2 + $0x30] sm:$0xf]
        %v1011 = vld [vmem:[#allocation2 + $0x38] sm:$0xf]
        %v1012 = vld [vmem:[#allocation2 + $0x50] sm:$0xf]
        %v1013 = vld [vmem:[#allocation2 + $0x58] sm:$0xf]
        %v1014 = vld [vmem:[#allocation2 + $0x60] sm:$0xf]
        %v1015 = vld [vmem:[#allocation2 + $0x68] sm:$0xf]
        %v1016 = vld [vmem:[#allocation2 + $0x70] sm:$0xf]
        %v1017 = vld [vmem:[#allocation2 + $0x78] sm:$0xf]
        %v1018 = vld [vmem:[#allocation2 + $0x80] sm:$0xf]
        %v1019 = vld [vmem:[#allocation2 + $0x88] sm:$0xf]
        %v1020 = vld [vmem:[#allocation2] sm:$0x1f]
        %v1021 = vld [vmem:[#allocation2 + $0x8] sm:$0x1f]
        %v1022 = vld [vmem:[#allocation2 + $0x10] sm:$0x1f]
        %v1023 = vld [vmem:[#allocation2 + $0x18] sm:$0x1f]
        %v1024 = vld [vmem:[#allocation2 + $0x20] sm:$0x1f]
        %v1025 = vld [vmem:[#allocation2 + $0x28] sm:$0x1f]
        %v1026 = vld [vmem:[#allocation2 + $0x30] sm:$0x1f]
        %v1027 = vld [vmem:[#allocation2 + $0x38] sm:$0x1f]
        %v1028 = vld [vmem:[#allocation2 + $0x50] sm:$0x1f]
        %v1029 = vld [vmem:[#allocation2 + $0x58] sm:$0x1f]
        %v1030 = vld [vmem:[#allocation2 + $0x60] sm:$0x1f]
        %v1031 = vld [vmem:[#allocation2 + $0x68] sm:$0x1f]
        %v1032 = vld [vmem:[#allocation2 + $0x70] sm:$0x1f]
        %v1033 = vld [vmem:[#allocation2 + $0x78] sm:$0x1f]
        %v1034 = vld [vmem:[#allocation2 + $0x80] sm:$0x1f]
        %v1035 = vld [vmem:[#allocation2 + $0x88] sm:$0x1f]
        %v1052 = vunpack.c.l.b16 %v1020
        %v1053 = vunpack.c.h.b16 %v1020
        %v1054 = vunpack.c.l.b16 %v1021
        %v1055 = vunpack.c.h.b16 %v1021
        %v1056 = vunpack.c.l.b16 %v1022
        %v1057 = vunpack.c.h.b16 %v1022
        %v1058 = vunpack.c.l.b16 %v1023
        %v1059 = vunpack.c.h.b16 %v1023
        %v1060 = vunpack.c.l.b16 %v1024
        %v1061 = vunpack.c.h.b16 %v1024
        %v1062 = vunpack.c.l.b16 %v1025
        %v1063 = vunpack.c.h.b16 %v1025
        %v1064 = vunpack.c.l.b16 %v1026
        %v1065 = vunpack.c.h.b16 %v1026
        %v1066 = vunpack.c.l.b16 %v1027
        %v1067 = vunpack.c.h.b16 %v1027
        %v1068 = vunpack.c.l.b16 %v1028
        %v1069 = vunpack.c.h.b16 %v1028
        %v1070 = vunpack.c.l.b16 %v1029
        %v1071 = vunpack.c.h.b16 %v1029
        %v1072 = vunpack.c.l.b16 %v1030
        %v1073 = vunpack.c.h.b16 %v1030
        %v1074 = vunpack.c.l.b16 %v1031
        %v1075 = vunpack.c.h.b16 %v1031
        %v1076 = vunpack.c.l.b16 %v1032
        %v1077 = vunpack.c.h.b16 %v1032
        %v1078 = vunpack.c.l.b16 %v1033
        %v1079 = vunpack.c.h.b16 %v1033
        %v1080 = vunpack.c.l.b16 %v1034
        %v1081 = vunpack.c.h.b16 %v1034
        %v1082 = vunpack.c.l.b16 %v1035
        %v1083 = vunpack.c.h.b16 %v1035
        %v1084 = vpack.c.b16 %v1052, %v1052
        %v1085 = vpack.c.b16 %v1053, %v1053
        %v1086 = vpack.c.b16 %v1054, %v1054
        %v1087 = vpack.c.b16 %v1055, %v1055
        %v1088 = vpack.c.b16 %v1056, %v1056
        %v1089 = vpack.c.b16 %v1057, %v1057
        %v1090 = vpack.c.b16 %v1058, %v1058
        %v1091 = vpack.c.b16 %v1059, %v1059
        %v1092 = vpack.c.b16 %v1060, %v1060
        %v1093 = vpack.c.b16 %v1061, %v1061
        %v1094 = vpack.c.b16 %v1062, %v1062
        %v1095 = vpack.c.b16 %v1063, %v1063
        %v1096 = vpack.c.b16 %v1064, %v1064
        %v1097 = vpack.c.b16 %v1065, %v1065
        %v1098 = vpack.c.b16 %v1066, %v1066
        %v1099 = vpack.c.b16 %v1067, %v1067
        %v1100 = vpack.c.b16 %v1068, %v1068
        %v1101 = vpack.c.b16 %v1069, %v1069
        %v1102 = vpack.c.b16 %v1070, %v1070
        %v1103 = vpack.c.b16 %v1071, %v1071
        %v1104 = vpack.c.b16 %v1072, %v1072
        %v1105 = vpack.c.b16 %v1073, %v1073
        %v1106 = vpack.c.b16 %v1074, %v1074
        %v1107 = vpack.c.b16 %v1075, %v1075
        %v1108 = vpack.c.b16 %v1076, %v1076
        %v1109 = vpack.c.b16 %v1077, %v1077
        %v1110 = vpack.c.b16 %v1078, %v1078
        %v1111 = vpack.c.b16 %v1079, %v1079
        %v1112 = vpack.c.b16 %v1080, %v1080
        %v1113 = vpack.c.b16 %v1081, %v1081
        %v1114 = vpack.c.b16 %v1082, %v1082
        %v1115 = vpack.c.b16 %v1083, %v1083
        %vm1116 = vsmask.f32 3328
        %vm1117 = vsmask.f32 7440
        %vm1118 = vmor %vm1116, %vm1117
        %v1120 = vshrl.u32 %v1084, 16
        %v1122 = vrot.slane %v1120, 4
        %v1123 = vshll.u32 %v1084, 16
        %v1125 = vrot.slane %v1123, 5
        %v1126 = vor.u32 %v1122, %v1125
        %v1127 = vrot.slane %v1126, 4
        %v1129 = vshll.u32 %v1085, 16
        %v1131 = vrot.slane %v1129, 5
        %v1132 = vsel %vm1118, %v1127, %v1131
        %v1134 = vshrl.u32 %v1086, 16
        %v1136 = vrot.slane %v1134, 4
        %v1137 = vshll.u32 %v1086, 16
        %v1139 = vrot.slane %v1137, 5
        %v1140 = vor.u32 %v1136, %v1139
        %v1141 = vrot.slane %v1140, 4
        %v1143 = vshll.u32 %v1087, 16
        %v1145 = vrot.slane %v1143, 5
        %v1146 = vsel %vm1118, %v1141, %v1145
        %v1148 = vshrl.u32 %v1088, 16
        %v1150 = vrot.slane %v1148, 4
        %v1151 = vshll.u32 %v1088, 16
        %v1153 = vrot.slane %v1151, 5
        %v1154 = vor.u32 %v1150, %v1153
        %v1155 = vrot.slane %v1154, 4
        %v1157 = vshll.u32 %v1089, 16
        %v1159 = vrot.slane %v1157, 5
        %v1160 = vsel %vm1118, %v1155, %v1159
        %v1162 = vshrl.u32 %v1090, 16
        %v1164 = vrot.slane %v1162, 4
        %v1165 = vshll.u32 %v1090, 16
        %v1167 = vrot.slane %v1165, 5
        %v1168 = vor.u32 %v1164, %v1167
        %v1169 = vrot.slane %v1168, 4
        %v1171 = vshll.u32 %v1091, 16
        %v1173 = vrot.slane %v1171, 5
        %v1174 = vsel %vm1118, %v1169, %v1173
        %v1176 = vshrl.u32 %v1092, 16
        %v1178 = vrot.slane %v1176, 4
        %v1179 = vshll.u32 %v1092, 16
        %v1181 = vrot.slane %v1179, 5
        %v1182 = vor.u32 %v1178, %v1181
        %v1183 = vrot.slane %v1182, 4
        %v1185 = vshll.u32 %v1093, 16
        %v1187 = vrot.slane %v1185, 5
        %v1188 = vsel %vm1118, %v1183, %v1187
        %v1190 = vshrl.u32 %v1094, 16
        %v1192 = vrot.slane %v1190, 4
        %v1193 = vshll.u32 %v1094, 16
        %v1195 = vrot.slane %v1193, 5
        %v1196 = vor.u32 %v1192, %v1195
        %v1197 = vrot.slane %v1196, 4
        %v1199 = vshll.u32 %v1095, 16
        %v1201 = vrot.slane %v1199, 5
        %v1202 = vsel %vm1118, %v1197, %v1201
        %v1204 = vshrl.u32 %v1096, 16
        %v1206 = vrot.slane %v1204, 4
        %v1207 = vshll.u32 %v1096, 16
        %v1209 = vrot.slane %v1207, 5
        %v1210 = vor.u32 %v1206, %v1209
        %v1211 = vrot.slane %v1210, 4
        %v1213 = vshll.u32 %v1097, 16
        %v1215 = vrot.slane %v1213, 5
        %v1216 = vsel %vm1118, %v1211, %v1215
        %v1218 = vshrl.u32 %v1098, 16
        %v1220 = vrot.slane %v1218, 4
        %v1221 = vshll.u32 %v1098, 16
        %v1223 = vrot.slane %v1221, 5
        %v1224 = vor.u32 %v1220, %v1223
        %v1225 = vrot.slane %v1224, 4
        %v1227 = vshll.u32 %v1099, 16
        %v1229 = vrot.slane %v1227, 5
        %v1230 = vsel %vm1118, %v1225, %v1229
        %v1232 = vshrl.u32 %v1100, 16
        %v1234 = vrot.slane %v1232, 4
        %v1235 = vshll.u32 %v1100, 16
        %v1237 = vrot.slane %v1235, 5
        %v1238 = vor.u32 %v1234, %v1237
        %v1239 = vrot.slane %v1238, 4
        %v1241 = vshll.u32 %v1101, 16
        %v1243 = vrot.slane %v1241, 5
        %v1244 = vsel %vm1118, %v1239, %v1243
        %v1246 = vshrl.u32 %v1102, 16
        %v1248 = vrot.slane %v1246, 4
        %v1249 = vshll.u32 %v1102, 16
        %v1251 = vrot.slane %v1249, 5
        %v1252 = vor.u32 %v1248, %v1251
        %v1253 = vrot.slane %v1252, 4
        %v1255 = vshll.u32 %v1103, 16
        %v1257 = vrot.slane %v1255, 5
        %v1258 = vsel %vm1118, %v1253, %v1257
        %v1260 = vshrl.u32 %v1104, 16
        %v1262 = vrot.slane %v1260, 4
        %v1263 = vshll.u32 %v1104, 16
        %v1265 = vrot.slane %v1263, 5
        %v1266 = vor.u32 %v1262, %v1265
        %v1267 = vrot.slane %v1266, 4
        %v1269 = vshll.u32 %v1105, 16
        %v1271 = vrot.slane %v1269, 5
        %v1272 = vsel %vm1118, %v1267, %v1271
        %v1274 = vshrl.u32 %v1106, 16
        %v1276 = vrot.slane %v1274, 4
        %v1277 = vshll.u32 %v1106, 16
        %v1279 = vrot.slane %v1277, 5
        %v1280 = vor.u32 %v1276, %v1279
        %v1281 = vrot.slane %v1280, 4
        %v1283 = vshll.u32 %v1107, 16
        %v1285 = vrot.slane %v1283, 5
        %v1286 = vsel %vm1118, %v1281, %v1285
        %v1288 = vshrl.u32 %v1108, 16
        %v1290 = vrot.slane %v1288, 4
        %v1291 = vshll.u32 %v1108, 16
        %v1293 = vrot.slane %v1291, 5
        %v1294 = vor.u32 %v1290, %v1293
        %v1295 = vrot.slane %v1294, 4
        %v1297 = vshll.u32 %v1109, 16
        %v1299 = vrot.slane %v1297, 5
        %v1300 = vsel %vm1118, %v1295, %v1299
        %v1302 = vshrl.u32 %v1110, 16
        %v1304 = vrot.slane %v1302, 4
        %v1305 = vshll.u32 %v1110, 16
        %v1307 = vrot.slane %v1305, 5
        %v1308 = vor.u32 %v1304, %v1307
        %v1309 = vrot.slane %v1308, 4
        %v1311 = vshll.u32 %v1111, 16
        %v1313 = vrot.slane %v1311, 5
        %v1314 = vsel %vm1118, %v1309, %v1313
        %v1316 = vshrl.u32 %v1112, 16
        %v1318 = vrot.slane %v1316, 4
        %v1319 = vshll.u32 %v1112, 16
        %v1321 = vrot.slane %v1319, 5
        %v1322 = vor.u32 %v1318, %v1321
        %v1323 = vrot.slane %v1322, 4
        %v1325 = vshll.u32 %v1113, 16
        %v1327 = vrot.slane %v1325, 5
        %v1328 = vsel %vm1118, %v1323, %v1327
        %v1330 = vshrl.u32 %v1114, 16
        %v1332 = vrot.slane %v1330, 4
        %v1333 = vshll.u32 %v1114, 16
        %v1335 = vrot.slane %v1333, 5
        %v1336 = vor.u32 %v1332, %v1335
        %v1337 = vrot.slane %v1336, 4
        %v1339 = vshll.u32 %v1115, 16
        %v1341 = vrot.slane %v1339, 5
        %v1342 = vsel %vm1118, %v1337, %v1341
        %v1343 = vld [vmem:[#allocation2] sm:$0x1e]
        %v1344 = vld [vmem:[#allocation2 + $0x8] sm:$0x1e]
        %v1345 = vld [vmem:[#allocation2 + $0x10] sm:$0x1e]
        %v1346 = vld [vmem:[#allocation2 + $0x18] sm:$0x1e]
        %v1347 = vld [vmem:[#allocation2 + $0x20] sm:$0x1e]
        %v1348 = vld [vmem:[#allocation2 + $0x28] sm:$0x1e]
        %v1349 = vld [vmem:[#allocation2 + $0x30] sm:$0x1e]
        %v1350 = vld [vmem:[#allocation2 + $0x38] sm:$0x1e]
        %v1351 = vld [vmem:[#allocation2 + $0x50] sm:$0x1e]
        %v1352 = vld [vmem:[#allocation2 + $0x58] sm:$0x1e]
        %v1353 = vld [vmem:[#allocation2 + $0x60] sm:$0x1e]
        %v1354 = vld [vmem:[#allocation2 + $0x68] sm:$0x1e]
        %v1355 = vld [vmem:[#allocation2 + $0x70] sm:$0x1e]
        %v1356 = vld [vmem:[#allocation2 + $0x78] sm:$0x1e]
        %v1357 = vld [vmem:[#allocation2 + $0x80] sm:$0x1e]
        %v1358 = vld [vmem:[#allocation2 + $0x88] sm:$0x1e]
        %v1375 = vunpack.c.l.b16 %v1343
        %v1376 = vunpack.c.h.b16 %v1343
        %v1377 = vunpack.c.l.b16 %v1344
        %v1378 = vunpack.c.h.b16 %v1344
        %v1379 = vunpack.c.l.b16 %v1345
        %v1380 = vunpack.c.h.b16 %v1345
        %v1381 = vunpack.c.l.b16 %v1346
        %v1382 = vunpack.c.h.b16 %v1346
        %v1383 = vunpack.c.l.b16 %v1347
        %v1384 = vunpack.c.h.b16 %v1347
        %v1385 = vunpack.c.l.b16 %v1348
        %v1386 = vunpack.c.h.b16 %v1348
        %v1387 = vunpack.c.l.b16 %v1349
        %v1388 = vunpack.c.h.b16 %v1349
        %v1389 = vunpack.c.l.b16 %v1350
        %v1390 = vunpack.c.h.b16 %v1350
        %v1391 = vunpack.c.l.b16 %v1351
        %v1392 = vunpack.c.h.b16 %v1351
        %v1393 = vunpack.c.l.b16 %v1352
        %v1394 = vunpack.c.h.b16 %v1352
        %v1395 = vunpack.c.l.b16 %v1353
        %v1396 = vunpack.c.h.b16 %v1353
        %v1397 = vunpack.c.l.b16 %v1354
        %v1398 = vunpack.c.h.b16 %v1354
        %v1399 = vunpack.c.l.b16 %v1355
        %v1400 = vunpack.c.h.b16 %v1355
        %v1401 = vunpack.c.l.b16 %v1356
        %v1402 = vunpack.c.h.b16 %v1356
        %v1403 = vunpack.c.l.b16 %v1357
        %v1404 = vunpack.c.h.b16 %v1357
        %v1405 = vunpack.c.l.b16 %v1358
        %v1406 = vunpack.c.h.b16 %v1358
        %v1407 = vpack.c.b16 %v1375, %v1375
        %v1408 = vpack.c.b16 %v1376, %v1376
        %v1409 = vpack.c.b16 %v1377, %v1377
        %v1410 = vpack.c.b16 %v1378, %v1378
        %v1411 = vpack.c.b16 %v1379, %v1379
        %v1412 = vpack.c.b16 %v1380, %v1380
        %v1413 = vpack.c.b16 %v1381, %v1381
        %v1414 = vpack.c.b16 %v1382, %v1382
        %v1415 = vpack.c.b16 %v1383, %v1383
        %v1416 = vpack.c.b16 %v1384, %v1384
        %v1417 = vpack.c.b16 %v1385, %v1385
        %v1418 = vpack.c.b16 %v1386, %v1386
        %v1419 = vpack.c.b16 %v1387, %v1387
        %v1420 = vpack.c.b16 %v1388, %v1388
        %v1421 = vpack.c.b16 %v1389, %v1389
        %v1422 = vpack.c.b16 %v1390, %v1390
        %v1423 = vpack.c.b16 %v1391, %v1391
        %v1424 = vpack.c.b16 %v1392, %v1392
        %v1425 = vpack.c.b16 %v1393, %v1393
        %v1426 = vpack.c.b16 %v1394, %v1394
        %v1427 = vpack.c.b16 %v1395, %v1395
        %v1428 = vpack.c.b16 %v1396, %v1396
        %v1429 = vpack.c.b16 %v1397, %v1397
        %v1430 = vpack.c.b16 %v1398, %v1398
        %v1431 = vpack.c.b16 %v1399, %v1399
        %v1432 = vpack.c.b16 %v1400, %v1400
        %v1433 = vpack.c.b16 %v1401, %v1401
        %v1434 = vpack.c.b16 %v1402, %v1402
        %v1435 = vpack.c.b16 %v1403, %v1403
        %v1436 = vpack.c.b16 %v1404, %v1404
        %v1437 = vpack.c.b16 %v1405, %v1405
        %v1438 = vpack.c.b16 %v1406, %v1406
        %vm1439 = vcmask 1042432
        %vm1440 = vcmask 1046532
        %vm1441 = vmor %vm1439, %vm1440
        %v1442 = vrot.slane %v1407, 5
        %v1443 = vrot.slane %v1442, 4
        %v1444 = vrot.slane %v1408, 5
        %v1445 = vsel %vm1441, %v1443, %v1444
        %v1446 = vrot.slane %v1409, 5
        %v1447 = vrot.slane %v1446, 4
        %v1448 = vrot.slane %v1410, 5
        %v1449 = vsel %vm1441, %v1447, %v1448
        %v1450 = vrot.slane %v1411, 5
        %v1451 = vrot.slane %v1450, 4
        %v1452 = vrot.slane %v1412, 5
        %v1453 = vsel %vm1441, %v1451, %v1452
        %v1454 = vrot.slane %v1413, 5
        %v1455 = vrot.slane %v1454, 4
        %v1456 = vrot.slane %v1414, 5
        %v1457 = vsel %vm1441, %v1455, %v1456
        %v1458 = vrot.slane %v1415, 5
        %v1459 = vrot.slane %v1458, 4
        %v1460 = vrot.slane %v1416, 5
        %v1461 = vsel %vm1441, %v1459, %v1460
        %v1462 = vrot.slane %v1417, 5
        %v1463 = vrot.slane %v1462, 4
        %v1464 = vrot.slane %v1418, 5
        %v1465 = vsel %vm1441, %v1463, %v1464
        %v1466 = vrot.slane %v1419, 5
        %v1467 = vrot.slane %v1466, 4
        %v1468 = vrot.slane %v1420, 5
        %v1469 = vsel %vm1441, %v1467, %v1468
        %v1470 = vrot.slane %v1421, 5
        %v1471 = vrot.slane %v1470, 4
        %v1472 = vrot.slane %v1422, 5
        %v1473 = vsel %vm1441, %v1471, %v1472
        %v1474 = vrot.slane %v1423, 5
        %v1475 = vrot.slane %v1474, 4
        %v1476 = vrot.slane %v1424, 5
        %v1477 = vsel %vm1441, %v1475, %v1476
        %v1478 = vrot.slane %v1425, 5
        %v1479 = vrot.slane %v1478, 4
        %v1480 = vrot.slane %v1426, 5
        %v1481 = vsel %vm1441, %v1479, %v1480
        %v1482 = vrot.slane %v1427, 5
        %v1483 = vrot.slane %v1482, 4
        %v1484 = vrot.slane %v1428, 5
        %v1485 = vsel %vm1441, %v1483, %v1484
        %v1486 = vrot.slane %v1429, 5
        %v1487 = vrot.slane %v1486, 4
        %v1488 = vrot.slane %v1430, 5
        %v1489 = vsel %vm1441, %v1487, %v1488
        %v1490 = vrot.slane %v1431, 5
        %v1491 = vrot.slane %v1490, 4
        %v1492 = vrot.slane %v1432, 5
        %v1493 = vsel %vm1441, %v1491, %v1492
        %v1494 = vrot.slane %v1433, 5
        %v1495 = vrot.slane %v1494, 4
        %v1496 = vrot.slane %v1434, 5
        %v1497 = vsel %vm1441, %v1495, %v1496
        %v1498 = vrot.slane %v1435, 5
        %v1499 = vrot.slane %v1498, 4
        %v1500 = vrot.slane %v1436, 5
        %v1501 = vsel %vm1441, %v1499, %v1500
        %v1502 = vrot.slane %v1437, 5
        %v1503 = vrot.slane %v1502, 4
        %v1504 = vrot.slane %v1438, 5
        %v1505 = vsel %vm1441, %v1503, %v1504
        %v1506 = vld [vmem:[%s952] sm:$0xf]
        %v1507 = vld [vmem:[%s952 + $0x8] sm:$0xf]
        %v1508 = vld [vmem:[%s952 + $0x10] sm:$0xf]
        %v1509 = vld [vmem:[%s952 + $0x18] sm:$0xf]
        %v1510 = vld [vmem:[%s952 + $0x20] sm:$0xf]
        %v1511 = vld [vmem:[%s952 + $0x28] sm:$0xf]
        %v1512 = vld [vmem:[%s952 + $0x30] sm:$0xf]
        %v1513 = vld [vmem:[%s952 + $0x38] sm:$0xf]
        %v1514 = vld [vmem:[%s952 + $0x50] sm:$0xf]
        %v1515 = vld [vmem:[%s952 + $0x58] sm:$0xf]
        %v1516 = vld [vmem:[%s952 + $0x60] sm:$0xf]
        %v1517 = vld [vmem:[%s952 + $0x68] sm:$0xf]
        %v1518 = vld [vmem:[%s952 + $0x70] sm:$0xf]
        %v1519 = vld [vmem:[%s952 + $0x78] sm:$0xf]
        %v1520 = vld [vmem:[%s952 + $0x80] sm:$0xf]
        %v1521 = vld [vmem:[%s952 + $0x88] sm:$0xf]
        %v1522 = vld [vmem:[%s952] sm:$0x1f]
        %v1523 = vld [vmem:[%s952 + $0x8] sm:$0x1f]
        %v1524 = vld [vmem:[%s952 + $0x10] sm:$0x1f]
        %v1525 = vld [vmem:[%s952 + $0x18] sm:$0x1f]
        %v1526 = vld [vmem:[%s952 + $0x20] sm:$0x1f]
        %v1527 = vld [vmem:[%s952 + $0x28] sm:$0x1f]
        %v1528 = vld [vmem:[%s952 + $0x30] sm:$0x1f]
        %v1529 = vld [vmem:[%s952 + $0x38] sm:$0x1f]
        %v1530 = vld [vmem:[%s952 + $0x50] sm:$0x1f]
        %v1531 = vld [vmem:[%s952 + $0x58] sm:$0x1f]
        %v1532 = vld [vmem:[%s952 + $0x60] sm:$0x1f]
        %v1533 = vld [vmem:[%s952 + $0x68] sm:$0x1f]
        %v1534 = vld [vmem:[%s952 + $0x70] sm:$0x1f]
        %v1535 = vld [vmem:[%s952 + $0x78] sm:$0x1f]
        %v1536 = vld [vmem:[%s952 + $0x80] sm:$0x1f]
        %v1537 = vld [vmem:[%s952 + $0x88] sm:$0x1f]
        %v1554 = vunpack.c.l.b16 %v1522
        %v1555 = vunpack.c.h.b16 %v1522
        %v1556 = vunpack.c.l.b16 %v1523
        %v1557 = vunpack.c.h.b16 %v1523
        %v1558 = vunpack.c.l.b16 %v1524
        %v1559 = vunpack.c.h.b16 %v1524
        %v1560 = vunpack.c.l.b16 %v1525
        %v1561 = vunpack.c.h.b16 %v1525
        %v1562 = vunpack.c.l.b16 %v1526
        %v1563 = vunpack.c.h.b16 %v1526
        %v1564 = vunpack.c.l.b16 %v1527
        %v1565 = vunpack.c.h.b16 %v1527
        %v1566 = vunpack.c.l.b16 %v1528
        %v1567 = vunpack.c.h.b16 %v1528
        %v1568 = vunpack.c.l.b16 %v1529
        %v1569 = vunpack.c.h.b16 %v1529
        %v1570 = vunpack.c.l.b16 %v1530
        %v1571 = vunpack.c.h.b16 %v1530
        %v1572 = vunpack.c.l.b16 %v1531
        %v1573 = vunpack.c.h.b16 %v1531
        %v1574 = vunpack.c.l.b16 %v1532
        %v1575 = vunpack.c.h.b16 %v1532
        %v1576 = vunpack.c.l.b16 %v1533
        %v1577 = vunpack.c.h.b16 %v1533
        %v1578 = vunpack.c.l.b16 %v1534
        %v1579 = vunpack.c.h.b16 %v1534
        %v1580 = vunpack.c.l.b16 %v1535
        %v1581 = vunpack.c.h.b16 %v1535
        %v1582 = vunpack.c.l.b16 %v1536
        %v1583 = vunpack.c.h.b16 %v1536
        %v1584 = vunpack.c.l.b16 %v1537
        %v1585 = vunpack.c.h.b16 %v1537
        %v1586 = vpack.c.b16 %v1554, %v1554
        %v1587 = vpack.c.b16 %v1555, %v1555
        %v1588 = vpack.c.b16 %v1556, %v1556
        %v1589 = vpack.c.b16 %v1557, %v1557
        %v1590 = vpack.c.b16 %v1558, %v1558
        %v1591 = vpack.c.b16 %v1559, %v1559
        %v1592 = vpack.c.b16 %v1560, %v1560
        %v1593 = vpack.c.b16 %v1561, %v1561
        %v1594 = vpack.c.b16 %v1562, %v1562
        %v1595 = vpack.c.b16 %v1563, %v1563
        %v1596 = vpack.c.b16 %v1564, %v1564
        %v1597 = vpack.c.b16 %v1565, %v1565
        %v1598 = vpack.c.b16 %v1566, %v1566
        %v1599 = vpack.c.b16 %v1567, %v1567
        %v1600 = vpack.c.b16 %v1568, %v1568
        %v1601 = vpack.c.b16 %v1569, %v1569
        %v1602 = vpack.c.b16 %v1570, %v1570
        %v1603 = vpack.c.b16 %v1571, %v1571
        %v1604 = vpack.c.b16 %v1572, %v1572
        %v1605 = vpack.c.b16 %v1573, %v1573
        %v1606 = vpack.c.b16 %v1574, %v1574
        %v1607 = vpack.c.b16 %v1575, %v1575
        %v1608 = vpack.c.b16 %v1576, %v1576
        %v1609 = vpack.c.b16 %v1577, %v1577
        %v1610 = vpack.c.b16 %v1578, %v1578
        %v1611 = vpack.c.b16 %v1579, %v1579
        %v1612 = vpack.c.b16 %v1580, %v1580
        %v1613 = vpack.c.b16 %v1581, %v1581
        %v1614 = vpack.c.b16 %v1582, %v1582
        %v1615 = vpack.c.b16 %v1583, %v1583
        %v1616 = vpack.c.b16 %v1584, %v1584
        %v1617 = vpack.c.b16 %v1585, %v1585
        %v1619 = vshrl.u32 %v1586, 16
        %v1621 = vrot.slane %v1619, 4
        %v1622 = vshll.u32 %v1586, 16
        %v1624 = vrot.slane %v1622, 5
        %v1625 = vor.u32 %v1621, %v1624
        %v1626 = vrot.slane %v1625, 4
        %v1628 = vshll.u32 %v1587, 16
        %v1630 = vrot.slane %v1628, 5
        %v1631 = vsel %vm1118, %v1626, %v1630
        %v1633 = vshrl.u32 %v1588, 16
        %v1635 = vrot.slane %v1633, 4
        %v1636 = vshll.u32 %v1588, 16
        %v1638 = vrot.slane %v1636, 5
        %v1639 = vor.u32 %v1635, %v1638
        %v1640 = vrot.slane %v1639, 4
        %v1642 = vshll.u32 %v1589, 16
        %v1644 = vrot.slane %v1642, 5
        %v1645 = vsel %vm1118, %v1640, %v1644
        %v1647 = vshrl.u32 %v1590, 16
        %v1649 = vrot.slane %v1647, 4
        %v1650 = vshll.u32 %v1590, 16
        %v1652 = vrot.slane %v1650, 5
        %v1653 = vor.u32 %v1649, %v1652
        %v1654 = vrot.slane %v1653, 4
        %v1656 = vshll.u32 %v1591, 16
        %v1658 = vrot.slane %v1656, 5
        %v1659 = vsel %vm1118, %v1654, %v1658
        %v1661 = vshrl.u32 %v1592, 16
        %v1663 = vrot.slane %v1661, 4
        %v1664 = vshll.u32 %v1592, 16
        %v1666 = vrot.slane %v1664, 5
        %v1667 = vor.u32 %v1663, %v1666
        %v1668 = vrot.slane %v1667, 4
        %v1670 = vshll.u32 %v1593, 16
        %v1672 = vrot.slane %v1670, 5
        %v1673 = vsel %vm1118, %v1668, %v1672
        %v1675 = vshrl.u32 %v1594, 16
        %v1677 = vrot.slane %v1675, 4
        %v1678 = vshll.u32 %v1594, 16
        %v1680 = vrot.slane %v1678, 5
        %v1681 = vor.u32 %v1677, %v1680
        %v1682 = vrot.slane %v1681, 4
        %v1684 = vshll.u32 %v1595, 16
        %v1686 = vrot.slane %v1684, 5
        %v1687 = vsel %vm1118, %v1682, %v1686
        %v1689 = vshrl.u32 %v1596, 16
        %v1691 = vrot.slane %v1689, 4
        %v1692 = vshll.u32 %v1596, 16
        %v1694 = vrot.slane %v1692, 5
        %v1695 = vor.u32 %v1691, %v1694
        %v1696 = vrot.slane %v1695, 4
        %v1698 = vshll.u32 %v1597, 16
        %v1700 = vrot.slane %v1698, 5
        %v1701 = vsel %vm1118, %v1696, %v1700
        %v1703 = vshrl.u32 %v1598, 16
        %v1705 = vrot.slane %v1703, 4
        %v1706 = vshll.u32 %v1598, 16
        %v1708 = vrot.slane %v1706, 5
        %v1709 = vor.u32 %v1705, %v1708
        %v1710 = vrot.slane %v1709, 4
        %v1712 = vshll.u32 %v1599, 16
        %v1714 = vrot.slane %v1712, 5
        %v1715 = vsel %vm1118, %v1710, %v1714
        %v1717 = vshrl.u32 %v1600, 16
        %v1719 = vrot.slane %v1717, 4
        %v1720 = vshll.u32 %v1600, 16
        %v1722 = vrot.slane %v1720, 5
        %v1723 = vor.u32 %v1719, %v1722
        %v1724 = vrot.slane %v1723, 4
        %v1726 = vshll.u32 %v1601, 16
        %v1728 = vrot.slane %v1726, 5
        %v1729 = vsel %vm1118, %v1724, %v1728
        %v1731 = vshrl.u32 %v1602, 16
        %v1733 = vrot.slane %v1731, 4
        %v1734 = vshll.u32 %v1602, 16
        %v1736 = vrot.slane %v1734, 5
        %v1737 = vor.u32 %v1733, %v1736
        %v1738 = vrot.slane %v1737, 4
        %v1740 = vshll.u32 %v1603, 16
        %v1742 = vrot.slane %v1740, 5
        %v1743 = vsel %vm1118, %v1738, %v1742
        %v1745 = vshrl.u32 %v1604, 16
        %v1747 = vrot.slane %v1745, 4
        %v1748 = vshll.u32 %v1604, 16
        %v1750 = vrot.slane %v1748, 5
        %v1751 = vor.u32 %v1747, %v1750
        %v1752 = vrot.slane %v1751, 4
        %v1754 = vshll.u32 %v1605, 16
        %v1756 = vrot.slane %v1754, 5
        %v1757 = vsel %vm1118, %v1752, %v1756
        %v1759 = vshrl.u32 %v1606, 16
        %v1761 = vrot.slane %v1759, 4
        %v1762 = vshll.u32 %v1606, 16
        %v1764 = vrot.slane %v1762, 5
        %v1765 = vor.u32 %v1761, %v1764
        %v1766 = vrot.slane %v1765, 4
        %v1768 = vshll.u32 %v1607, 16
        %v1770 = vrot.slane %v1768, 5
        %v1771 = vsel %vm1118, %v1766, %v1770
        %v1773 = vshrl.u32 %v1608, 16
        %v1775 = vrot.slane %v1773, 4
        %v1776 = vshll.u32 %v1608, 16
        %v1778 = vrot.slane %v1776, 5
        %v1779 = vor.u32 %v1775, %v1778
        %v1780 = vrot.slane %v1779, 4
        %v1782 = vshll.u32 %v1609, 16
        %v1784 = vrot.slane %v1782, 5
        %v1785 = vsel %vm1118, %v1780, %v1784
        %v1787 = vshrl.u32 %v1610, 16
        %v1789 = vrot.slane %v1787, 4
        %v1790 = vshll.u32 %v1610, 16
        %v1792 = vrot.slane %v1790, 5
        %v1793 = vor.u32 %v1789, %v1792
        %v1794 = vrot.slane %v1793, 4
        %v1796 = vshll.u32 %v1611, 16
        %v1798 = vrot.slane %v1796, 5
        %v1799 = vsel %vm1118, %v1794, %v1798
        %v1801 = vshrl.u32 %v1612, 16
        %v1803 = vrot.slane %v1801, 4
        %v1804 = vshll.u32 %v1612, 16
        %v1806 = vrot.slane %v1804, 5
        %v1807 = vor.u32 %v1803, %v1806
        %v1808 = vrot.slane %v1807, 4
        %v1810 = vshll.u32 %v1613, 16
        %v1812 = vrot.slane %v1810, 5
        %v1813 = vsel %vm1118, %v1808, %v1812
        %v1815 = vshrl.u32 %v1614, 16
        %v1817 = vrot.slane %v1815, 4
        %v1818 = vshll.u32 %v1614, 16
        %v1820 = vrot.slane %v1818, 5
        %v1821 = vor.u32 %v1817, %v1820
        %v1822 = vrot.slane %v1821, 4
        %v1824 = vshll.u32 %v1615, 16
        %v1826 = vrot.slane %v1824, 5
        %v1827 = vsel %vm1118, %v1822, %v1826
        %v1829 = vshrl.u32 %v1616, 16
        %v1831 = vrot.slane %v1829, 4
        %v1832 = vshll.u32 %v1616, 16
        %v1834 = vrot.slane %v1832, 5
        %v1835 = vor.u32 %v1831, %v1834
        %v1836 = vrot.slane %v1835, 4
        %v1838 = vshll.u32 %v1617, 16
        %v1840 = vrot.slane %v1838, 5
        %v1841 = vsel %vm1118, %v1836, %v1840
        %v1842 = vld [vmem:[%s952] sm:$0x1e]
        %v1843 = vld [vmem:[%s952 + $0x8] sm:$0x1e]
        %v1844 = vld [vmem:[%s952 + $0x10] sm:$0x1e]
        %v1845 = vld [vmem:[%s952 + $0x18] sm:$0x1e]
        %v1846 = vld [vmem:[%s952 + $0x20] sm:$0x1e]
        %v1847 = vld [vmem:[%s952 + $0x28] sm:$0x1e]
        %v1848 = vld [vmem:[%s952 + $0x30] sm:$0x1e]
        %v1849 = vld [vmem:[%s952 + $0x38] sm:$0x1e]
        %v1850 = vld [vmem:[%s952 + $0x50] sm:$0x1e]
        %v1851 = vld [vmem:[%s952 + $0x58] sm:$0x1e]
        %v1852 = vld [vmem:[%s952 + $0x60] sm:$0x1e]
        %v1853 = vld [vmem:[%s952 + $0x68] sm:$0x1e]
        %v1854 = vld [vmem:[%s952 + $0x70] sm:$0x1e]
        %v1855 = vld [vmem:[%s952 + $0x78] sm:$0x1e]
        %v1856 = vld [vmem:[%s952 + $0x80] sm:$0x1e]
        %v1857 = vld [vmem:[%s952 + $0x88] sm:$0x1e]
        %v1874 = vunpack.c.l.b16 %v1842
        %v1875 = vunpack.c.h.b16 %v1842
        %v1876 = vunpack.c.l.b16 %v1843
        %v1877 = vunpack.c.h.b16 %v1843
        %v1878 = vunpack.c.l.b16 %v1844
        %v1879 = vunpack.c.h.b16 %v1844
        %v1880 = vunpack.c.l.b16 %v1845
        %v1881 = vunpack.c.h.b16 %v1845
        %v1882 = vunpack.c.l.b16 %v1846
        %v1883 = vunpack.c.h.b16 %v1846
        %v1884 = vunpack.c.l.b16 %v1847
        %v1885 = vunpack.c.h.b16 %v1847
        %v1886 = vunpack.c.l.b16 %v1848
        %v1887 = vunpack.c.h.b16 %v1848
        %v1888 = vunpack.c.l.b16 %v1849
        %v1889 = vunpack.c.h.b16 %v1849
        %v1890 = vunpack.c.l.b16 %v1850
        %v1891 = vunpack.c.h.b16 %v1850
        %v1892 = vunpack.c.l.b16 %v1851
        %v1893 = vunpack.c.h.b16 %v1851
        %v1894 = vunpack.c.l.b16 %v1852
        %v1895 = vunpack.c.h.b16 %v1852
        %v1896 = vunpack.c.l.b16 %v1853
        %v1897 = vunpack.c.h.b16 %v1853
        %v1898 = vunpack.c.l.b16 %v1854
        %v1899 = vunpack.c.h.b16 %v1854
        %v1900 = vunpack.c.l.b16 %v1855
        %v1901 = vunpack.c.h.b16 %v1855
        %v1902 = vunpack.c.l.b16 %v1856
        %v1903 = vunpack.c.h.b16 %v1856
        %v1904 = vunpack.c.l.b16 %v1857
        %v1905 = vunpack.c.h.b16 %v1857
        %v1906 = vpack.c.b16 %v1874, %v1874
        %v1907 = vpack.c.b16 %v1875, %v1875
        %v1908 = vpack.c.b16 %v1876, %v1876
        %v1909 = vpack.c.b16 %v1877, %v1877
        %v1910 = vpack.c.b16 %v1878, %v1878
        %v1911 = vpack.c.b16 %v1879, %v1879
        %v1912 = vpack.c.b16 %v1880, %v1880
        %v1913 = vpack.c.b16 %v1881, %v1881
        %v1914 = vpack.c.b16 %v1882, %v1882
        %v1915 = vpack.c.b16 %v1883, %v1883
        %v1916 = vpack.c.b16 %v1884, %v1884
        %v1917 = vpack.c.b16 %v1885, %v1885
        %v1918 = vpack.c.b16 %v1886, %v1886
        %v1919 = vpack.c.b16 %v1887, %v1887
        %v1920 = vpack.c.b16 %v1888, %v1888
        %v1921 = vpack.c.b16 %v1889, %v1889
        %v1922 = vpack.c.b16 %v1890, %v1890
        %v1923 = vpack.c.b16 %v1891, %v1891
        %v1924 = vpack.c.b16 %v1892, %v1892
        %v1925 = vpack.c.b16 %v1893, %v1893
        %v1926 = vpack.c.b16 %v1894, %v1894
        %v1927 = vpack.c.b16 %v1895, %v1895
        %v1928 = vpack.c.b16 %v1896, %v1896
        %v1929 = vpack.c.b16 %v1897, %v1897
        %v1930 = vpack.c.b16 %v1898, %v1898
        %v1931 = vpack.c.b16 %v1899, %v1899
        %v1932 = vpack.c.b16 %v1900, %v1900
        %v1933 = vpack.c.b16 %v1901, %v1901
        %v1934 = vpack.c.b16 %v1902, %v1902
        %v1935 = vpack.c.b16 %v1903, %v1903
        %v1936 = vpack.c.b16 %v1904, %v1904
        %v1937 = vpack.c.b16 %v1905, %v1905
        %v1938 = vrot.slane %v1906, 5
        %v1939 = vrot.slane %v1938, 4
        %v1940 = vrot.slane %v1907, 5
        %v1941 = vsel %vm1441, %v1939, %v1940
        %v1942 = vrot.slane %v1908, 5
        %v1943 = vrot.slane %v1942, 4
        %v1944 = vrot.slane %v1909, 5
        %v1945 = vsel %vm1441, %v1943, %v1944
        %v1946 = vrot.slane %v1910, 5
        %v1947 = vrot.slane %v1946, 4
        %v1948 = vrot.slane %v1911, 5
        %v1949 = vsel %vm1441, %v1947, %v1948
        %v1950 = vrot.slane %v1912, 5
        %v1951 = vrot.slane %v1950, 4
        %v1952 = vrot.slane %v1913, 5
        %v1953 = vsel %vm1441, %v1951, %v1952
        %v1954 = vrot.slane %v1914, 5
        %v1955 = vrot.slane %v1954, 4
        %v1956 = vrot.slane %v1915, 5
        %v1957 = vsel %vm1441, %v1955, %v1956
        %v1958 = vrot.slane %v1916, 5
        %v1959 = vrot.slane %v1958, 4
        %v1960 = vrot.slane %v1917, 5
        %v1961 = vsel %vm1441, %v1959, %v1960
        %v1962 = vrot.slane %v1918, 5
        %v1963 = vrot.slane %v1962, 4
        %v1964 = vrot.slane %v1919, 5
        %v1965 = vsel %vm1441, %v1963, %v1964
        %v1966 = vrot.slane %v1920, 5
        %v1967 = vrot.slane %v1966, 4
        %v1968 = vrot.slane %v1921, 5
        %v1969 = vsel %vm1441, %v1967, %v1968
        %v1970 = vrot.slane %v1922, 5
        %v1971 = vrot.slane %v1970, 4
        %v1972 = vrot.slane %v1923, 5
        %v1973 = vsel %vm1441, %v1971, %v1972
        %v1974 = vrot.slane %v1924, 5
        %v1975 = vrot.slane %v1974, 4
        %v1976 = vrot.slane %v1925, 5
        %v1977 = vsel %vm1441, %v1975, %v1976
        %v1978 = vrot.slane %v1926, 5
        %v1979 = vrot.slane %v1978, 4
        %v1980 = vrot.slane %v1927, 5
        %v1981 = vsel %vm1441, %v1979, %v1980
        %v1982 = vrot.slane %v1928, 5
        %v1983 = vrot.slane %v1982, 4
        %v1984 = vrot.slane %v1929, 5
        %v1985 = vsel %vm1441, %v1983, %v1984
        %v1986 = vrot.slane %v1930, 5
        %v1987 = vrot.slane %v1986, 4
        %v1988 = vrot.slane %v1931, 5
        %v1989 = vsel %vm1441, %v1987, %v1988
        %v1990 = vrot.slane %v1932, 5
        %v1991 = vrot.slane %v1990, 4
        %v1992 = vrot.slane %v1933, 5
        %v1993 = vsel %vm1441, %v1991, %v1992
        %v1994 = vrot.slane %v1934, 5
        %v1995 = vrot.slane %v1994, 4
        %v1996 = vrot.slane %v1935, 5
        %v1997 = vsel %vm1441, %v1995, %v1996
        %v1998 = vrot.slane %v1936, 5
        %v1999 = vrot.slane %v1998, 4
        %v2000 = vrot.slane %v1937, 5
        %v2001 = vsel %vm1441, %v1999, %v2000
        %s2002 = scalar_lea.vmem [#allocation2], 16
        %v2003 = vld [vmem:[%s2002] sm:$0xf]
        %v2004 = vld [vmem:[%s2002 + $0x8] sm:$0xf]
        %v2005 = vld [vmem:[%s2002 + $0x10] sm:$0xf]
        %v2006 = vld [vmem:[%s2002 + $0x18] sm:$0xf]
        %v2007 = vld [vmem:[%s2002 + $0x20] sm:$0xf]
        %v2008 = vld [vmem:[%s2002 + $0x28] sm:$0xf]
        %v2009 = vld [vmem:[%s2002 + $0x30] sm:$0xf]
        %v2010 = vld [vmem:[%s2002 + $0x38] sm:$0xf]
        %v2011 = vld [vmem:[%s2002 + $0x50] sm:$0xf]
        %v2012 = vld [vmem:[%s2002 + $0x58] sm:$0xf]
        %v2013 = vld [vmem:[%s2002 + $0x60] sm:$0xf]
        %v2014 = vld [vmem:[%s2002 + $0x68] sm:$0xf]
        %v2015 = vld [vmem:[%s2002 + $0x70] sm:$0xf]
        %v2016 = vld [vmem:[%s2002 + $0x78] sm:$0xf]
        %v2017 = vld [vmem:[%s2002 + $0x80] sm:$0xf]
        %v2018 = vld [vmem:[%s2002 + $0x88] sm:$0xf]
        %v2019 = vld [vmem:[%s2002] sm:$0x1f]
        %v2020 = vld [vmem:[%s2002 + $0x8] sm:$0x1f]
        %v2021 = vld [vmem:[%s2002 + $0x10] sm:$0x1f]
        %v2022 = vld [vmem:[%s2002 + $0x18] sm:$0x1f]
        %v2023 = vld [vmem:[%s2002 + $0x20] sm:$0x1f]
        %v2024 = vld [vmem:[%s2002 + $0x28] sm:$0x1f]
        %v2025 = vld [vmem:[%s2002 + $0x30] sm:$0x1f]
        %v2026 = vld [vmem:[%s2002 + $0x38] sm:$0x1f]
        %v2027 = vld [vmem:[%s2002 + $0x50] sm:$0x1f]
        %v2028 = vld [vmem:[%s2002 + $0x58] sm:$0x1f]
        %v2029 = vld [vmem:[%s2002 + $0x60] sm:$0x1f]
        %v2030 = vld [vmem:[%s2002 + $0x68] sm:$0x1f]
        %v2031 = vld [vmem:[%s2002 + $0x70] sm:$0x1f]
        %v2032 = vld [vmem:[%s2002 + $0x78] sm:$0x1f]
        %v2033 = vld [vmem:[%s2002 + $0x80] sm:$0x1f]
        %v2034 = vld [vmem:[%s2002 + $0x88] sm:$0x1f]
        %v2051 = vunpack.c.l.b16 %v2019
        %v2052 = vunpack.c.h.b16 %v2019
        %v2053 = vunpack.c.l.b16 %v2020
        %v2054 = vunpack.c.h.b16 %v2020
        %v2055 = vunpack.c.l.b16 %v2021
        %v2056 = vunpack.c.h.b16 %v2021
        %v2057 = vunpack.c.l.b16 %v2022
        %v2058 = vunpack.c.h.b16 %v2022
        %v2059 = vunpack.c.l.b16 %v2023
        %v2060 = vunpack.c.h.b16 %v2023
        %v2061 = vunpack.c.l.b16 %v2024
        %v2062 = vunpack.c.h.b16 %v2024
        %v2063 = vunpack.c.l.b16 %v2025
        %v2064 = vunpack.c.h.b16 %v2025
        %v2065 = vunpack.c.l.b16 %v2026
        %v2066 = vunpack.c.h.b16 %v2026
        %v2067 = vunpack.c.l.b16 %v2027
        %v2068 = vunpack.c.h.b16 %v2027
        %v2069 = vunpack.c.l.b16 %v2028
        %v2070 = vunpack.c.h.b16 %v2028
        %v2071 = vunpack.c.l.b16 %v2029
        %v2072 = vunpack.c.h.b16 %v2029
        %v2073 = vunpack.c.l.b16 %v2030
        %v2074 = vunpack.c.h.b16 %v2030
        %v2075 = vunpack.c.l.b16 %v2031
        %v2076 = vunpack.c.h.b16 %v2031
        %v2077 = vunpack.c.l.b16 %v2032
        %v2078 = vunpack.c.h.b16 %v2032
        %v2079 = vunpack.c.l.b16 %v2033
        %v2080 = vunpack.c.h.b16 %v2033
        %v2081 = vunpack.c.l.b16 %v2034
        %v2082 = vunpack.c.h.b16 %v2034
        %v2083 = vpack.c.b16 %v2051, %v2051
        %v2084 = vpack.c.b16 %v2052, %v2052
        %v2085 = vpack.c.b16 %v2053, %v2053
        %v2086 = vpack.c.b16 %v2054, %v2054
        %v2087 = vpack.c.b16 %v2055, %v2055
        %v2088 = vpack.c.b16 %v2056, %v2056
        %v2089 = vpack.c.b16 %v2057, %v2057
        %v2090 = vpack.c.b16 %v2058, %v2058
        %v2091 = vpack.c.b16 %v2059, %v2059
        %v2092 = vpack.c.b16 %v2060, %v2060
        %v2093 = vpack.c.b16 %v2061, %v2061
        %v2094 = vpack.c.b16 %v2062, %v2062
        %v2095 = vpack.c.b16 %v2063, %v2063
        %v2096 = vpack.c.b16 %v2064, %v2064
        %v2097 = vpack.c.b16 %v2065, %v2065
        %v2098 = vpack.c.b16 %v2066, %v2066
        %v2099 = vpack.c.b16 %v2067, %v2067
        %v2100 = vpack.c.b16 %v2068, %v2068
        %v2101 = vpack.c.b16 %v2069, %v2069
        %v2102 = vpack.c.b16 %v2070, %v2070
        %v2103 = vpack.c.b16 %v2071, %v2071
        %v2104 = vpack.c.b16 %v2072, %v2072
        %v2105 = vpack.c.b16 %v2073, %v2073
        %v2106 = vpack.c.b16 %v2074, %v2074
        %v2107 = vpack.c.b16 %v2075, %v2075
        %v2108 = vpack.c.b16 %v2076, %v2076
        %v2109 = vpack.c.b16 %v2077, %v2077
        %v2110 = vpack.c.b16 %v2078, %v2078
        %v2111 = vpack.c.b16 %v2079, %v2079
        %v2112 = vpack.c.b16 %v2080, %v2080
        %v2113 = vpack.c.b16 %v2081, %v2081
        %v2114 = vpack.c.b16 %v2082, %v2082
        %v2116 = vshrl.u32 %v2083, 16
        %v2118 = vrot.slane %v2116, 4
        %v2119 = vshll.u32 %v2083, 16
        %v2121 = vrot.slane %v2119, 5
        %v2122 = vor.u32 %v2118, %v2121
        %v2123 = vrot.slane %v2122, 4
        %v2125 = vshll.u32 %v2084, 16
        %v2127 = vrot.slane %v2125, 5
        %v2128 = vsel %vm1118, %v2123, %v2127
        %v2130 = vshrl.u32 %v2085, 16
        %v2132 = vrot.slane %v2130, 4
        %v2133 = vshll.u32 %v2085, 16
        %v2135 = vrot.slane %v2133, 5
        %v2136 = vor.u32 %v2132, %v2135
        %v2137 = vrot.slane %v2136, 4
        %v2139 = vshll.u32 %v2086, 16
        %v2141 = vrot.slane %v2139, 5
        %v2142 = vsel %vm1118, %v2137, %v2141
        %v2144 = vshrl.u32 %v2087, 16
        %v2146 = vrot.slane %v2144, 4
        %v2147 = vshll.u32 %v2087, 16
        %v2149 = vrot.slane %v2147, 5
        %v2150 = vor.u32 %v2146, %v2149
        %v2151 = vrot.slane %v2150, 4
        %v2153 = vshll.u32 %v2088, 16
        %v2155 = vrot.slane %v2153, 5
        %v2156 = vsel %vm1118, %v2151, %v2155
        %v2158 = vshrl.u32 %v2089, 16
        %v2160 = vrot.slane %v2158, 4
        %v2161 = vshll.u32 %v2089, 16
        %v2163 = vrot.slane %v2161, 5
        %v2164 = vor.u32 %v2160, %v2163
        %v2165 = vrot.slane %v2164, 4
        %v2167 = vshll.u32 %v2090, 16
        %v2169 = vrot.slane %v2167, 5
        %v2170 = vsel %vm1118, %v2165, %v2169
        %v2172 = vshrl.u32 %v2091, 16
        %v2174 = vrot.slane %v2172, 4
        %v2175 = vshll.u32 %v2091, 16
        %v2177 = vrot.slane %v2175, 5
        %v2178 = vor.u32 %v2174, %v2177
        %v2179 = vrot.slane %v2178, 4
        %v2181 = vshll.u32 %v2092, 16
        %v2183 = vrot.slane %v2181, 5
        %v2184 = vsel %vm1118, %v2179, %v2183
        %v2186 = vshrl.u32 %v2093, 16
        %v2188 = vrot.slane %v2186, 4
        %v2189 = vshll.u32 %v2093, 16
        %v2191 = vrot.slane %v2189, 5
        %v2192 = vor.u32 %v2188, %v2191
        %v2193 = vrot.slane %v2192, 4
        %v2195 = vshll.u32 %v2094, 16
        %v2197 = vrot.slane %v2195, 5
        %v2198 = vsel %vm1118, %v2193, %v2197
        %v2200 = vshrl.u32 %v2095, 16
        %v2202 = vrot.slane %v2200, 4
        %v2203 = vshll.u32 %v2095, 16
        %v2205 = vrot.slane %v2203, 5
        %v2206 = vor.u32 %v2202, %v2205
        %v2207 = vrot.slane %v2206, 4
        %v2209 = vshll.u32 %v2096, 16
        %v2211 = vrot.slane %v2209, 5
        %v2212 = vsel %vm1118, %v2207, %v2211
        %v2214 = vshrl.u32 %v2097, 16
        %v2216 = vrot.slane %v2214, 4
        %v2217 = vshll.u32 %v2097, 16
        %v2219 = vrot.slane %v2217, 5
        %v2220 = vor.u32 %v2216, %v2219
        %v2221 = vrot.slane %v2220, 4
        %v2223 = vshll.u32 %v2098, 16
        %v2225 = vrot.slane %v2223, 5
        %v2226 = vsel %vm1118, %v2221, %v2225
        %v2228 = vshrl.u32 %v2099, 16
        %v2230 = vrot.slane %v2228, 4
        %v2231 = vshll.u32 %v2099, 16
        %v2233 = vrot.slane %v2231, 5
        %v2234 = vor.u32 %v2230, %v2233
        %v2235 = vrot.slane %v2234, 4
        %v2237 = vshll.u32 %v2100, 16
        %v2239 = vrot.slane %v2237, 5
        %v2240 = vsel %vm1118, %v2235, %v2239
        %v2242 = vshrl.u32 %v2101, 16
        %v2244 = vrot.slane %v2242, 4
        %v2245 = vshll.u32 %v2101, 16
        %v2247 = vrot.slane %v2245, 5
        %v2248 = vor.u32 %v2244, %v2247
        %v2249 = vrot.slane %v2248, 4
        %v2251 = vshll.u32 %v2102, 16
        %v2253 = vrot.slane %v2251, 5
        %v2254 = vsel %vm1118, %v2249, %v2253
        %v2256 = vshrl.u32 %v2103, 16
        %v2258 = vrot.slane %v2256, 4
        %v2259 = vshll.u32 %v2103, 16
        %v2261 = vrot.slane %v2259, 5
        %v2262 = vor.u32 %v2258, %v2261
        %v2263 = vrot.slane %v2262, 4
        %v2265 = vshll.u32 %v2104, 16
        %v2267 = vrot.slane %v2265, 5
        %v2268 = vsel %vm1118, %v2263, %v2267
        %v2270 = vshrl.u32 %v2105, 16
        %v2272 = vrot.slane %v2270, 4
        %v2273 = vshll.u32 %v2105, 16
        %v2275 = vrot.slane %v2273, 5
        %v2276 = vor.u32 %v2272, %v2275
        %v2277 = vrot.slane %v2276, 4
        %v2279 = vshll.u32 %v2106, 16
        %v2281 = vrot.slane %v2279, 5
        %v2282 = vsel %vm1118, %v2277, %v2281
        %v2284 = vshrl.u32 %v2107, 16
        %v2286 = vrot.slane %v2284, 4
        %v2287 = vshll.u32 %v2107, 16
        %v2289 = vrot.slane %v2287, 5
        %v2290 = vor.u32 %v2286, %v2289
        %v2291 = vrot.slane %v2290, 4
        %v2293 = vshll.u32 %v2108, 16
        %v2295 = vrot.slane %v2293, 5
        %v2296 = vsel %vm1118, %v2291, %v2295
        %v2298 = vshrl.u32 %v2109, 16
        %v2300 = vrot.slane %v2298, 4
        %v2301 = vshll.u32 %v2109, 16
        %v2303 = vrot.slane %v2301, 5
        %v2304 = vor.u32 %v2300, %v2303
        %v2305 = vrot.slane %v2304, 4
        %v2307 = vshll.u32 %v2110, 16
        %v2309 = vrot.slane %v2307, 5
        %v2310 = vsel %vm1118, %v2305, %v2309
        %v2312 = vshrl.u32 %v2111, 16
        %v2314 = vrot.slane %v2312, 4
        %v2315 = vshll.u32 %v2111, 16
        %v2317 = vrot.slane %v2315, 5
        %v2318 = vor.u32 %v2314, %v2317
        %v2319 = vrot.slane %v2318, 4
        %v2321 = vshll.u32 %v2112, 16
        %v2323 = vrot.slane %v2321, 5
        %v2324 = vsel %vm1118, %v2319, %v2323
        %v2326 = vshrl.u32 %v2113, 16
        %v2328 = vrot.slane %v2326, 4
        %v2329 = vshll.u32 %v2113, 16
        %v2331 = vrot.slane %v2329, 5
        %v2332 = vor.u32 %v2328, %v2331
        %v2333 = vrot.slane %v2332, 4
        %v2335 = vshll.u32 %v2114, 16
        %v2337 = vrot.slane %v2335, 5
        %v2338 = vsel %vm1118, %v2333, %v2337
        %v2339 = vld [vmem:[%s2002] sm:$0x1e]
        %v2340 = vld [vmem:[%s2002 + $0x8] sm:$0x1e]
        %v2341 = vld [vmem:[%s2002 + $0x10] sm:$0x1e]
        %v2342 = vld [vmem:[%s2002 + $0x18] sm:$0x1e]
        %v2343 = vld [vmem:[%s2002 + $0x20] sm:$0x1e]
        %v2344 = vld [vmem:[%s2002 + $0x28] sm:$0x1e]
        %v2345 = vld [vmem:[%s2002 + $0x30] sm:$0x1e]
        %v2346 = vld [vmem:[%s2002 + $0x38] sm:$0x1e]
        %v2347 = vld [vmem:[%s2002 + $0x50] sm:$0x1e]
        %v2348 = vld [vmem:[%s2002 + $0x58] sm:$0x1e]
        %v2349 = vld [vmem:[%s2002 + $0x60] sm:$0x1e]
        %v2350 = vld [vmem:[%s2002 + $0x68] sm:$0x1e]
        %v2351 = vld [vmem:[%s2002 + $0x70] sm:$0x1e]
        %v2352 = vld [vmem:[%s2002 + $0x78] sm:$0x1e]
        %v2353 = vld [vmem:[%s2002 + $0x80] sm:$0x1e]
        %v2354 = vld [vmem:[%s2002 + $0x88] sm:$0x1e]
        %v2371 = vunpack.c.l.b16 %v2339
        %v2372 = vunpack.c.h.b16 %v2339
        %v2373 = vunpack.c.l.b16 %v2340
        %v2374 = vunpack.c.h.b16 %v2340
        %v2375 = vunpack.c.l.b16 %v2341
        %v2376 = vunpack.c.h.b16 %v2341
        %v2377 = vunpack.c.l.b16 %v2342
        %v2378 = vunpack.c.h.b16 %v2342
        %v2379 = vunpack.c.l.b16 %v2343
        %v2380 = vunpack.c.h.b16 %v2343
        %v2381 = vunpack.c.l.b16 %v2344
        %v2382 = vunpack.c.h.b16 %v2344
        %v2383 = vunpack.c.l.b16 %v2345
        %v2384 = vunpack.c.h.b16 %v2345
        %v2385 = vunpack.c.l.b16 %v2346
        %v2386 = vunpack.c.h.b16 %v2346
        %v2387 = vunpack.c.l.b16 %v2347
        %v2388 = vunpack.c.h.b16 %v2347
        %v2389 = vunpack.c.l.b16 %v2348
        %v2390 = vunpack.c.h.b16 %v2348
        %v2391 = vunpack.c.l.b16 %v2349
        %v2392 = vunpack.c.h.b16 %v2349
        %v2393 = vunpack.c.l.b16 %v2350
        %v2394 = vunpack.c.h.b16 %v2350
        %v2395 = vunpack.c.l.b16 %v2351
        %v2396 = vunpack.c.h.b16 %v2351
        %v2397 = vunpack.c.l.b16 %v2352
        %v2398 = vunpack.c.h.b16 %v2352
        %v2399 = vunpack.c.l.b16 %v2353
        %v2400 = vunpack.c.h.b16 %v2353
        %v2401 = vunpack.c.l.b16 %v2354
        %v2402 = vunpack.c.h.b16 %v2354
        %v2403 = vpack.c.b16 %v2371, %v2371
        %v2404 = vpack.c.b16 %v2372, %v2372
        %v2405 = vpack.c.b16 %v2373, %v2373
        %v2406 = vpack.c.b16 %v2374, %v2374
        %v2407 = vpack.c.b16 %v2375, %v2375
        %v2408 = vpack.c.b16 %v2376, %v2376
        %v2409 = vpack.c.b16 %v2377, %v2377
        %v2410 = vpack.c.b16 %v2378, %v2378
        %v2411 = vpack.c.b16 %v2379, %v2379
        %v2412 = vpack.c.b16 %v2380, %v2380
        %v2413 = vpack.c.b16 %v2381, %v2381
        %v2414 = vpack.c.b16 %v2382, %v2382
        %v2415 = vpack.c.b16 %v2383, %v2383
        %v2416 = vpack.c.b16 %v2384, %v2384
        %v2417 = vpack.c.b16 %v2385, %v2385
        %v2418 = vpack.c.b16 %v2386, %v2386
        %v2419 = vpack.c.b16 %v2387, %v2387
        %v2420 = vpack.c.b16 %v2388, %v2388
        %v2421 = vpack.c.b16 %v2389, %v2389
        %v2422 = vpack.c.b16 %v2390, %v2390
        %v2423 = vpack.c.b16 %v2391, %v2391
        %v2424 = vpack.c.b16 %v2392, %v2392
        %v2425 = vpack.c.b16 %v2393, %v2393
        %v2426 = vpack.c.b16 %v2394, %v2394
        %v2427 = vpack.c.b16 %v2395, %v2395
        %v2428 = vpack.c.b16 %v2396, %v2396
        %v2429 = vpack.c.b16 %v2397, %v2397
        %v2430 = vpack.c.b16 %v2398, %v2398
        %v2431 = vpack.c.b16 %v2399, %v2399
        %v2432 = vpack.c.b16 %v2400, %v2400
        %v2433 = vpack.c.b16 %v2401, %v2401
        %v2434 = vpack.c.b16 %v2402, %v2402
        %v2435 = vrot.slane %v2403, 5
        %v2436 = vrot.slane %v2435, 4
        %v2437 = vrot.slane %v2404, 5
        %v2438 = vsel %vm1441, %v2436, %v2437
        %v2439 = vrot.slane %v2405, 5
        %v2440 = vrot.slane %v2439, 4
        %v2441 = vrot.slane %v2406, 5
        %v2442 = vsel %vm1441, %v2440, %v2441
        %v2443 = vrot.slane %v2407, 5
        %v2444 = vrot.slane %v2443, 4
        %v2445 = vrot.slane %v2408, 5
        %v2446 = vsel %vm1441, %v2444, %v2445
        %v2447 = vrot.slane %v2409, 5
        %v2448 = vrot.slane %v2447, 4
        %v2449 = vrot.slane %v2410, 5
        %v2450 = vsel %vm1441, %v2448, %v2449
        %v2451 = vrot.slane %v2411, 5
        %v2452 = vrot.slane %v2451, 4
        %v2453 = vrot.slane %v2412, 5
        %v2454 = vsel %vm1441, %v2452, %v2453
        %v2455 = vrot.slane %v2413, 5
        %v2456 = vrot.slane %v2455, 4
        %v2457 = vrot.slane %v2414, 5
        %v2458 = vsel %vm1441, %v2456, %v2457
        %v2459 = vrot.slane %v2415, 5
        %v2460 = vrot.slane %v2459, 4
        %v2461 = vrot.slane %v2416, 5
        %v2462 = vsel %vm1441, %v2460, %v2461
        %v2463 = vrot.slane %v2417, 5
        %v2464 = vrot.slane %v2463, 4
        %v2465 = vrot.slane %v2418, 5
        %v2466 = vsel %vm1441, %v2464, %v2465
        %v2467 = vrot.slane %v2419, 5
        %v2468 = vrot.slane %v2467, 4
        %v2469 = vrot.slane %v2420, 5
        %v2470 = vsel %vm1441, %v2468, %v2469
        %v2471 = vrot.slane %v2421, 5
        %v2472 = vrot.slane %v2471, 4
        %v2473 = vrot.slane %v2422, 5
        %v2474 = vsel %vm1441, %v2472, %v2473
        %v2475 = vrot.slane %v2423, 5
        %v2476 = vrot.slane %v2475, 4
        %v2477 = vrot.slane %v2424, 5
        %v2478 = vsel %vm1441, %v2476, %v2477
        %v2479 = vrot.slane %v2425, 5
        %v2480 = vrot.slane %v2479, 4
        %v2481 = vrot.slane %v2426, 5
        %v2482 = vsel %vm1441, %v2480, %v2481
        %v2483 = vrot.slane %v2427, 5
        %v2484 = vrot.slane %v2483, 4
        %v2485 = vrot.slane %v2428, 5
        %v2486 = vsel %vm1441, %v2484, %v2485
        %v2487 = vrot.slane %v2429, 5
        %v2488 = vrot.slane %v2487, 4
        %v2489 = vrot.slane %v2430, 5
        %v2490 = vsel %vm1441, %v2488, %v2489
        %v2491 = vrot.slane %v2431, 5
        %v2492 = vrot.slane %v2491, 4
        %v2493 = vrot.slane %v2432, 5
        %v2494 = vsel %vm1441, %v2492, %v2493
        %v2495 = vrot.slane %v2433, 5
        %v2496 = vrot.slane %v2495, 4
        %v2497 = vrot.slane %v2434, 5
        %v2498 = vsel %vm1441, %v2496, %v2497
        %v2515 = vunpack.c.l.b16 %v1004
        %v2516 = vunpack.c.l.b16 %v1005
        %v2517 = vunpack.c.l.b16 %v1006
        %v2518 = vunpack.c.l.b16 %v1007
        %v2519 = vunpack.c.l.b16 %v1008
        %v2520 = vunpack.c.l.b16 %v1009
        %v2521 = vunpack.c.l.b16 %v1010
        %v2522 = vunpack.c.l.b16 %v1011
        %v2523 = vunpack.c.l.b16 %v1012
        %v2524 = vunpack.c.l.b16 %v1013
        %v2525 = vunpack.c.l.b16 %v1014
        %v2526 = vunpack.c.l.b16 %v1015
        %v2527 = vunpack.c.l.b16 %v1016
        %v2528 = vunpack.c.l.b16 %v1017
        %v2529 = vunpack.c.l.b16 %v1018
        %v2530 = vunpack.c.l.b16 %v1019
        %v2531 = vpack.c.b16 %v2516, %v2515
        %v2532 = vpack.c.b16 %v2518, %v2517
        %v2533 = vpack.c.b16 %v2520, %v2519
        %v2534 = vpack.c.b16 %v2522, %v2521
        %v2535 = vpack.c.b16 %v2524, %v2523
        %v2536 = vpack.c.b16 %v2526, %v2525
        %v2537 = vpack.c.b16 %v2528, %v2527
        %v2538 = vpack.c.b16 %v2530, %v2529
        %v2547 = vunpack.c.l.b16 %v1132
        %v2548 = vunpack.c.l.b16 %v1146
        %v2549 = vunpack.c.l.b16 %v1160
        %v2550 = vunpack.c.l.b16 %v1174
        %v2551 = vunpack.c.l.b16 %v1188
        %v2552 = vunpack.c.l.b16 %v1202
        %v2553 = vunpack.c.l.b16 %v1216
        %v2554 = vunpack.c.l.b16 %v1230
        %v2555 = vunpack.c.l.b16 %v1244
        %v2556 = vunpack.c.l.b16 %v1258
        %v2557 = vunpack.c.l.b16 %v1272
        %v2558 = vunpack.c.l.b16 %v1286
        %v2559 = vunpack.c.l.b16 %v1300
        %v2560 = vunpack.c.l.b16 %v1314
        %v2561 = vunpack.c.l.b16 %v1328
        %v2562 = vunpack.c.l.b16 %v1342
        %v2563 = vpack.c.b16 %v2548, %v2547
        %v2564 = vpack.c.b16 %v2550, %v2549
        %v2565 = vpack.c.b16 %v2552, %v2551
        %v2566 = vpack.c.b16 %v2554, %v2553
        %v2567 = vpack.c.b16 %v2556, %v2555
        %v2568 = vpack.c.b16 %v2558, %v2557
        %v2569 = vpack.c.b16 %v2560, %v2559
        %v2570 = vpack.c.b16 %v2562, %v2561
        %v2579 = vunpack.c.l.b16 %v1445
        %v2580 = vunpack.c.l.b16 %v1449
        %v2581 = vunpack.c.l.b16 %v1453
        %v2582 = vunpack.c.l.b16 %v1457
        %v2583 = vunpack.c.l.b16 %v1461
        %v2584 = vunpack.c.l.b16 %v1465
        %v2585 = vunpack.c.l.b16 %v1469
        %v2586 = vunpack.c.l.b16 %v1473
        %v2587 = vunpack.c.l.b16 %v1477
        %v2588 = vunpack.c.l.b16 %v1481
        %v2589 = vunpack.c.l.b16 %v1485
        %v2590 = vunpack.c.l.b16 %v1489
        %v2591 = vunpack.c.l.b16 %v1493
        %v2592 = vunpack.c.l.b16 %v1497
        %v2593 = vunpack.c.l.b16 %v1501
        %v2594 = vunpack.c.l.b16 %v1505
        %v2595 = vpack.c.b16 %v2580, %v2579
        %v2596 = vpack.c.b16 %v2582, %v2581
        %v2597 = vpack.c.b16 %v2584, %v2583
        %v2598 = vpack.c.b16 %v2586, %v2585
        %v2599 = vpack.c.b16 %v2588, %v2587
        %v2600 = vpack.c.b16 %v2590, %v2589
        %v2601 = vpack.c.b16 %v2592, %v2591
        %v2602 = vpack.c.b16 %v2594, %v2593
        %v2627 = vunpack.c.l.b16 %v1506
        %v2628 = vunpack.c.l.b16 %v1507
        %v2629 = vunpack.c.l.b16 %v1508
        %v2630 = vunpack.c.l.b16 %v1509
        %v2631 = vunpack.c.l.b16 %v1510
        %v2632 = vunpack.c.l.b16 %v1511
        %v2633 = vunpack.c.l.b16 %v1512
        %v2634 = vunpack.c.l.b16 %v1513
        %v2635 = vunpack.c.l.b16 %v1514
        %v2636 = vunpack.c.l.b16 %v1515
        %v2637 = vunpack.c.l.b16 %v1516
        %v2638 = vunpack.c.l.b16 %v1517
        %v2639 = vunpack.c.l.b16 %v1518
        %v2640 = vunpack.c.l.b16 %v1519
        %v2641 = vunpack.c.l.b16 %v1520
        %v2642 = vunpack.c.l.b16 %v1521
        %v2643 = vpack.c.b16 %v2628, %v2627
        %v2644 = vpack.c.b16 %v2630, %v2629
        %v2645 = vpack.c.b16 %v2632, %v2631
        %v2646 = vpack.c.b16 %v2634, %v2633
        %v2647 = vpack.c.b16 %v2636, %v2635
        %v2648 = vpack.c.b16 %v2638, %v2637
        %v2649 = vpack.c.b16 %v2640, %v2639
        %v2650 = vpack.c.b16 %v2642, %v2641
        %v2659 = vunpack.c.l.b16 %v1631
        %v2660 = vunpack.c.l.b16 %v1645
        %v2661 = vunpack.c.l.b16 %v1659
        %v2662 = vunpack.c.l.b16 %v1673
        %v2663 = vunpack.c.l.b16 %v1687
        %v2664 = vunpack.c.l.b16 %v1701
        %v2665 = vunpack.c.l.b16 %v1715
        %v2666 = vunpack.c.l.b16 %v1729
        %v2667 = vunpack.c.l.b16 %v1743
        %v2668 = vunpack.c.l.b16 %v1757
        %v2669 = vunpack.c.l.b16 %v1771
        %v2670 = vunpack.c.l.b16 %v1785
        %v2671 = vunpack.c.l.b16 %v1799
        %v2672 = vunpack.c.l.b16 %v1813
        %v2673 = vunpack.c.l.b16 %v1827
        %v2674 = vunpack.c.l.b16 %v1841
        %v2675 = vpack.c.b16 %v2660, %v2659
        %v2676 = vpack.c.b16 %v2662, %v2661
        %v2677 = vpack.c.b16 %v2664, %v2663
        %v2678 = vpack.c.b16 %v2666, %v2665
        %v2679 = vpack.c.b16 %v2668, %v2667
        %v2680 = vpack.c.b16 %v2670, %v2669
        %v2681 = vpack.c.b16 %v2672, %v2671
        %v2682 = vpack.c.b16 %v2674, %v2673
        %v2691 = vunpack.c.l.b16 %v1941
        %v2692 = vunpack.c.l.b16 %v1945
        %v2693 = vunpack.c.l.b16 %v1949
        %v2694 = vunpack.c.l.b16 %v1953
        %v2695 = vunpack.c.l.b16 %v1957
        %v2696 = vunpack.c.l.b16 %v1961
        %v2697 = vunpack.c.l.b16 %v1965
        %v2698 = vunpack.c.l.b16 %v1969
        %v2699 = vunpack.c.l.b16 %v1973
        %v2700 = vunpack.c.l.b16 %v1977
        %v2701 = vunpack.c.l.b16 %v1981
        %v2702 = vunpack.c.l.b16 %v1985
        %v2703 = vunpack.c.l.b16 %v1989
        %v2704 = vunpack.c.l.b16 %v1993
        %v2705 = vunpack.c.l.b16 %v1997
        %v2706 = vunpack.c.l.b16 %v2001
        %v2707 = vpack.c.b16 %v2692, %v2691
        %v2708 = vpack.c.b16 %v2694, %v2693
        %v2709 = vpack.c.b16 %v2696, %v2695
        %v2710 = vpack.c.b16 %v2698, %v2697
        %v2711 = vpack.c.b16 %v2700, %v2699
        %v2712 = vpack.c.b16 %v2702, %v2701
        %v2713 = vpack.c.b16 %v2704, %v2703
        %v2714 = vpack.c.b16 %v2706, %v2705
        %v2739 = vunpack.c.l.b16 %v2003
        %v2740 = vunpack.c.l.b16 %v2004
        %v2741 = vunpack.c.l.b16 %v2005
        %v2742 = vunpack.c.l.b16 %v2006
        %v2743 = vunpack.c.l.b16 %v2007
        %v2744 = vunpack.c.l.b16 %v2008
        %v2745 = vunpack.c.l.b16 %v2009
        %v2746 = vunpack.c.l.b16 %v2010
        %v2747 = vunpack.c.l.b16 %v2011
        %v2748 = vunpack.c.l.b16 %v2012
        %v2749 = vunpack.c.l.b16 %v2013
        %v2750 = vunpack.c.l.b16 %v2014
        %v2751 = vunpack.c.l.b16 %v2015
        %v2752 = vunpack.c.l.b16 %v2016
        %v2753 = vunpack.c.l.b16 %v2017
        %v2754 = vunpack.c.l.b16 %v2018
        %v2755 = vpack.c.b16 %v2740, %v2739
        %v2756 = vpack.c.b16 %v2742, %v2741
        %v2757 = vpack.c.b16 %v2744, %v2743
        %v2758 = vpack.c.b16 %v2746, %v2745
        %v2759 = vpack.c.b16 %v2748, %v2747
        %v2760 = vpack.c.b16 %v2750, %v2749
        %v2761 = vpack.c.b16 %v2752, %v2751
        %v2762 = vpack.c.b16 %v2754, %v2753
        %v2771 = vunpack.c.l.b16 %v2128
        %v2772 = vunpack.c.l.b16 %v2142
        %v2773 = vunpack.c.l.b16 %v2156
        %v2774 = vunpack.c.l.b16 %v2170
        %v2775 = vunpack.c.l.b16 %v2184
        %v2776 = vunpack.c.l.b16 %v2198
        %v2777 = vunpack.c.l.b16 %v2212
        %v2778 = vunpack.c.l.b16 %v2226
        %v2779 = vunpack.c.l.b16 %v2240
        %v2780 = vunpack.c.l.b16 %v2254
        %v2781 = vunpack.c.l.b16 %v2268
        %v2782 = vunpack.c.l.b16 %v2282
        %v2783 = vunpack.c.l.b16 %v2296
        %v2784 = vunpack.c.l.b16 %v2310
        %v2785 = vunpack.c.l.b16 %v2324
        %v2786 = vunpack.c.l.b16 %v2338
        %v2787 = vpack.c.b16 %v2772, %v2771
        %v2788 = vpack.c.b16 %v2774, %v2773
        %v2789 = vpack.c.b16 %v2776, %v2775
        %v2790 = vpack.c.b16 %v2778, %v2777
        %v2791 = vpack.c.b16 %v2780, %v2779
        %v2792 = vpack.c.b16 %v2782, %v2781
        %v2793 = vpack.c.b16 %v2784, %v2783
        %v2794 = vpack.c.b16 %v2786, %v2785
        %v2803 = vunpack.c.l.b16 %v2438
        %v2804 = vunpack.c.l.b16 %v2442
        %v2805 = vunpack.c.l.b16 %v2446
        %v2806 = vunpack.c.l.b16 %v2450
        %v2807 = vunpack.c.l.b16 %v2454
        %v2808 = vunpack.c.l.b16 %v2458
        %v2809 = vunpack.c.l.b16 %v2462
        %v2810 = vunpack.c.l.b16 %v2466
        %v2811 = vunpack.c.l.b16 %v2470
        %v2812 = vunpack.c.l.b16 %v2474
        %v2813 = vunpack.c.l.b16 %v2478
        %v2814 = vunpack.c.l.b16 %v2482
        %v2815 = vunpack.c.l.b16 %v2486
        %v2816 = vunpack.c.l.b16 %v2490
        %v2817 = vunpack.c.l.b16 %v2494
        %v2818 = vunpack.c.l.b16 %v2498
        %v2819 = vpack.c.b16 %v2804, %v2803
        %v2820 = vpack.c.b16 %v2806, %v2805
        %v2821 = vpack.c.b16 %v2808, %v2807
        %v2822 = vpack.c.b16 %v2810, %v2809
        %v2823 = vpack.c.b16 %v2812, %v2811
        %v2824 = vpack.c.b16 %v2814, %v2813
        %v2825 = vpack.c.b16 %v2816, %v2815
        %v2826 = vpack.c.b16 %v2818, %v2817
        %v2835 = vld [vmem:[#allocation6] sm:$0xf]
        %v2836 = vld [vmem:[#allocation6 + $0x4] sm:$0xf]
        %v2837 = vld [vmem:[#allocation6 + $0x8] sm:$0xf]
        %v2838 = vld [vmem:[#allocation6 + $0xc] sm:$0xf]
        %v2839 = vld [vmem:[#allocation6 + $0x10] sm:$0xf]
        %v2840 = vld [vmem:[#allocation6 + $0x14] sm:$0xf]
        %v2841 = vld [vmem:[#allocation6 + $0x18] sm:$0xf]
        %v2842 = vld [vmem:[#allocation6 + $0x1c] sm:$0xf]
        %v2843 = vld [vmem:[#allocation6 + $0x20] sm:$0xf]
        %v2844 = vld [vmem:[#allocation6 + $0x24] sm:$0xf]
        %v2845 = vld [vmem:[#allocation6 + $0x28] sm:$0xf]
        %v2846 = vld [vmem:[#allocation6 + $0x2c] sm:$0xf]
        %v2847 = vld [vmem:[#allocation6 + $0x30] sm:$0xf]
        %v2848 = vld [vmem:[#allocation6 + $0x34] sm:$0xf]
        %v2849 = vld [vmem:[#allocation6 + $0x38] sm:$0xf]
        %v2850 = vld [vmem:[#allocation6 + $0x3c] sm:$0xf]
        %v2851 = vld [vmem:[#allocation6 + $0x40] sm:$0xf]
        %v2852 = vld [vmem:[#allocation6 + $0x44] sm:$0xf]
        %v2853 = vld [vmem:[#allocation6 + $0x48] sm:$0xf]
        %v2854 = vld [vmem:[#allocation6 + $0x4c] sm:$0xf]
        %v2855 = vld [vmem:[#allocation6 + $0x50] sm:$0xf]
        %v2856 = vld [vmem:[#allocation6 + $0x54] sm:$0xf]
        %v2857 = vld [vmem:[#allocation6 + $0x58] sm:$0xf]
        %v2858 = vld [vmem:[#allocation6 + $0x5c] sm:$0xf]
        %v2859 = vld [vmem:[#allocation6 + $0x60] sm:$0xf]
        %v2860 = vld [vmem:[#allocation6 + $0x64] sm:$0xf]
        %v2861 = vld [vmem:[#allocation6 + $0x68] sm:$0xf]
        %v2862 = vld [vmem:[#allocation6 + $0x6c] sm:$0xf]
        %v2863 = vld [vmem:[#allocation6 + $0x70] sm:$0xf]
        %v2864 = vld [vmem:[#allocation6 + $0x74] sm:$0xf]
        %v2865 = vld [vmem:[#allocation6 + $0x78] sm:$0xf]
        %v2866 = vld [vmem:[#allocation6 + $0x7c] sm:$0xf]
        %v2867 = vld [vmem:[#allocation6 + $0x80] sm:$0xf]
        %v2868 = vld [vmem:[#allocation6 + $0x84] sm:$0xf]
        %v2869 = vld [vmem:[#allocation6 + $0x88] sm:$0xf]
        %v2870 = vld [vmem:[#allocation6 + $0x8c] sm:$0xf]
        %v2871 = vld [vmem:[#allocation6 + $0x90] sm:$0xf]
        %v2872 = vld [vmem:[#allocation6 + $0x94] sm:$0xf]
        %v2873 = vld [vmem:[#allocation6 + $0x98] sm:$0xf]
        %v2874 = vld [vmem:[#allocation6 + $0x9c] sm:$0xf]
        %v2875 = vld [vmem:[#allocation6 + $0xa0] sm:$0xf]
        %v2876 = vld [vmem:[#allocation6 + $0xa4] sm:$0xf]
        %v2877 = vld [vmem:[#allocation6 + $0xa8] sm:$0xf]
        %v2878 = vld [vmem:[#allocation6 + $0xac] sm:$0xf]
        %v2879 = vld [vmem:[#allocation6 + $0xb0] sm:$0xf]
        %v2880 = vld [vmem:[#allocation6 + $0xb4] sm:$0xf]
        %v2881 = vld [vmem:[#allocation6 + $0xb8] sm:$0xf]
        %v2882 = vld [vmem:[#allocation6 + $0xbc] sm:$0xf]
        %v2883 = vld [vmem:[#allocation6 + $0xc0] sm:$0xf]
        %v2884 = vld [vmem:[#allocation6 + $0xc4] sm:$0xf]
        %v2885 = vld [vmem:[#allocation6 + $0xc8] sm:$0xf]
        %v2886 = vld [vmem:[#allocation6 + $0xcc] sm:$0xf]
        %v2887 = vld [vmem:[#allocation6 + $0xd0] sm:$0xf]
        %v2888 = vld [vmem:[#allocation6 + $0xd4] sm:$0xf]
        %v2889 = vld [vmem:[#allocation6 + $0xd8] sm:$0xf]
        %v2890 = vld [vmem:[#allocation6 + $0xdc] sm:$0xf]
        %v2891 = vld [vmem:[#allocation6 + $0xe0] sm:$0xf]
        %v2892 = vld [vmem:[#allocation6 + $0xe4] sm:$0xf]
        %v2893 = vld [vmem:[#allocation6 + $0xe8] sm:$0xf]
        %v2894 = vld [vmem:[#allocation6 + $0xec] sm:$0xf]
        %v2895 = vld [vmem:[#allocation6 + $0xf0] sm:$0xf]
        %v2896 = vld [vmem:[#allocation6 + $0xf4] sm:$0xf]
        %v2897 = vld [vmem:[#allocation6 + $0xf8] sm:$0xf]
        %v2898 = vld [vmem:[#allocation6 + $0xfc] sm:$0xf]
        %v2899 = vld [vmem:[#allocation6 + $0x100] sm:$0xf]
        %v2900 = vld [vmem:[#allocation6 + $0x104] sm:$0xf]
        %v2901 = vld [vmem:[#allocation6 + $0x108] sm:$0xf]
        %v2902 = vld [vmem:[#allocation6 + $0x10c] sm:$0xf]
        %v2903 = vld [vmem:[#allocation6 + $0x110] sm:$0xf]
        %v2904 = vld [vmem:[#allocation6 + $0x114] sm:$0xf]
        %v2905 = vld [vmem:[#allocation6 + $0x118] sm:$0xf]
        %v2906 = vld [vmem:[#allocation6 + $0x11c] sm:$0xf]
        %v2907 = vld [vmem:[#allocation6 + $0x120] sm:$0xf]
        %v2908 = vld [vmem:[#allocation6 + $0x124] sm:$0xf]
        %v2909 = vld [vmem:[#allocation6 + $0x128] sm:$0xf]
        %v2910 = vld [vmem:[#allocation6 + $0x12c] sm:$0xf]
        %v2911 = vld [vmem:[#allocation6 + $0x130] sm:$0xf]
        %v2912 = vld [vmem:[#allocation6 + $0x134] sm:$0xf]
        %v2913 = vld [vmem:[#allocation6 + $0x138] sm:$0xf]
        %v2914 = vld [vmem:[#allocation6 + $0x13c] sm:$0xf]
        %v2915 = vld [vmem:[#allocation6 + $0x140] sm:$0xf]
        %v2916 = vld [vmem:[#allocation6 + $0x144] sm:$0xf]
        %v2917 = vld [vmem:[#allocation6 + $0x148] sm:$0xf]
        %v2918 = vld [vmem:[#allocation6 + $0x14c] sm:$0xf]
        %v2919 = vld [vmem:[#allocation6 + $0x150] sm:$0xf]
        %v2920 = vld [vmem:[#allocation6 + $0x154] sm:$0xf]
        %v2921 = vld [vmem:[#allocation6 + $0x158] sm:$0xf]
        %v2922 = vld [vmem:[#allocation6 + $0x15c] sm:$0xf]
        %v2923 = vld [vmem:[#allocation6 + $0x160] sm:$0xf]
        %v2924 = vld [vmem:[#allocation6 + $0x164] sm:$0xf]
        %v2925 = vld [vmem:[#allocation6 + $0x168] sm:$0xf]
        %v2926 = vld [vmem:[#allocation6 + $0x16c] sm:$0xf]
        %v2927 = vld [vmem:[#allocation6 + $0x170] sm:$0xf]
        %v2928 = vld [vmem:[#allocation6 + $0x174] sm:$0xf]
        %v2929 = vld [vmem:[#allocation6 + $0x178] sm:$0xf]
        %v2930 = vld [vmem:[#allocation6 + $0x17c] sm:$0xf]
        %v2931 = vld [vmem:[#allocation6 + $0x180] sm:$0xf]
        %v2932 = vld [vmem:[#allocation6 + $0x184] sm:$0xf]
        %v2933 = vld [vmem:[#allocation6 + $0x188] sm:$0xf]
        %v2934 = vld [vmem:[#allocation6 + $0x18c] sm:$0xf]
        %v2935 = vld [vmem:[#allocation6 + $0x190] sm:$0xf]
        %v2936 = vld [vmem:[#allocation6 + $0x194] sm:$0xf]
        %v2937 = vld [vmem:[#allocation6 + $0x198] sm:$0xf]
        %v2938 = vld [vmem:[#allocation6 + $0x19c] sm:$0xf]
        %v2939 = vld [vmem:[#allocation6 + $0x1a0] sm:$0xf]
        %v2940 = vld [vmem:[#allocation6 + $0x1a4] sm:$0xf]
        %v2941 = vld [vmem:[#allocation6 + $0x1a8] sm:$0xf]
        %v2942 = vld [vmem:[#allocation6 + $0x1ac] sm:$0xf]
        %v2943 = vld [vmem:[#allocation6 + $0x1b0] sm:$0xf]
        %v2944 = vld [vmem:[#allocation6 + $0x1b4] sm:$0xf]
        %v2945 = vld [vmem:[#allocation6 + $0x1b8] sm:$0xf]
        %v2946 = vld [vmem:[#allocation6 + $0x1bc] sm:$0xf]
        %v2947 = vld [vmem:[#allocation6 + $0x1c0] sm:$0xf]
        %v2948 = vld [vmem:[#allocation6 + $0x1c4] sm:$0xf]
        %v2949 = vld [vmem:[#allocation6 + $0x1c8] sm:$0xf]
        %v2950 = vld [vmem:[#allocation6 + $0x1cc] sm:$0xf]
        %v2951 = vld [vmem:[#allocation6 + $0x1d0] sm:$0xf]
        %v2952 = vld [vmem:[#allocation6 + $0x1d4] sm:$0xf]
        %v2953 = vld [vmem:[#allocation6 + $0x1d8] sm:$0xf]
        %v2954 = vld [vmem:[#allocation6 + $0x1dc] sm:$0xf]
        %v2955 = vld [vmem:[#allocation6 + $0x1e0] sm:$0xf]
        %v2956 = vld [vmem:[#allocation6 + $0x1e4] sm:$0xf]
        %v2957 = vld [vmem:[#allocation6 + $0x1e8] sm:$0xf]
        %v2958 = vld [vmem:[#allocation6 + $0x1ec] sm:$0xf]
        %v2959 = vld [vmem:[#allocation6 + $0x1f0] sm:$0xf]
        %v2960 = vld [vmem:[#allocation6 + $0x1f4] sm:$0xf]
        %v2961 = vld [vmem:[#allocation6 + $0x1f8] sm:$0xf]
        %v2962 = vld [vmem:[#allocation6 + $0x1fc] sm:$0xf]
        %v2963 = vld [vmem:[#allocation6 + $0x200] sm:$0xf]
        %v2964 = vld [vmem:[#allocation6 + $0x204] sm:$0xf]
        %v2965 = vld [vmem:[#allocation6 + $0x208] sm:$0xf]
        %v2966 = vld [vmem:[#allocation6 + $0x20c] sm:$0xf]
        %v2967 = vld [vmem:[#allocation6 + $0x210] sm:$0xf]
        %v2968 = vld [vmem:[#allocation6 + $0x214] sm:$0xf]
        %v2969 = vld [vmem:[#allocation6 + $0x218] sm:$0xf]
        %v2970 = vld [vmem:[#allocation6 + $0x21c] sm:$0xf]
        %v2971 = vld [vmem:[#allocation6 + $0x220] sm:$0xf]
        %v2972 = vld [vmem:[#allocation6 + $0x224] sm:$0xf]
        %v2973 = vld [vmem:[#allocation6 + $0x228] sm:$0xf]
        %v2974 = vld [vmem:[#allocation6 + $0x22c] sm:$0xf]
        %v2975 = vld [vmem:[#allocation6 + $0x230] sm:$0xf]
        %v2976 = vld [vmem:[#allocation6 + $0x234] sm:$0xf]
        %v2977 = vld [vmem:[#allocation6 + $0x238] sm:$0xf]
        %v2978 = vld [vmem:[#allocation6 + $0x23c] sm:$0xf]
        %v3123 = vunpack.c.l.b16 %v2835
        %v3124 = vunpack.c.l.b16 %v2836
        %v3125 = vunpack.c.l.b16 %v2837
        %v3126 = vunpack.c.l.b16 %v2838
        %v3127 = vunpack.c.l.b16 %v2839
        %v3128 = vunpack.c.l.b16 %v2840
        %v3129 = vunpack.c.l.b16 %v2841
        %v3130 = vunpack.c.l.b16 %v2842
        %v3131 = vunpack.c.l.b16 %v2843
        %v3132 = vunpack.c.l.b16 %v2844
        %v3133 = vunpack.c.l.b16 %v2845
        %v3134 = vunpack.c.l.b16 %v2846
        %v3135 = vunpack.c.l.b16 %v2847
        %v3136 = vunpack.c.l.b16 %v2848
        %v3137 = vunpack.c.l.b16 %v2849
        %v3138 = vunpack.c.l.b16 %v2850
        %v3139 = vunpack.c.l.b16 %v2851
        %v3140 = vunpack.c.l.b16 %v2852
        %v3141 = vunpack.c.l.b16 %v2853
        %v3142 = vunpack.c.l.b16 %v2854
        %v3143 = vunpack.c.l.b16 %v2855
        %v3144 = vunpack.c.l.b16 %v2856
        %v3145 = vunpack.c.l.b16 %v2857
        %v3146 = vunpack.c.l.b16 %v2858
        %v3147 = vunpack.c.l.b16 %v2859
        %v3148 = vunpack.c.l.b16 %v2860
        %v3149 = vunpack.c.l.b16 %v2861
        %v3150 = vunpack.c.l.b16 %v2862
        %v3151 = vunpack.c.l.b16 %v2863
        %v3152 = vunpack.c.l.b16 %v2864
        %v3153 = vunpack.c.l.b16 %v2865
        %v3154 = vunpack.c.l.b16 %v2866
        %v3155 = vunpack.c.l.b16 %v2867
        %v3156 = vunpack.c.l.b16 %v2868
        %v3157 = vunpack.c.l.b16 %v2869
        %v3158 = vunpack.c.l.b16 %v2870
        %v3159 = vunpack.c.l.b16 %v2871
        %v3160 = vunpack.c.l.b16 %v2872
        %v3161 = vunpack.c.l.b16 %v2873
        %v3162 = vunpack.c.l.b16 %v2874
        %v3163 = vunpack.c.l.b16 %v2875
        %v3164 = vunpack.c.l.b16 %v2876
        %v3165 = vunpack.c.l.b16 %v2877
        %v3166 = vunpack.c.l.b16 %v2878
        %v3167 = vunpack.c.l.b16 %v2879
        %v3168 = vunpack.c.l.b16 %v2880
        %v3169 = vunpack.c.l.b16 %v2881
        %v3170 = vunpack.c.l.b16 %v2882
        %v3171 = vunpack.c.l.b16 %v2883
        %v3172 = vunpack.c.l.b16 %v2884
        %v3173 = vunpack.c.l.b16 %v2885
        %v3174 = vunpack.c.l.b16 %v2886
        %v3175 = vunpack.c.l.b16 %v2887
        %v3176 = vunpack.c.l.b16 %v2888
        %v3177 = vunpack.c.l.b16 %v2889
        %v3178 = vunpack.c.l.b16 %v2890
        %v3179 = vunpack.c.l.b16 %v2891
        %v3180 = vunpack.c.l.b16 %v2892
        %v3181 = vunpack.c.l.b16 %v2893
        %v3182 = vunpack.c.l.b16 %v2894
        %v3183 = vunpack.c.l.b16 %v2895
        %v3184 = vunpack.c.l.b16 %v2896
        %v3185 = vunpack.c.l.b16 %v2897
        %v3186 = vunpack.c.l.b16 %v2898
        %v3187 = vunpack.c.l.b16 %v2899
        %v3188 = vunpack.c.l.b16 %v2900
        %v3189 = vunpack.c.l.b16 %v2901
        %v3190 = vunpack.c.l.b16 %v2902
        %v3191 = vunpack.c.l.b16 %v2903
        %v3192 = vunpack.c.l.b16 %v2904
        %v3193 = vunpack.c.l.b16 %v2905
        %v3194 = vunpack.c.l.b16 %v2906
        %v3195 = vunpack.c.l.b16 %v2907
        %v3196 = vunpack.c.l.b16 %v2908
        %v3197 = vunpack.c.l.b16 %v2909
        %v3198 = vunpack.c.l.b16 %v2910
        %v3199 = vunpack.c.l.b16 %v2911
        %v3200 = vunpack.c.l.b16 %v2912
        %v3201 = vunpack.c.l.b16 %v2913
        %v3202 = vunpack.c.l.b16 %v2914
        %v3203 = vunpack.c.l.b16 %v2915
        %v3204 = vunpack.c.l.b16 %v2916
        %v3205 = vunpack.c.l.b16 %v2917
        %v3206 = vunpack.c.l.b16 %v2918
        %v3207 = vunpack.c.l.b16 %v2919
        %v3208 = vunpack.c.l.b16 %v2920
        %v3209 = vunpack.c.l.b16 %v2921
        %v3210 = vunpack.c.l.b16 %v2922
        %v3211 = vunpack.c.l.b16 %v2923
        %v3212 = vunpack.c.l.b16 %v2924
        %v3213 = vunpack.c.l.b16 %v2925
        %v3214 = vunpack.c.l.b16 %v2926
        %v3215 = vunpack.c.l.b16 %v2927
        %v3216 = vunpack.c.l.b16 %v2928
        %v3217 = vunpack.c.l.b16 %v2929
        %v3218 = vunpack.c.l.b16 %v2930
        %v3219 = vunpack.c.l.b16 %v2931
        %v3220 = vunpack.c.l.b16 %v2932
        %v3221 = vunpack.c.l.b16 %v2933
        %v3222 = vunpack.c.l.b16 %v2934
        %v3223 = vunpack.c.l.b16 %v2935
        %v3224 = vunpack.c.l.b16 %v2936
        %v3225 = vunpack.c.l.b16 %v2937
        %v3226 = vunpack.c.l.b16 %v2938
        %v3227 = vunpack.c.l.b16 %v2939
        %v3228 = vunpack.c.l.b16 %v2940
        %v3229 = vunpack.c.l.b16 %v2941
        %v3230 = vunpack.c.l.b16 %v2942
        %v3231 = vunpack.c.l.b16 %v2943
        %v3232 = vunpack.c.l.b16 %v2944
        %v3233 = vunpack.c.l.b16 %v2945
        %v3234 = vunpack.c.l.b16 %v2946
        %v3235 = vunpack.c.l.b16 %v2947
        %v3236 = vunpack.c.l.b16 %v2948
        %v3237 = vunpack.c.l.b16 %v2949
        %v3238 = vunpack.c.l.b16 %v2950
        %v3239 = vunpack.c.l.b16 %v2951
        %v3240 = vunpack.c.l.b16 %v2952
        %v3241 = vunpack.c.l.b16 %v2953
        %v3242 = vunpack.c.l.b16 %v2954
        %v3243 = vunpack.c.l.b16 %v2955
        %v3244 = vunpack.c.l.b16 %v2956
        %v3245 = vunpack.c.l.b16 %v2957
        %v3246 = vunpack.c.l.b16 %v2958
        %v3247 = vunpack.c.l.b16 %v2959
        %v3248 = vunpack.c.l.b16 %v2960
        %v3249 = vunpack.c.l.b16 %v2961
        %v3250 = vunpack.c.l.b16 %v2962
        %v3251 = vunpack.c.l.b16 %v2963
        %v3252 = vunpack.c.l.b16 %v2964
        %v3253 = vunpack.c.l.b16 %v2965
        %v3254 = vunpack.c.l.b16 %v2966
        %v3255 = vunpack.c.l.b16 %v2967
        %v3256 = vunpack.c.l.b16 %v2968
        %v3257 = vunpack.c.l.b16 %v2969
        %v3258 = vunpack.c.l.b16 %v2970
        %v3259 = vunpack.c.l.b16 %v2971
        %v3260 = vunpack.c.l.b16 %v2972
        %v3261 = vunpack.c.l.b16 %v2973
        %v3262 = vunpack.c.l.b16 %v2974
        %v3263 = vunpack.c.l.b16 %v2975
        %v3264 = vunpack.c.l.b16 %v2976
        %v3265 = vunpack.c.l.b16 %v2977
        %v3266 = vunpack.c.l.b16 %v2978
        %v3267 = vpack.c.b16 %v3124, %v3123
        %v3268 = vpack.c.b16 %v3126, %v3125
        %v3269 = vpack.c.b16 %v3128, %v3127
        %v3270 = vpack.c.b16 %v3130, %v3129
        %v3271 = vpack.c.b16 %v3132, %v3131
        %v3272 = vpack.c.b16 %v3134, %v3133
        %v3273 = vpack.c.b16 %v3136, %v3135
        %v3274 = vpack.c.b16 %v3138, %v3137
        %v3275 = vpack.c.b16 %v3140, %v3139
        %v3276 = vpack.c.b16 %v3142, %v3141
        %v3277 = vpack.c.b16 %v3144, %v3143
        %v3278 = vpack.c.b16 %v3146, %v3145
        %v3279 = vpack.c.b16 %v3148, %v3147
        %v3280 = vpack.c.b16 %v3150, %v3149
        %v3281 = vpack.c.b16 %v3152, %v3151
        %v3282 = vpack.c.b16 %v3154, %v3153
        %v3283 = vpack.c.b16 %v3156, %v3155
        %v3284 = vpack.c.b16 %v3158, %v3157
        %v3285 = vpack.c.b16 %v3160, %v3159
        %v3286 = vpack.c.b16 %v3162, %v3161
        %v3287 = vpack.c.b16 %v3164, %v3163
        %v3288 = vpack.c.b16 %v3166, %v3165
        %v3289 = vpack.c.b16 %v3168, %v3167
        %v3290 = vpack.c.b16 %v3170, %v3169
        %v3291 = vpack.c.b16 %v3172, %v3171
        %v3292 = vpack.c.b16 %v3174, %v3173
        %v3293 = vpack.c.b16 %v3176, %v3175
        %v3294 = vpack.c.b16 %v3178, %v3177
        %v3295 = vpack.c.b16 %v3180, %v3179
        %v3296 = vpack.c.b16 %v3182, %v3181
        %v3297 = vpack.c.b16 %v3184, %v3183
        %v3298 = vpack.c.b16 %v3186, %v3185
        %v3299 = vpack.c.b16 %v3188, %v3187
        %v3300 = vpack.c.b16 %v3190, %v3189
        %v3301 = vpack.c.b16 %v3192, %v3191
        %v3302 = vpack.c.b16 %v3194, %v3193
        %v3303 = vpack.c.b16 %v3196, %v3195
        %v3304 = vpack.c.b16 %v3198, %v3197
        %v3305 = vpack.c.b16 %v3200, %v3199
        %v3306 = vpack.c.b16 %v3202, %v3201
        %v3307 = vpack.c.b16 %v3204, %v3203
        %v3308 = vpack.c.b16 %v3206, %v3205
        %v3309 = vpack.c.b16 %v3208, %v3207
        %v3310 = vpack.c.b16 %v3210, %v3209
        %v3311 = vpack.c.b16 %v3212, %v3211
        %v3312 = vpack.c.b16 %v3214, %v3213
        %v3313 = vpack.c.b16 %v3216, %v3215
        %v3314 = vpack.c.b16 %v3218, %v3217
        %v3315 = vpack.c.b16 %v3220, %v3219
        %v3316 = vpack.c.b16 %v3222, %v3221
        %v3317 = vpack.c.b16 %v3224, %v3223
        %v3318 = vpack.c.b16 %v3226, %v3225
        %v3319 = vpack.c.b16 %v3228, %v3227
        %v3320 = vpack.c.b16 %v3230, %v3229
        %v3321 = vpack.c.b16 %v3232, %v3231
        %v3322 = vpack.c.b16 %v3234, %v3233
        %v3323 = vpack.c.b16 %v3236, %v3235
        %v3324 = vpack.c.b16 %v3238, %v3237
        %v3325 = vpack.c.b16 %v3240, %v3239
        %v3326 = vpack.c.b16 %v3242, %v3241
        %v3327 = vpack.c.b16 %v3244, %v3243
        %v3328 = vpack.c.b16 %v3246, %v3245
        %v3329 = vpack.c.b16 %v3248, %v3247
        %v3330 = vpack.c.b16 %v3250, %v3249
        %v3331 = vpack.c.b16 %v3252, %v3251
        %v3332 = vpack.c.b16 %v3254, %v3253
        %v3333 = vpack.c.b16 %v3256, %v3255
        %v3334 = vpack.c.b16 %v3258, %v3257
        %v3335 = vpack.c.b16 %v3260, %v3259
        %v3336 = vpack.c.b16 %v3262, %v3261
        %v3337 = vpack.c.b16 %v3264, %v3263
        %v3338 = vpack.c.b16 %v3266, %v3265
        %3411 = vmatprep.subr.bf16.mxu0 0
        %3412 = vmatpush1.bf16.msra.mxu0 %v3267
        %3413 = vmatprep.subr.bf16.mxu0 0
        %3414 = vmatpush1.bf16.msra.mxu0 %v3268
        %3415 = vmatprep.subr.bf16.mxu0 0
        %3416 = vmatpush1.bf16.msra.mxu0 %v3269
        %3417 = vmatprep.subr.bf16.mxu0 0
        %3418 = vmatpush1.bf16.msra.mxu0 %v3270
        %3419 = vmatprep.subr.bf16.mxu0 0
        %3420 = vmatpush1.bf16.msra.mxu0 %v3271
        %3421 = vmatprep.subr.bf16.mxu0 0
        %3422 = vmatpush1.bf16.msra.mxu0 %v3272
        %3423 = vmatprep.subr.bf16.mxu0 0
        %3424 = vmatpush1.bf16.msra.mxu0 %v3273
        %3425 = vmatprep.subr.bf16.mxu0 0
        %3426 = vmatpush1.bf16.msra.mxu0 %v3274
        %3427 = vmatprep.subr.bf16.mxu0 0
        %3428 = vmatpush1.bf16.msra.mxu0 %v3275
        %3429 = vmatprep.subr.bf16.mxu0 0
        %3430 = vmatpush1.bf16.msra.mxu0 %v3276
        %3431 = vmatprep.subr.bf16.mxu0 0
        %3432 = vmatpush1.bf16.msra.mxu0 %v3277
        %3433 = vmatprep.subr.bf16.mxu0 0
        %3434 = vmatpush1.bf16.msra.mxu0 %v3278
        %3435 = vmatprep.subr.bf16.mxu0 0
        %3436 = vmatpush1.bf16.msra.mxu0 %v3279
        %3437 = vmatprep.subr.bf16.mxu0 0
        %3438 = vmatpush1.bf16.msra.mxu0 %v3280
        %3439 = vmatprep.subr.bf16.mxu0 0
        %3440 = vmatpush1.bf16.msra.mxu0 %v3281
        %3441 = vmatprep.subr.bf16.mxu0 0
        %3442 = vmatpush1.bf16.msra.mxu0 %v3282
        %3443 = vmatprep.mubr.bf16.mxu0 %v2563
        %3444 = vmatmul.mubr.bf16.gmra.mrb[0].mxu0 %v2531
        %v3445 = vpop.f32.mrb[0].mxu0
        %v3446 = vadd.f32 0.0, %v3445
        %v3447 = vpop.f32.mrb[0].mxu0
        %v3448 = vpop.f32.mrb[0].mxu0
        %v3449 = vadd.f32 0.0, %v3448
        %v3450 = vpop.f32.mrb[0].mxu0
        %3451 = vmatprep.mubr.bf16.mxu0 %v2564
        %3452 = vmatmul.mubr.bf16.gmra.mrb[0].mxu0 %v2532
        %v3453 = vpop.f32.mrb[0].mxu0
        %v3454 = vadd.f32 0.0, %v3453
        %v3455 = vpop.f32.mrb[0].mxu0
        %v3456 = vpop.f32.mrb[0].mxu0
        %v3457 = vadd.f32 0.0, %v3456
        %v3458 = vpop.f32.mrb[0].mxu0
        %3459 = vmatprep.mubr.bf16.mxu0 %v2565
        %3460 = vmatmul.mubr.bf16.gmra.mrb[0].mxu0 %v2533
        %v3461 = vpop.f32.mrb[0].mxu0
        %v3462 = vadd.f32 0.0, %v3461
        %v3463 = vpop.f32.mrb[0].mxu0
        %v3464 = vpop.f32.mrb[0].mxu0
        %v3465 = vadd.f32 0.0, %v3464
        %v3466 = vpop.f32.mrb[0].mxu0
        %3467 = vmatprep.mubr.bf16.mxu0 %v2566
        %3468 = vmatmul.mubr.bf16.gmra.mrb[0].mxu0 %v2534
        %v3469 = vpop.f32.mrb[0].mxu0
        %v3470 = vadd.f32 0.0, %v3469
        %v3471 = vpop.f32.mrb[0].mxu0
        %v3472 = vpop.f32.mrb[0].mxu0
        %v3473 = vadd.f32 0.0, %v3472
        %v3474 = vpop.f32.mrb[0].mxu0
        %3475 = vmatprep.mubr.bf16.mxu0 %v2567
        %3476 = vmatmul.mubr.bf16.gmra.mrb[0].mxu0 %v2535
        %v3477 = vpop.f32.mrb[0].mxu0
        %v3478 = vadd.f32 0.0, %v3477
        %v3479 = vpop.f32.mrb[0].mxu0
        %v3480 = vpop.f32.mrb[0].mxu0
        %v3481 = vadd.f32 0.0, %v3480
        %v3482 = vpop.f32.mrb[0].mxu0
        %3483 = vmatprep.mubr.bf16.mxu0 %v2568
        %3484 = vmatmul.mubr.bf16.gmra.mrb[0].mxu0 %v2536
        %v3485 = vpop.f32.mrb[0].mxu0
        %v3486 = vadd.f32 0.0, %v3485
        %v3487 = vpop.f32.mrb[0].mxu0
        %v3488 = vpop.f32.mrb[0].mxu0
        %v3489 = vadd.f32 0.0, %v3488
        %v3490 = vpop.f32.mrb[0].mxu0
        %3491 = vmatprep.mubr.bf16.mxu0 %v2569
        %3492 = vmatmul.mubr.bf16.gmra.mrb[0].mxu0 %v2537
        %v3493 = vpop.f32.mrb[0].mxu0
        %v3494 = vadd.f32 0.0, %v3493
        %v3495 = vpop.f32.mrb[0].mxu0
        %v3496 = vpop.f32.mrb[0].mxu0
        %v3497 = vadd.f32 0.0, %v3496
        %v3498 = vpop.f32.mrb[0].mxu0
        %3499 = vmatprep.mubr.bf16.mxu0 %v2570
        %3500 = vmatmul.mubr.bf16.gmra.mrb[0].mxu0 %v2538
        %v3501 = vpop.f32.mrb[0].mxu0
        %v3502 = vadd.f32 0.0, %v3501
        %v3503 = vpop.f32.mrb[0].mxu0
        %v3504 = vpop.f32.mrb[0].mxu0
        %v3505 = vadd.f32 0.0, %v3504
        %v3506 = vpop.f32.mrb[0].mxu0
        %3507 = vdwg.mxu0
        %3508 = vmatprep.subr.bf16.mxu0 0
        %3509 = vmatpush1.bf16.msra.mxu0 %v3283
        %3510 = vmatprep.subr.bf16.mxu0 0
        %3511 = vmatpush1.bf16.msra.mxu0 %v3284
        %3512 = vmatprep.subr.bf16.mxu0 0
        %3513 = vmatpush1.bf16.msra.mxu0 %v3285
        %3514 = vmatprep.subr.bf16.mxu0 0
        %3515 = vmatpush1.bf16.msra.mxu0 %v3286
        %3516 = vmatprep.subr.bf16.mxu0 0
        %3517 = vmatpush1.bf16.msra.mxu0 %v3287
        %3518 = vmatprep.subr.bf16.mxu0 0
        %3519 = vmatpush1.bf16.msra.mxu0 %v3288
        %3520 = vmatprep.subr.bf16.mxu0 0
        %3521 = vmatpush1.bf16.msra.mxu0 %v3289
        %3522 = vmatprep.subr.bf16.mxu0 0
        %3523 = vmatpush1.bf16.msra.mxu0 %v3290
        %3524 = vmatprep.subr.bf16.mxu0 0
        %3525 = vmatpush1.bf16.msra.mxu0 %v3291
        %3526 = vmatprep.subr.bf16.mxu0 0
        %3527 = vmatpush1.bf16.msra.mxu0 %v3292
        %3528 = vmatprep.subr.bf16.mxu0 0
        %3529 = vmatpush1.bf16.msra.mxu0 %v3293
        %3530 = vmatprep.subr.bf16.mxu0 0
        %3531 = vmatpush1.bf16.msra.mxu0 %v3294
        %3532 = vmatprep.subr.bf16.mxu0 0
        %3533 = vmatpush1.bf16.msra.mxu0 %v3295
        %3534 = vmatprep.subr.bf16.mxu0 0
        %3535 = vmatpush1.bf16.msra.mxu0 %v3296
        %3536 = vmatprep.subr.bf16.mxu0 0
        %3537 = vmatpush1.bf16.msra.mxu0 %v3297
        %3538 = vmatprep.subr.bf16.mxu0 0
        %3539 = vmatpush1.bf16.msra.mxu0 %v3298
        %3540 = vmatprep.mubr.bf16.mxu0 %v2643
        %3541 = vmatmul.mubr.bf16.gmra.mrb[0].mxu0 %v2595
        %v3542 = vpop.f32.mrb[0].mxu0
        %v3543 = vadd.f32 %v3446, %v3542
        %v3544 = vpop.f32.mrb[0].mxu0
        %v3545 = vpop.f32.mrb[0].mxu0
        %v3546 = vadd.f32 %v3449, %v3545
        %v3547 = vpop.f32.mrb[0].mxu0
        %3548 = vmatprep.mubr.bf16.mxu0 %v2644
        %3549 = vmatmul.mubr.bf16.gmra.mrb[0].mxu0 %v2596
        %v3550 = vpop.f32.mrb[0].mxu0
        %v3551 = vadd.f32 %v3454, %v3550
        %v3552 = vpop.f32.mrb[0].mxu0
        %v3553 = vpop.f32.mrb[0].mxu0
        %v3554 = vadd.f32 %v3457, %v3553
        %v3555 = vpop.f32.mrb[0].mxu0
        %3556 = vmatprep.mubr.bf16.mxu0 %v2645
        %3557 = vmatmul.mubr.bf16.gmra.mrb[0].mxu0 %v2597
        %v3558 = vpop.f32.mrb[0].mxu0
        %v3559 = vadd.f32 %v3462, %v3558
        %v3560 = vpop.f32.mrb[0].mxu0
        %v3561 = vpop.f32.mrb[0].mxu0
        %v3562 = vadd.f32 %v3465, %v3561
        %v3563 = vpop.f32.mrb[0].mxu0
        %3564 = vmatprep.mubr.bf16.mxu0 %v2646
        %3565 = vmatmul.mubr.bf16.gmra.mrb[0].mxu0 %v2598
        %v3566 = vpop.f32.mrb[0].mxu0
        %v3567 = vadd.f32 %v3470, %v3566
        %v3568 = vpop.f32.mrb[0].mxu0
        %v3569 = vpop.f32.mrb[0].mxu0
        %v3570 = vadd.f32 %v3473, %v3569
        %v3571 = vpop.f32.mrb[0].mxu0
        %3572 = vmatprep.mubr.bf16.mxu0 %v2647
        %3573 = vmatmul.mubr.bf16.gmra.mrb[0].mxu0 %v2599
        %v3574 = vpop.f32.mrb[0].mxu0
        %v3575 = vadd.f32 %v3478, %v3574
        %v3576 = vpop.f32.mrb[0].mxu0
        %v3577 = vpop.f32.mrb[0].mxu0
        %v3578 = vadd.f32 %v3481, %v3577
        %v3579 = vpop.f32.mrb[0].mxu0
        %3580 = vmatprep.mubr.bf16.mxu0 %v2648
        %3581 = vmatmul.mubr.bf16.gmra.mrb[0].mxu0 %v2600
        %v3582 = vpop.f32.mrb[0].mxu0
        %v3583 = vadd.f32 %v3486, %v3582
        %v3584 = vpop.f32.mrb[0].mxu0
        %v3585 = vpop.f32.mrb[0].mxu0
        %v3586 = vadd.f32 %v3489, %v3585
        %v3587 = vpop.f32.mrb[0].mxu0
        %3588 = vmatprep.mubr.bf16.mxu0 %v2649
        %3589 = vmatmul.mubr.bf16.gmra.mrb[0].mxu0 %v2601
        %v3590 = vpop.f32.mrb[0].mxu0
        %v3591 = vadd.f32 %v3494, %v3590
        %v3592 = vpop.f32.mrb[0].mxu0
        %v3593 = vpop.f32.mrb[0].mxu0
        %v3594 = vadd.f32 %v3497, %v3593
        %v3595 = vpop.f32.mrb[0].mxu0
        %3596 = vmatprep.mubr.bf16.mxu0 %v2650
        %3597 = vmatmul.mubr.bf16.gmra.mrb[0].mxu0 %v2602
        %v3598 = vpop.f32.mrb[0].mxu0
        %v3599 = vadd.f32 %v3502, %v3598
        %v3600 = vpop.f32.mrb[0].mxu0
        %v3601 = vpop.f32.mrb[0].mxu0
        %v3602 = vadd.f32 %v3505, %v3601
        %v3603 = vpop.f32.mrb[0].mxu0
        %3604 = vdwg.mxu0
        %3605 = vmatprep.subr.bf16.mxu0 0
        %3606 = vmatpush1.bf16.msra.mxu0 %v3299
        %3607 = vmatprep.subr.bf16.mxu0 0
        %3608 = vmatpush1.bf16.msra.mxu0 %v3300
        %3609 = vmatprep.subr.bf16.mxu0 0
        %3610 = vmatpush1.bf16.msra.mxu0 %v3301
        %3611 = vmatprep.subr.bf16.mxu0 0
        %3612 = vmatpush1.bf16.msra.mxu0 %v3302
        %3613 = vmatprep.subr.bf16.mxu0 0
        %3614 = vmatpush1.bf16.msra.mxu0 %v3303
        %3615 = vmatprep.subr.bf16.mxu0 0
        %3616 = vmatpush1.bf16.msra.mxu0 %v3304
        %3617 = vmatprep.subr.bf16.mxu0 0
        %3618 = vmatpush1.bf16.msra.mxu0 %v3305
        %3619 = vmatprep.subr.bf16.mxu0 0
        %3620 = vmatpush1.bf16.msra.mxu0 %v3306
        %3621 = vmatprep.subr.bf16.mxu0 0
        %3622 = vmatpush1.bf16.msra.mxu0 %v3307
        %3623 = vmatprep.subr.bf16.mxu0 0
        %3624 = vmatpush1.bf16.msra.mxu0 %v3308
        %3625 = vmatprep.subr.bf16.mxu0 0
        %3626 = vmatpush1.bf16.msra.mxu0 %v3309
        %3627 = vmatprep.subr.bf16.mxu0 0
        %3628 = vmatpush1.bf16.msra.mxu0 %v3310
        %3629 = vmatprep.subr.bf16.mxu0 0
        %3630 = vmatpush1.bf16.msra.mxu0 %v3311
        %3631 = vmatprep.subr.bf16.mxu0 0
        %3632 = vmatpush1.bf16.msra.mxu0 %v3312
        %3633 = vmatprep.subr.bf16.mxu0 0
        %3634 = vmatpush1.bf16.msra.mxu0 %v3313
        %3635 = vmatprep.subr.bf16.mxu0 0
        %3636 = vmatpush1.bf16.msra.mxu0 %v3314
        %3637 = vmatprep.mubr.bf16.mxu0 %v2707
        %3638 = vmatmul.mubr.bf16.gmra.mrb[0].mxu0 %v2675
        %v3639 = vpop.f32.mrb[0].mxu0
        %v3640 = vadd.f32 %v3543, %v3639
        %v3641 = vpop.f32.mrb[0].mxu0
        %v3642 = vpop.f32.mrb[0].mxu0
        %v3643 = vadd.f32 %v3546, %v3642
        %v3644 = vpop.f32.mrb[0].mxu0
        %3645 = vmatprep.mubr.bf16.mxu0 %v2708
        %3646 = vmatmul.mubr.bf16.gmra.mrb[0].mxu0 %v2676
        %v3647 = vpop.f32.mrb[0].mxu0
        %v3648 = vadd.f32 %v3551, %v3647
        %v3649 = vpop.f32.mrb[0].mxu0
        %v3650 = vpop.f32.mrb[0].mxu0
        %v3651 = vadd.f32 %v3554, %v3650
        %v3652 = vpop.f32.mrb[0].mxu0
        %3653 = vmatprep.mubr.bf16.mxu0 %v2709
        %3654 = vmatmul.mubr.bf16.gmra.mrb[0].mxu0 %v2677
        %v3655 = vpop.f32.mrb[0].mxu0
        %v3656 = vadd.f32 %v3559, %v3655
        %v3657 = vpop.f32.mrb[0].mxu0
        %v3658 = vpop.f32.mrb[0].mxu0
        %v3659 = vadd.f32 %v3562, %v3658
        %v3660 = vpop.f32.mrb[0].mxu0
        %3661 = vmatprep.mubr.bf16.mxu0 %v2710
        %3662 = vmatmul.mubr.bf16.gmra.mrb[0].mxu0 %v2678
        %v3663 = vpop.f32.mrb[0].mxu0
        %v3664 = vadd.f32 %v3567, %v3663
        %v3665 = vpop.f32.mrb[0].mxu0
        %v3666 = vpop.f32.mrb[0].mxu0
        %v3667 = vadd.f32 %v3570, %v3666
        %v3668 = vpop.f32.mrb[0].mxu0
        %3669 = vmatprep.mubr.bf16.mxu0 %v2711
        %3670 = vmatmul.mubr.bf16.gmra.mrb[0].mxu0 %v2679
        %v3671 = vpop.f32.mrb[0].mxu0
        %v3672 = vadd.f32 %v3575, %v3671
        %v3673 = vpop.f32.mrb[0].mxu0
        %v3674 = vpop.f32.mrb[0].mxu0
        %v3675 = vadd.f32 %v3578, %v3674
        %v3676 = vpop.f32.mrb[0].mxu0
        %3677 = vmatprep.mubr.bf16.mxu0 %v2712
        %3678 = vmatmul.mubr.bf16.gmra.mrb[0].mxu0 %v2680
        %v3679 = vpop.f32.mrb[0].mxu0
        %v3680 = vadd.f32 %v3583, %v3679
        %v3681 = vpop.f32.mrb[0].mxu0
        %v3682 = vpop.f32.mrb[0].mxu0
        %v3683 = vadd.f32 %v3586, %v3682
        %v3684 = vpop.f32.mrb[0].mxu0
        %3685 = vmatprep.mubr.bf16.mxu0 %v2713
        %3686 = vmatmul.mubr.bf16.gmra.mrb[0].mxu0 %v2681
        %v3687 = vpop.f32.mrb[0].mxu0
        %v3688 = vadd.f32 %v3591, %v3687
        %v3689 = vpop.f32.mrb[0].mxu0
        %v3690 = vpop.f32.mrb[0].mxu0
        %v3691 = vadd.f32 %v3594, %v3690
        %v3692 = vpop.f32.mrb[0].mxu0
        %3693 = vmatprep.mubr.bf16.mxu0 %v2714
        %3694 = vmatmul.mubr.bf16.gmra.mrb[0].mxu0 %v2682
        %v3695 = vpop.f32.mrb[0].mxu0
        %v3696 = vadd.f32 %v3599, %v3695
        %v3697 = vpop.f32.mrb[0].mxu0
        %v3698 = vpop.f32.mrb[0].mxu0
        %v3699 = vadd.f32 %v3602, %v3698
        %v3700 = vpop.f32.mrb[0].mxu0
        %3701 = vdwg.mxu0
        %3702 = vmatprep.subr.bf16.mxu0 0
        %3703 = vmatpush1.bf16.msra.mxu0 %v3315
        %3704 = vmatprep.subr.bf16.mxu0 0
        %3705 = vmatpush1.bf16.msra.mxu0 %v3316
        %3706 = vmatprep.subr.bf16.mxu0 0
        %3707 = vmatpush1.bf16.msra.mxu0 %v3317
        %3708 = vmatprep.subr.bf16.mxu0 0
        %3709 = vmatpush1.bf16.msra.mxu0 %v3318
        %3710 = vmatprep.subr.bf16.mxu0 0
        %3711 = vmatpush1.bf16.msra.mxu0 %v3319
        %3712 = vmatprep.subr.bf16.mxu0 0
        %3713 = vmatpush1.bf16.msra.mxu0 %v3320
        %3714 = vmatprep.subr.bf16.mxu0 0
        %3715 = vmatpush1.bf16.msra.mxu0 %v3321
        %3716 = vmatprep.subr.bf16.mxu0 0
        %3717 = vmatpush1.bf16.msra.mxu0 %v3322
        %3718 = vmatprep.subr.bf16.mxu0 0
        %3719 = vmatpush1.bf16.msra.mxu0 %v3323
        %3720 = vmatprep.subr.bf16.mxu0 0
        %3721 = vmatpush1.bf16.msra.mxu0 %v3324
        %3722 = vmatprep.subr.bf16.mxu0 0
        %3723 = vmatpush1.bf16.msra.mxu0 %v3325
        %3724 = vmatprep.subr.bf16.mxu0 0
        %3725 = vmatpush1.bf16.msra.mxu0 %v3326
        %3726 = vmatprep.subr.bf16.mxu0 0
        %3727 = vmatpush1.bf16.msra.mxu0 %v3327
        %3728 = vmatprep.subr.bf16.mxu0 0
        %3729 = vmatpush1.bf16.msra.mxu0 %v3328
        %3730 = vmatprep.subr.bf16.mxu0 0
        %3731 = vmatpush1.bf16.msra.mxu0 %v3329
        %3732 = vmatprep.subr.bf16.mxu0 0
        %3733 = vmatpush1.bf16.msra.mxu0 %v3330
        %3734 = vmatprep.mubr.bf16.mxu0 %v2787
        %3735 = vmatmul.mubr.bf16.gmra.mrb[0].mxu0 %v2755
        %v3736 = vpop.f32.mrb[0].mxu0
        %v3737 = vadd.f32 %v3640, %v3736
        %v3738 = vpop.f32.mrb[0].mxu0
        %v3739 = vpop.f32.mrb[0].mxu0
        %v3740 = vadd.f32 %v3643, %v3739
        %v3741 = vpop.f32.mrb[0].mxu0
        %3742 = vmatprep.mubr.bf16.mxu0 %v2788
        %3743 = vmatmul.mubr.bf16.gmra.mrb[0].mxu0 %v2756
        %v3744 = vpop.f32.mrb[0].mxu0
        %v3745 = vadd.f32 %v3648, %v3744
        %v3746 = vpop.f32.mrb[0].mxu0
        %v3747 = vpop.f32.mrb[0].mxu0
        %v3748 = vadd.f32 %v3651, %v3747
        %v3749 = vpop.f32.mrb[0].mxu0
        %3750 = vmatprep.mubr.bf16.mxu0 %v2789
        %3751 = vmatmul.mubr.bf16.gmra.mrb[0].mxu0 %v2757
        %v3752 = vpop.f32.mrb[0].mxu0
        %v3753 = vadd.f32 %v3656, %v3752
        %v3754 = vpop.f32.mrb[0].mxu0
        %v3755 = vpop.f32.mrb[0].mxu0
        %v3756 = vadd.f32 %v3659, %v3755
        %v3757 = vpop.f32.mrb[0].mxu0
        %3758 = vmatprep.mubr.bf16.mxu0 %v2790
        %3759 = vmatmul.mubr.bf16.gmra.mrb[0].mxu0 %v2758
        %v3760 = vpop.f32.mrb[0].mxu0
        %v3761 = vadd.f32 %v3664, %v3760
        %v3762 = vpop.f32.mrb[0].mxu0
        %v3763 = vpop.f32.mrb[0].mxu0
        %v3764 = vadd.f32 %v3667, %v3763
        %v3765 = vpop.f32.mrb[0].mxu0
        %3766 = vmatprep.mubr.bf16.mxu0 %v2791
        %3767 = vmatmul.mubr.bf16.gmra.mrb[0].mxu0 %v2759
        %v3768 = vpop.f32.mrb[0].mxu0
        %v3769 = vadd.f32 %v3672, %v3768
        %v3770 = vpop.f32.mrb[0].mxu0
        %v3771 = vpop.f32.mrb[0].mxu0
        %v3772 = vadd.f32 %v3675, %v3771
        %v3773 = vpop.f32.mrb[0].mxu0
        %3774 = vmatprep.mubr.bf16.mxu0 %v2792
        %3775 = vmatmul.mubr.bf16.gmra.mrb[0].mxu0 %v2760
        %v3776 = vpop.f32.mrb[0].mxu0
        %v3777 = vadd.f32 %v3680, %v3776
        %v3778 = vpop.f32.mrb[0].mxu0
        %v3779 = vpop.f32.mrb[0].mxu0
        %v3780 = vadd.f32 %v3683, %v3779
        %v3781 = vpop.f32.mrb[0].mxu0
        %3782 = vmatprep.mubr.bf16.mxu0 %v2793
        %3783 = vmatmul.mubr.bf16.gmra.mrb[0].mxu0 %v2761
        %v3784 = vpop.f32.mrb[0].mxu0
        %v3785 = vadd.f32 %v3688, %v3784
        %v3786 = vpop.f32.mrb[0].mxu0
        %v3787 = vpop.f32.mrb[0].mxu0
        %v3788 = vadd.f32 %v3691, %v3787
        %v3789 = vpop.f32.mrb[0].mxu0
        %3790 = vmatprep.mubr.bf16.mxu0 %v2794
        %3791 = vmatmul.mubr.bf16.gmra.mrb[0].mxu0 %v2762
        %v3792 = vpop.f32.mrb[0].mxu0
        %v3793 = vadd.f32 %v3696, %v3792
        %v3794 = vpop.f32.mrb[0].mxu0
        %v3795 = vpop.f32.mrb[0].mxu0
        %v3796 = vadd.f32 %v3699, %v3795
        %v3797 = vpop.f32.mrb[0].mxu0
        %3798 = vdwg.mxu0
        %3799 = vmatprep.subr.bf16.mxu0 0
        %3800 = vmatpush1.bf16.msra.mxu0 %v3331
        %3801 = vmatprep.subr.bf16.mxu0 0
        %3802 = vmatpush1.bf16.msra.mxu0 %v3332
        %3803 = vmatprep.subr.bf16.mxu0 0
        %3804 = vmatpush1.bf16.msra.mxu0 %v3333
        %3805 = vmatprep.subr.bf16.mxu0 0
        %3806 = vmatpush1.bf16.msra.mxu0 %v3334
        %3807 = vmatprep.subr.bf16.mxu0 0
        %3808 = vmatpush1.bf16.msra.mxu0 %v3335
        %3809 = vmatprep.subr.bf16.mxu0 0
        %3810 = vmatpush1.bf16.msra.mxu0 %v3336
        %3811 = vmatprep.subr.bf16.mxu0 0
        %3812 = vmatpush1.bf16.msra.mxu0 %v3337
        %3813 = vmatprep.subr.bf16.mxu0 0
        %3814 = vmatpush1.bf16.msra.mxu0 %v3338
        %3815 = vmatprep.subr.bf16.mxu0 0
        %3816 = vmatpush1.bf16.msra.mxu0 0
        %3817 = vmatprep.subr.bf16.mxu0 0
        %3818 = vmatpush1.bf16.msra.mxu0 0
        %3819 = vmatprep.subr.bf16.mxu0 0
        %3820 = vmatpush1.bf16.msra.mxu0 0
        %3821 = vmatprep.subr.bf16.mxu0 0
        %3822 = vmatpush1.bf16.msra.mxu0 0
        %3823 = vmatprep.subr.bf16.mxu0 0
        %3824 = vmatpush1.bf16.msra.mxu0 0
        %3825 = vmatprep.subr.bf16.mxu0 0
        %3826 = vmatpush1.bf16.msra.mxu0 0
        %3827 = vmatprep.subr.bf16.mxu0 0
        %3828 = vmatpush1.bf16.msra.mxu0 0
        %3829 = vmatprep.subr.bf16.mxu0 0
        %3830 = vmatpush1.bf16.msra.mxu0 0
        %3831 = vmatprep.mubr.bf16.mxu0 0
        %3832 = vmatmul.mubr.bf16.gmra.mrb[0].mxu0 %v2819
        %v3833 = vpop.f32.mrb[0].mxu0
        %v3834 = vadd.f32 %v3737, %v3833
        %v3835 = vpop.f32.mrb[0].mxu0
        %v3836 = vpop.f32.mrb[0].mxu0
        %v3837 = vadd.f32 %v3740, %v3836
        %v3838 = vpop.f32.mrb[0].mxu0
        %3839 = vmatprep.mubr.bf16.mxu0 0
        %3840 = vmatmul.mubr.bf16.gmra.mrb[0].mxu0 %v2820
        %v3841 = vpop.f32.mrb[0].mxu0
        %v3842 = vadd.f32 %v3745, %v3841
        %v3843 = vpop.f32.mrb[0].mxu0
        %v3844 = vpop.f32.mrb[0].mxu0
        %v3845 = vadd.f32 %v3748, %v3844
        %v3846 = vpop.f32.mrb[0].mxu0
        %3847 = vmatprep.mubr.bf16.mxu0 0
        %3848 = vmatmul.mubr.bf16.gmra.mrb[0].mxu0 %v2821
        %v3849 = vpop.f32.mrb[0].mxu0
        %v3850 = vadd.f32 %v3753, %v3849
        %v3851 = vpop.f32.mrb[0].mxu0
        %v3852 = vpop.f32.mrb[0].mxu0
        %v3853 = vadd.f32 %v3756, %v3852
        %v3854 = vpop.f32.mrb[0].mxu0
        %3855 = vmatprep.mubr.bf16.mxu0 0
        %3856 = vmatmul.mubr.bf16.gmra.mrb[0].mxu0 %v2822
        %v3857 = vpop.f32.mrb[0].mxu0
        %v3858 = vadd.f32 %v3761, %v3857
        %v3859 = vpop.f32.mrb[0].mxu0
        %v3860 = vpop.f32.mrb[0].mxu0
        %v3861 = vadd.f32 %v3764, %v3860
        %v3862 = vpop.f32.mrb[0].mxu0
        %3863 = vmatprep.mubr.bf16.mxu0 0
        %3864 = vmatmul.mubr.bf16.gmra.mrb[0].mxu0 %v2823
        %v3865 = vpop.f32.mrb[0].mxu0
        %v3866 = vadd.f32 %v3769, %v3865
        %v3867 = vpop.f32.mrb[0].mxu0
        %v3868 = vpop.f32.mrb[0].mxu0
        %v3869 = vadd.f32 %v3772, %v3868
        %v3870 = vpop.f32.mrb[0].mxu0
        %3871 = vmatprep.mubr.bf16.mxu0 0
        %3872 = vmatmul.mubr.bf16.gmra.mrb[0].mxu0 %v2824
        %v3873 = vpop.f32.mrb[0].mxu0
        %v3874 = vadd.f32 %v3777, %v3873
        %v3875 = vpop.f32.mrb[0].mxu0
        %v3876 = vpop.f32.mrb[0].mxu0
        %v3877 = vadd.f32 %v3780, %v3876
        %v3878 = vpop.f32.mrb[0].mxu0
        %3879 = vmatprep.mubr.bf16.mxu0 0
        %3880 = vmatmul.mubr.bf16.gmra.mrb[0].mxu0 %v2825
        %v3881 = vpop.f32.mrb[0].mxu0
        %v3882 = vadd.f32 %v3785, %v3881
        %v3883 = vpop.f32.mrb[0].mxu0
        %v3884 = vpop.f32.mrb[0].mxu0
        %v3885 = vadd.f32 %v3788, %v3884
        %v3886 = vpop.f32.mrb[0].mxu0
        %3887 = vmatprep.mubr.bf16.mxu0 0
        %3888 = vmatmul.mubr.bf16.gmra.mrb[0].mxu0 %v2826
        %v3889 = vpop.f32.mrb[0].mxu0
        %v3890 = vadd.f32 %v3793, %v3889
        %v3891 = vpop.f32.mrb[0].mxu0
        %v3892 = vpop.f32.mrb[0].mxu0
        %v3893 = vadd.f32 %v3796, %v3892
        %v3894 = vpop.f32.mrb[0].mxu0
        %3895 = vdwg.mxu0
        %v3896 = vld [vmem:[%s5] sm:$0x1]
        %v3898 = vlaneseq
        %v3899 = vshrl.u32 %v3898, 7
        %v3900 = vsub.s32 0, %v3899
        %v3901 = vrot.slane %v3896, %v3900
        %v3903 = vmul.f32 %v3834, %v3901
        %v3904 = vmul.f32 %v3837, %v3901
        %v3905 = vmul.f32 %v3842, %v3901
        %v3906 = vmul.f32 %v3845, %v3901
        %v3907 = vmul.f32 %v3850, %v3901
        %v3908 = vmul.f32 %v3853, %v3901
        %v3909 = vmul.f32 %v3858, %v3901
        %v3910 = vmul.f32 %v3861, %v3901
        %v3911 = vmul.f32 %v3866, %v3901
        %v3912 = vmul.f32 %v3869, %v3901
        %v3913 = vmul.f32 %v3874, %v3901
        %v3914 = vmul.f32 %v3877, %v3901
        %v3915 = vmul.f32 %v3882, %v3901
        %v3916 = vmul.f32 %v3885, %v3901
        %v3917 = vmul.f32 %v3890, %v3901
        %v3918 = vmul.f32 %v3893, %v3901
        %v3919 = vld [vmem:[%s6] sm:$0x1]
        %v3921 = vlaneseq
        %v3922 = vshrl.u32 %v3921, 7
        %v3923 = vsub.s32 0, %v3922
        %v3924 = vrot.slane %v3919, %v3923
        %v3926 = vadd.f32 %v3903, %v3924
        %v3927 = vadd.f32 %v3904, %v3924
        %v3928 = vadd.f32 %v3905, %v3924
        %v3929 = vadd.f32 %v3906, %v3924
        %v3930 = vadd.f32 %v3907, %v3924
        %v3931 = vadd.f32 %v3908, %v3924
        %v3932 = vadd.f32 %v3909, %v3924
        %v3933 = vadd.f32 %v3910, %v3924
        %v3934 = vadd.f32 %v3911, %v3924
        %v3935 = vadd.f32 %v3912, %v3924
        %v3936 = vadd.f32 %v3913, %v3924
        %v3937 = vadd.f32 %v3914, %v3924
        %v3938 = vadd.f32 %v3915, %v3924
        %v3939 = vadd.f32 %v3916, %v3924
        %v3940 = vadd.f32 %v3917, %v3924
        %v3941 = vadd.f32 %v3918, %v3924
        %v3942 = vmax.f32 %v3926, 0.0
        %v3943 = vmax.f32 %v3927, 0.0
        %v3944 = vmax.f32 %v3928, 0.0
        %v3945 = vmax.f32 %v3929, 0.0
        %v3946 = vmax.f32 %v3930, 0.0
        %v3947 = vmax.f32 %v3931, 0.0
        %v3948 = vmax.f32 %v3932, 0.0
        %v3949 = vmax.f32 %v3933, 0.0
        %v3950 = vmax.f32 %v3934, 0.0
        %v3951 = vmax.f32 %v3935, 0.0
        %v3952 = vmax.f32 %v3936, 0.0
        %v3953 = vmax.f32 %v3937, 0.0
        %v3954 = vmax.f32 %v3938, 0.0
        %v3955 = vmax.f32 %v3939, 0.0
        %v3956 = vmax.f32 %v3940, 0.0
        %v3957 = vmax.f32 %v3941, 0.0
        %v3958 = vpack.c.bf16 %v3943, %v3942
        %v3959 = vpack.c.bf16 %v3945, %v3944
        %v3960 = vpack.c.bf16 %v3947, %v3946
        %v3961 = vpack.c.bf16 %v3949, %v3948
        %v3962 = vpack.c.bf16 %v3951, %v3950
        %v3963 = vpack.c.bf16 %v3953, %v3952
        %v3964 = vpack.c.bf16 %v3955, %v3954
        %v3965 = vpack.c.bf16 %v3957, %v3956
        %v3966 = vld [vmem:[%s7] sm:$0xf]
        %v3967 = vld [vmem:[%s7 + $0x4] sm:$0xf]
        %v3968 = vld [vmem:[%s7 + $0x8] sm:$0xf]
        %v3969 = vld [vmem:[%s7 + $0xc] sm:$0xf]
        %v3970 = vld [vmem:[%s7 + $0x10] sm:$0xf]
        %v3971 = vld [vmem:[%s7 + $0x14] sm:$0xf]
        %v3972 = vld [vmem:[%s7 + $0x18] sm:$0xf]
        %v3973 = vld [vmem:[%s7 + $0x1c] sm:$0xf]
        %v3974 = vld [vmem:[%s7 + $0x20] sm:$0xf]
        %v3975 = vld [vmem:[%s7 + $0x24] sm:$0xf]
        %v3976 = vld [vmem:[%s7 + $0x28] sm:$0xf]
        %v3977 = vld [vmem:[%s7 + $0x2c] sm:$0xf]
        %v3978 = vld [vmem:[%s7 + $0x30] sm:$0xf]
        %v3979 = vld [vmem:[%s7 + $0x34] sm:$0xf]
        %v3980 = vld [vmem:[%s7 + $0x38] sm:$0xf]
        %v3981 = vld [vmem:[%s7 + $0x3c] sm:$0xf]
        %v3998 = vunpack.c.l.b16 %v3966
        %v3999 = vunpack.c.l.b16 %v3967
        %v4000 = vunpack.c.l.b16 %v3968
        %v4001 = vunpack.c.l.b16 %v3969
        %v4002 = vunpack.c.l.b16 %v3970
        %v4003 = vunpack.c.l.b16 %v3971
        %v4004 = vunpack.c.l.b16 %v3972
        %v4005 = vunpack.c.l.b16 %v3973
        %v4006 = vunpack.c.l.b16 %v3974
        %v4007 = vunpack.c.l.b16 %v3975
        %v4008 = vunpack.c.l.b16 %v3976
        %v4009 = vunpack.c.l.b16 %v3977
        %v4010 = vunpack.c.l.b16 %v3978
        %v4011 = vunpack.c.l.b16 %v3979
        %v4012 = vunpack.c.l.b16 %v3980
        %v4013 = vunpack.c.l.b16 %v3981
        %v4014 = vpack.c.b16 %v3999, %v3998
        %v4015 = vpack.c.b16 %v4001, %v4000
        %v4016 = vpack.c.b16 %v4003, %v4002
        %v4017 = vpack.c.b16 %v4005, %v4004
        %v4018 = vpack.c.b16 %v4007, %v4006
        %v4019 = vpack.c.b16 %v4009, %v4008
        %v4020 = vpack.c.b16 %v4011, %v4010
        %v4021 = vpack.c.b16 %v4013, %v4012
        %4030 = vmatprep.subr.bf16.mxu0 0
        %4031 = vmatpush1.bf16.msra.mxu0 %v4014
        %4032 = vmatprep.subr.bf16.mxu0 0
        %4033 = vmatpush1.bf16.msra.mxu0 %v4015
        %4034 = vmatprep.subr.bf16.mxu0 0
        %4035 = vmatpush1.bf16.msra.mxu0 %v4016
        %4036 = vmatprep.subr.bf16.mxu0 0
        %4037 = vmatpush1.bf16.msra.mxu0 %v4017
        %4038 = vmatprep.subr.bf16.mxu0 0
        %4039 = vmatpush1.bf16.msra.mxu0 %v4018
        %4040 = vmatprep.subr.bf16.mxu0 0
        %4041 = vmatpush1.bf16.msra.mxu0 %v4019
        %4042 = vmatprep.subr.bf16.mxu0 0
        %4043 = vmatpush1.bf16.msra.mxu0 %v4020
        %4044 = vmatprep.subr.bf16.mxu0 0
        %4045 = vmatpush1.bf16.msra.mxu0 %v4021
        %4046 = vmatprep.subr.bf16.mxu0 0
        %4047 = vmatpush1.bf16.msra.mxu0 0
        %4048 = vmatprep.subr.bf16.mxu0 0
        %4049 = vmatpush1.bf16.msra.mxu0 0
        %4050 = vmatprep.subr.bf16.mxu0 0
        %4051 = vmatpush1.bf16.msra.mxu0 0
        %4052 = vmatprep.subr.bf16.mxu0 0
        %4053 = vmatpush1.bf16.msra.mxu0 0
        %4054 = vmatprep.subr.bf16.mxu0 0
        %4055 = vmatpush1.bf16.msra.mxu0 0
        %4056 = vmatprep.subr.bf16.mxu0 0
        %4057 = vmatpush1.bf16.msra.mxu0 0
        %4058 = vmatprep.subr.bf16.mxu0 0
        %4059 = vmatpush1.bf16.msra.mxu0 0
        %4060 = vmatprep.subr.bf16.mxu0 0
        %4061 = vmatpush1.bf16.msra.mxu0 0
        %4062 = vmatprep.mubr.bf16.mxu0 0
        %4063 = vmatmul.mubr.bf16.gmra.mrb[0].mxu0 %v3958
        %v4064 = vpop.f32.mrb[0].mxu0
        %v4065 = vadd.f32 0.0, %v4064
        %v4066 = vpop.f32.mrb[0].mxu0
        %v4067 = vpop.f32.mrb[0].mxu0
        %v4068 = vadd.f32 0.0, %v4067
        %v4069 = vpop.f32.mrb[0].mxu0
        %4070 = vmatprep.mubr.bf16.mxu0 0
        %4071 = vmatmul.mubr.bf16.gmra.mrb[0].mxu0 %v3959
        %v4072 = vpop.f32.mrb[0].mxu0
        %v4073 = vadd.f32 0.0, %v4072
        %v4074 = vpop.f32.mrb[0].mxu0
        %v4075 = vpop.f32.mrb[0].mxu0
        %v4076 = vadd.f32 0.0, %v4075
        %v4077 = vpop.f32.mrb[0].mxu0
        %4078 = vmatprep.mubr.bf16.mxu0 0
        %4079 = vmatmul.mubr.bf16.gmra.mrb[0].mxu0 %v3960
        %v4080 = vpop.f32.mrb[0].mxu0
        %v4081 = vadd.f32 0.0, %v4080
        %v4082 = vpop.f32.mrb[0].mxu0
        %v4083 = vpop.f32.mrb[0].mxu0
        %v4084 = vadd.f32 0.0, %v4083
        %v4085 = vpop.f32.mrb[0].mxu0
        %4086 = vmatprep.mubr.bf16.mxu0 0
        %4087 = vmatmul.mubr.bf16.gmra.mrb[0].mxu0 %v3961
        %v4088 = vpop.f32.mrb[0].mxu0
        %v4089 = vadd.f32 0.0, %v4088
        %v4090 = vpop.f32.mrb[0].mxu0
        %v4091 = vpop.f32.mrb[0].mxu0
        %v4092 = vadd.f32 0.0, %v4091
        %v4093 = vpop.f32.mrb[0].mxu0
        %4094 = vmatprep.mubr.bf16.mxu0 0
        %4095 = vmatmul.mubr.bf16.gmra.mrb[0].mxu0 %v3962
        %v4096 = vpop.f32.mrb[0].mxu0
        %v4097 = vadd.f32 0.0, %v4096
        %v4098 = vpop.f32.mrb[0].mxu0
        %v4099 = vpop.f32.mrb[0].mxu0
        %v4100 = vadd.f32 0.0, %v4099
        %v4101 = vpop.f32.mrb[0].mxu0
        %4102 = vmatprep.mubr.bf16.mxu0 0
        %4103 = vmatmul.mubr.bf16.gmra.mrb[0].mxu0 %v3963
        %v4104 = vpop.f32.mrb[0].mxu0
        %v4105 = vadd.f32 0.0, %v4104
        %v4106 = vpop.f32.mrb[0].mxu0
        %v4107 = vpop.f32.mrb[0].mxu0
        %v4108 = vadd.f32 0.0, %v4107
        %v4109 = vpop.f32.mrb[0].mxu0
        %4110 = vmatprep.mubr.bf16.mxu0 0
        %4111 = vmatmul.mubr.bf16.gmra.mrb[0].mxu0 %v3964
        %v4112 = vpop.f32.mrb[0].mxu0
        %v4113 = vadd.f32 0.0, %v4112
        %v4114 = vpop.f32.mrb[0].mxu0
        %v4115 = vpop.f32.mrb[0].mxu0
        %v4116 = vadd.f32 0.0, %v4115
        %v4117 = vpop.f32.mrb[0].mxu0
        %4118 = vmatprep.mubr.bf16.mxu0 0
        %4119 = vmatmul.mubr.bf16.gmra.mrb[0].mxu0 %v3965
        %v4120 = vpop.f32.mrb[0].mxu0
        %v4121 = vadd.f32 0.0, %v4120
        %v4122 = vpop.f32.mrb[0].mxu0
        %v4123 = vpop.f32.mrb[0].mxu0
        %v4124 = vadd.f32 0.0, %v4123
        %v4125 = vpop.f32.mrb[0].mxu0
        %4126 = vdwg.mxu0
        %v4127 = vld [vmem:[%s8] sm:$0x1]
        %v4129 = vlaneseq
        %v4130 = vshrl.u32 %v4129, 7
        %v4131 = vsub.s32 0, %v4130
        %v4132 = vrot.slane %v4127, %v4131
        %v4134 = vmul.f32 %v4065, %v4132
        %v4135 = vmul.f32 %v4068, %v4132
        %v4136 = vmul.f32 %v4073, %v4132
        %v4137 = vmul.f32 %v4076, %v4132
        %v4138 = vmul.f32 %v4081, %v4132
        %v4139 = vmul.f32 %v4084, %v4132
        %v4140 = vmul.f32 %v4089, %v4132
        %v4141 = vmul.f32 %v4092, %v4132
        %v4142 = vmul.f32 %v4097, %v4132
        %v4143 = vmul.f32 %v4100, %v4132
        %v4144 = vmul.f32 %v4105, %v4132
        %v4145 = vmul.f32 %v4108, %v4132
        %v4146 = vmul.f32 %v4113, %v4132
        %v4147 = vmul.f32 %v4116, %v4132
        %v4148 = vmul.f32 %v4121, %v4132
        %v4149 = vmul.f32 %v4124, %v4132
        %v4150 = vld [vmem:[%s9] sm:$0x1]
        %v4152 = vlaneseq
        %v4153 = vshrl.u32 %v4152, 7
        %v4154 = vsub.s32 0, %v4153
        %v4155 = vrot.slane %v4150, %v4154
        %v4157 = vadd.f32 %v4134, %v4155
        %v4158 = vadd.f32 %v4135, %v4155
        %v4159 = vadd.f32 %v4136, %v4155
        %v4160 = vadd.f32 %v4137, %v4155
        %v4161 = vadd.f32 %v4138, %v4155
        %v4162 = vadd.f32 %v4139, %v4155
        %v4163 = vadd.f32 %v4140, %v4155
        %v4164 = vadd.f32 %v4141, %v4155
        %v4165 = vadd.f32 %v4142, %v4155
        %v4166 = vadd.f32 %v4143, %v4155
        %v4167 = vadd.f32 %v4144, %v4155
        %v4168 = vadd.f32 %v4145, %v4155
        %v4169 = vadd.f32 %v4146, %v4155
        %v4170 = vadd.f32 %v4147, %v4155
        %v4171 = vadd.f32 %v4148, %v4155
        %v4172 = vadd.f32 %v4149, %v4155
        %v4173 = vunpack.c.l.bf16 %v397
        %v4174 = vunpack.c.l.bf16 %v398
        %v4175 = vunpack.c.l.bf16 %v399
        %v4176 = vunpack.c.l.bf16 %v400
        %v4177 = vunpack.c.l.bf16 %v401
        %v4178 = vunpack.c.l.bf16 %v402
        %v4179 = vunpack.c.l.bf16 %v403
        %v4180 = vunpack.c.l.bf16 %v404
        %v4181 = vunpack.c.l.bf16 %v405
        %v4182 = vunpack.c.l.bf16 %v406
        %v4183 = vunpack.c.l.bf16 %v407
        %v4184 = vunpack.c.l.bf16 %v408
        %v4185 = vunpack.c.l.bf16 %v409
        %v4186 = vunpack.c.l.bf16 %v410
        %v4187 = vunpack.c.l.bf16 %v411
        %v4188 = vunpack.c.l.bf16 %v412
        %v4189 = vadd.f32 %v4157, %v4173
        %v4190 = vadd.f32 %v4158, %v4174
        %v4191 = vadd.f32 %v4159, %v4175
        %v4192 = vadd.f32 %v4160, %v4176
        %v4193 = vadd.f32 %v4161, %v4177
        %v4194 = vadd.f32 %v4162, %v4178
        %v4195 = vadd.f32 %v4163, %v4179
        %v4196 = vadd.f32 %v4164, %v4180
        %v4197 = vadd.f32 %v4165, %v4181
        %v4198 = vadd.f32 %v4166, %v4182
        %v4199 = vadd.f32 %v4167, %v4183
        %v4200 = vadd.f32 %v4168, %v4184
        %v4201 = vadd.f32 %v4169, %v4185
        %v4202 = vadd.f32 %v4170, %v4186
        %v4203 = vadd.f32 %v4171, %v4187
        %v4204 = vadd.f32 %v4172, %v4188
        %v4205 = vmax.f32 %v4189, 0.0
        %v4206 = vmax.f32 %v4190, 0.0
        %v4207 = vmax.f32 %v4191, 0.0
        %v4208 = vmax.f32 %v4192, 0.0
        %v4209 = vmax.f32 %v4193, 0.0
        %v4210 = vmax.f32 %v4194, 0.0
        %v4211 = vmax.f32 %v4195, 0.0
        %v4212 = vmax.f32 %v4196, 0.0
        %v4213 = vmax.f32 %v4197, 0.0
        %v4214 = vmax.f32 %v4198, 0.0
        %v4215 = vmax.f32 %v4199, 0.0
        %v4216 = vmax.f32 %v4200, 0.0
        %v4217 = vmax.f32 %v4201, 0.0
        %v4218 = vmax.f32 %v4202, 0.0
        %v4219 = vmax.f32 %v4203, 0.0
        %v4220 = vmax.f32 %v4204, 0.0
        %v4221 = vpack.c.bf16 %v4205, %v4205
        %v4222 = vpack.c.bf16 %v4206, %v4206
        %v4223 = vpack.c.bf16 %v4207, %v4207
        %v4224 = vpack.c.bf16 %v4208, %v4208
        %v4225 = vpack.c.bf16 %v4209, %v4209
        %v4226 = vpack.c.bf16 %v4210, %v4210
        %v4227 = vpack.c.bf16 %v4211, %v4211
        %v4228 = vpack.c.bf16 %v4212, %v4212
        %v4229 = vpack.c.bf16 %v4213, %v4213
        %v4230 = vpack.c.bf16 %v4214, %v4214
        %v4231 = vpack.c.bf16 %v4215, %v4215
        %v4232 = vpack.c.bf16 %v4216, %v4216
        %v4233 = vpack.c.bf16 %v4217, %v4217
        %v4234 = vpack.c.bf16 %v4218, %v4218
        %v4235 = vpack.c.bf16 %v4219, %v4219
        %v4236 = vpack.c.bf16 %v4220, %v4220
        %vm4237 = vcmask 125952
        %4238 = vst.msk [vmem:[%s393] sm:$0xf] %vm4237, %v4221
        %4239 = vst.msk [vmem:[%s393 + $0x4] sm:$0xf] %vm4237, %v4222
        %4240 = vst.msk [vmem:[%s393 + $0x8] sm:$0xf] %vm4237, %v4223
        %4241 = vst.msk [vmem:[%s393 + $0xc] sm:$0xf] %vm4237, %v4224
        %4242 = vst.msk [vmem:[%s393 + $0x10] sm:$0xf] %vm4237, %v4225
        %4243 = vst.msk [vmem:[%s393 + $0x14] sm:$0xf] %vm4237, %v4226
        %4244 = vst.msk [vmem:[%s393 + $0x18] sm:$0xf] %vm4237, %v4227
        %4245 = vst.msk [vmem:[%s393 + $0x1c] sm:$0xf] %vm4237, %v4228
        %4246 = vst.msk [vmem:[%s393 + $0x20] sm:$0xf] %vm4237, %v4229
        %4247 = vst.msk [vmem:[%s393 + $0x24] sm:$0xf] %vm4237, %v4230
        %4248 = vst.msk [vmem:[%s393 + $0x28] sm:$0xf] %vm4237, %v4231
        %4249 = vst.msk [vmem:[%s393 + $0x2c] sm:$0xf] %vm4237, %v4232
        %4250 = vst.msk [vmem:[%s393 + $0x30] sm:$0xf] %vm4237, %v4233
        %4251 = vst.msk [vmem:[%s393 + $0x34] sm:$0xf] %vm4237, %v4234
        %4252 = vst.msk [vmem:[%s393 + $0x38] sm:$0xf] %vm4237, %v4235
        %4253 = vst.msk [vmem:[%s393 + $0x3c] sm:$0xf] %vm4237, %v4236
        %s4254 = sand.u32 %s251, 1
        %s4255 = scalar_lea.sflag [#allocation5], %s4254
        %s4256 = sand.u32 %s251, 1
        %s4257 = smul.addr %s4256, 64
        %s4258 = scalar_lea.vmem [#allocation8], %s4257
        // Predicated region
        $region69: #{tpu_custom_call.1} parent=59 // pred_check
          %p4259 = pneg %p261
        $region70: #{tpu_custom_call.1} parent=59 // pred_check_branch
          %4261 = sbr.rel (%p4259) target = $region72
        $region71: #{tpu_custom_call.1} parent=59 // pred_region
          %s4262 = smul.u32 2, %s28
          %s4264 = ssub.s32 1024, 1024
          %4265 = vsyncadd %s4255, %s4264
          %s4266 = smul.addr %s4262, 8
          %s4267 = smul.addr %s4266, 64
          %s4268 = scalar_lea.hbm %s10, %s4267
          %s4269 = sshll.u32 %s4258, 4
          %s4270 = int_to_ptr.vmem [resolvable:$true] %s4269
          %4275 = dma.vmem_to_hbm [thread:$0]  %s4270, 1024, %s4268, %s4255, 64, 64, 4
        $region72: #{tpu_custom_call.1} parent=59 // pred_fallthru
          _
      $region60: #{tpu_custom_call.1} parent=5 // pred_fallthru
        _
      %p4276 = scmp.le.s32.totalorder 2, %s23
      // Predicated region
      $region73: #{tpu_custom_call.1} parent=5 // pred_check
        %p4277 = pneg %p4276
      $region74: #{tpu_custom_call.1} parent=5 // pred_check_branch
        %4279 = sbr.rel (%p4277) target = $region76
      $region75: #{tpu_custom_call.1} parent=5 // pred_region
        %s4280 = ssub.s32 %s23, 2
        // Predicated region
        $region77: #{tpu_custom_call.1} parent=75 // pred_check
          %p4281 = pneg %p267
        $region78: #{tpu_custom_call.1} parent=75 // pred_check_branch
          %4283 = sbr.rel (%p4281) target = $region80
        $region79: #{tpu_custom_call.1} parent=75 // pred_region
          %s4284 = sand.u32 %s252, 1
          %s4285 = scalar_lea.sflag [#allocation5], %s4284
          %s4286 = sand.u32 %s252, 1
          %s4287 = smul.addr %s4286, 64
          %s4288 = scalar_lea.vmem [#allocation8], %s4287
          %4289 = dma.done %s4285, 1024
        $region80: #{tpu_custom_call.1} parent=75 // pred_fallthru
          _
      $region76: #{tpu_custom_call.1} parent=5 // pred_fallthru
        _
    $region6: #{tpu_custom_call.1} parent=1 // loop_footer
      %s27 = sadd.s32 1, %s23
    $region7: #{tpu_custom_call.1} parent=1 // loop_footer_branch
      %22 = sbr.rel target = $region3
    $region8: #{tpu_custom_call.1} parent=1 // loop_exit
      _
    %4290 = vsyncpa [#allocation4], 1
    %s4291 = scalar_lea.sflag [#allocation4], 1
    %4292 = vsyncpa %s4291, 1
    %4293 = vsyncpa [#allocation7], 1
    %4294 = vsyncpa [#allocation5], 1
    %s4295 = scalar_lea.sflag [#allocation5], 1
    %4296 = vsyncpa %s4295, 1

</llo_original>
